<compile_context>
chip_gen: v7x
topology: tpu7x:2x2x1
jax: 0.10.0
libtpu: 0.0.40
codegen_flags: <defaults>
</compile_context>

<pallas_src>
import jax
import jax.numpy as jnp
from jax.experimental import pallas as pl
from jax.experimental.pallas import tpu as pltpu


def _linear_dot_kernel(x_ref, w_ref, b_ref, o_ref):
    # x_ref: (TR, K) VMEM     w_ref: (K, N) VMEM (grid-resident)
    # b_ref: (1,)   SMEM      o_ref: (TR, N) VMEM
    acc = jnp.dot(x_ref[...], w_ref[...],
                  precision=jax.lax.Precision.HIGHEST,
                  preferred_element_type=jnp.float32)
    o_ref[...] = (acc + b_ref[0]).astype(o_ref.dtype)


def _round_up(a, b):
    return ((a + b - 1) // b) * b


def linear_regression_forward(x, weight, bias, *,
                              min_kernel_rows=2048,
                              vmem_tile_budget_bytes=12 * 1024 * 1024):
    """out = x @ weight.T + bias.   x: (B, D); weight: (1, D); bias: (1,)."""
    B, D = x.shape
    out_dtype = x.dtype

    # --- Small-batch fast path (kernel fixed cost would dominate) ---------
    if B < min_kernel_rows:
        out = jnp.dot(x, weight.T, precision=jax.lax.Precision.HIGHEST) + bias
        return out.astype(out_dtype)

    # --- Packing: (B, D) -> (B/pack, pack*D) for full lane occupancy ------
    if D < 128 and 128 % D == 0:
        pack = 128 // D
    else:
        pack = 1                     # block covers the full D -> still legal
    k_dim = pack * D                 # contraction dim seen by the kernel
    n_dim = pack                     # kernel output columns

    # --- Tile size from a *padded*, double-buffered VMEM budget -----------
    # VMEM lane-pads the last dim to 128; both the x tile and the output tile
    # are double-buffered by the BlockSpec pipeline.
    x_row_bytes = _round_up(k_dim, 128) * x.dtype.itemsize
    o_row_bytes = _round_up(n_dim, 128) * jnp.dtype(out_dtype).itemsize
    bytes_per_row = 2 * (x_row_bytes + o_row_bytes)
    rows_tile = max(8, (vmem_tile_budget_bytes // bytes_per_row // 8) * 8)

    rows_total = _round_up(B, pack) // pack            # reshaped row count
    rows_tile = min(rows_tile, _round_up(rows_total, 8))
    # Guarantee >= 2 grid steps: lets the "parallel" axis use both v7x
    # TensorCores and gives the pipeline DMA/compute overlap.
    rows_tile = min(rows_tile, _round_up(pl.cdiv(rows_total, 2), 8))
    rows_tile = max(8, rows_tile)

    num_tiles = pl.cdiv(rows_total, rows_tile)
    rows_padded = num_tiles * rows_tile
    b_pad = rows_padded * pack
    if b_pad != B:
        x = jnp.pad(x, ((0, b_pad - B), (0, 0)))
    x_rs = x.reshape(rows_padded, k_dim)               # free row-major reshape

    # Block-diagonal weight: column j holds the weight row in lanes
    # [j*D, (j+1)*D), so x_rs @ w_kernel yields `pack` independent row-dots
    # per reshaped row, all on the MXU.
    w_col = weight.reshape(D, 1).astype(x.dtype)
    if pack > 1:
        w_kernel = jnp.kron(jnp.eye(pack, dtype=x.dtype), w_col)  # (k_dim, pack)
    else:
        w_kernel = w_col                                          # (D, 1)
    bias_s = bias.reshape(1).astype(jnp.float32)

    out_rs = pl.pallas_call(
        _linear_dot_kernel,
        out_shape=jax.ShapeDtypeStruct((rows_padded, n_dim), out_dtype),
        grid=(num_tiles,),
        in_specs=[
            # x: pipelined, double-buffered batch tiles (lane-dense rows).
            pl.BlockSpec((rows_tile, k_dim), lambda i: (i, 0)),
            # weight: same block every step -> stays resident in VMEM.
            pl.BlockSpec((k_dim, n_dim), lambda i: (0, 0)),
            # bias: scalar in SMEM (no padded VMEM tile, no extra DMA).
            pl.BlockSpec(memory_space=pltpu.MemorySpace.SMEM),
        ],
        out_specs=pl.BlockSpec((rows_tile, n_dim), lambda i: (i, 0)),
        compiler_params=pltpu.CompilerParams(
            dimension_semantics=("parallel",)),
    )(x_rs, w_kernel, bias_s)

    # (rows_padded, pack) -> (b_pad, 1) is again a free row-major reshape.
    return out_rs.reshape(b_pad, 1)[:B]


if __name__ == "__main__":
    key = jax.random.PRNGKey(0)
    kx, kw, kb, kx2 = jax.random.split(key, 4)

    D = 32  # input_dim consistent with the module's nn.Linear(input_dim, 1)
    # Deterministic parameter init mirroring nn.Linear's default:
    # U(-1/sqrt(in_features), +1/sqrt(in_features))
    bound = 1.0 / (D ** 0.5)
    weight = jax.random.uniform(kw, (1, D), minval=-bound, maxval=bound,
                                dtype=jnp.float32)
    bias = jax.random.uniform(kb, (1,), minval=-bound, maxval=bound,
                              dtype=jnp.float32)

    # 1) Module-sized input (batch=8): served by the small-batch fast path.
    x_small = jax.random.normal(kx, (8, D), dtype=jnp.float32)
    out_small = jax.block_until_ready(
        linear_regression_forward(x_small, weight, bias))
    ref_small = jnp.sum(x_small * weight, axis=-1, keepdims=True) + bias
    assert out_small.shape == (8, 1)
    assert jnp.allclose(out_small, ref_small, atol=1e-5, rtol=1e-5)

    # 2) Larger batch that exercises the Pallas kernel (2 grid tiles).
    B = 4096
    x_big = jax.random.normal(kx2, (B, D), dtype=jnp.float32)
    out_big = jax.block_until_ready(
        linear_regression_forward(x_big, weight, bias))
    ref_big = jnp.sum(x_big * weight, axis=-1, keepdims=True) + bias
    assert out_big.shape == (B, 1)
    assert jnp.allclose(out_big, ref_big, atol=1e-4, rtol=1e-4)

    print("KERNEL_OK")
</pallas_src>

<mosaic_0001>
module attributes {stable_mosaic.version = 11 : i64} {
  func.func @_linear_dot_kernel(%arg0: i32, %arg1: memref<512x128xf32, #tpu.memory_space<vmem>>, %arg2: memref<128x4xf32, #tpu.memory_space<vmem>>, %arg3: memref<1xf32, #tpu.memory_space<smem>>, %arg4: memref<512x4xf32, #tpu.memory_space<vmem>>) attributes {dimension_semantics = [#tpu.dimension_semantics<parallel>], iteration_bounds = array<i64: 2>, scalar_prefetch = 0 : i64, scratch_operands = 0 : i64, tpu.core_type = #tpu.core_type<tc>, window_params = [{transform_indices = @transform_0, window_bounds = array<i64: 512, 128>}, {pipeline_mode = #tpu.pipeline_mode<synchronous>, transform_indices = @transform_1, window_bounds = array<i64: 128, 4>}, {transform_indices = @transform_2, window_bounds = array<i64: 1>}, {transform_indices = @transform_3, window_bounds = array<i64: 512, 4>}]} {
    %c0 = arith.constant 0 : index
    %c0_0 = arith.constant 0 : index
    %0 = vector.load %arg1[%c0, %c0_0] : memref<512x128xf32, #tpu.memory_space<vmem>>, vector<512x128xf32>
    %c0_1 = arith.constant 0 : index
    %c0_2 = arith.constant 0 : index
    %1 = vector.load %arg2[%c0_1, %c0_2] : memref<128x4xf32, #tpu.memory_space<vmem>>, vector<128x4xf32>
    %cst = arith.constant dense<0.000000e+00> : vector<512x4xf32>
    %2 = tpu.matmul %0, %1, %cst {dimension_numbers = #tpu.dot_dimension_numbers<[1], [0], [0], [1], [0, 0, 1, 1], [], []>, precision = #tpu.contract_precision<fp32>} : vector<512x128xf32>, vector<128x4xf32>, vector<512x4xf32> -> vector<512x4xf32>
    %c0_3 = arith.constant 0 : index
    %3 = memref.load %arg3[%c0_3] : memref<1xf32, #tpu.memory_space<smem>>
    %4 = vector.broadcast %3 : f32 to vector<512x4xf32>
    %5 = arith.addf %2, %4 : vector<512x4xf32>
    %c0_4 = arith.constant 0 : index
    %c0_5 = arith.constant 0 : index
    %6 = vector.load %arg4[%c0_4, %c0_5] : memref<512x4xf32, #tpu.memory_space<vmem>>, vector<512x4xf32>
    tpu.vector_store %arg4[%c0_4, %c0_5], %5 {strides = array<i32>} : memref<512x4xf32, #tpu.memory_space<vmem>>, vector<512x4xf32>,
    return
  }
  func.func @transform_0(%arg0: i32) -> (i32, i32) {
    %c0_i32 = arith.constant 0 : i32
    %c0_i32_0 = arith.constant 0 : i32
    return %arg0, %c0_i32 : i32, i32
  }
  func.func @transform_1(%arg0: i32) -> (i32, i32) {
    %c0_i32 = arith.constant 0 : i32
    %c0_i32_0 = arith.constant 0 : i32
    %c0_i32_1 = arith.constant 0 : i32
    return %c0_i32, %c0_i32_0 : i32, i32
  }
  func.func @transform_2(%arg0: i32) -> i32 {
    %c0_i32 = arith.constant 0 : i32
    %c0_i32_0 = arith.constant 0 : i32
    return %c0_i32 : i32
  }
  func.func @transform_3(%arg0: i32) -> (i32, i32) {
    %c0_i32 = arith.constant 0 : i32
    %c0_i32_0 = arith.constant 0 : i32
    return %arg0, %c0_i32 : i32, i32
  }
}

</mosaic_0001>

<llo_original>
// kernel: tpu_custom_call.1
$region0: #{tpu_custom_call.1}
  #allocation0 [shape = 'u32[]', space=smem, size = 0x4, offset = 0x4, fixed_abs, tag = 'smem constant byte address 0x4 - core index']
  #allocation1 [shape = 'u32[144,128]{1,0:T(1,128)}', space=vmem, size = 0x12000, scoped, tag = 'internal scratch']
  #allocation2 [shape = 'f32[1]{0:T(128)S(6)}', space=smem, size = 0x200, scoped, tag = 'scoped memory for tpu_custom_call.1']
  %s0 = inlined_call_operand.hbm [shape: f32[1024,128], index: 0, kind: input, shape index: {}]
  %s1 = inlined_call_operand.vmem [shape: f32[128,4], index: 1, kind: input, shape index: {}]
  %s2 = inlined_call_operand.<no memory space> [shape: f32[1], index: 2, kind: input, shape index: {}]
  %s3 = inlined_call_operand.vmem [shape: f32[1024,4], index: 3, kind: output, shape index: {}]
  %s4 = sld [smem:[#allocation0]]
  $region49: #{tpu_custom_call.1} parent=0
    _
  %s6 = ssub.s32 1, %s4
  %s7 = scalar_select 0, %s6, %s4
  %8 = sst [smem:[#allocation2]] %s2
  $region1: #{tpu_custom_call.1} parent=0
    #allocation3 [shape = 'u8[524288]{0}', space=vmem, size = 0x80000, scoped, tag = 'input window, operand 0']
    #allocation4 [shape = 's32[2]{0}', space=sflag, size = 0x8, scoped, tag = 'scoped memory for tpu_custom_call.1']
    %9 = vsyncpa [#allocation4], 0
    %s10 = scalar_lea.sflag [#allocation4], 1
    %11 = vsyncpa %s10, 0
    loop: start=0, step=1, limit=4
    $region2: #{tpu_custom_call.1} parent=1 // loop_pre_header
      _
    $region3: #{tpu_custom_call.1} parent=1 // loop_header
      %s13 = sphi 0, %s17
      %p14 = scmp.ge.s32.totalorder %s13, 4
      %s23 = sphi 0, %s25
      %s26 = sphi 0, %s23
      %s27 = sphi 0, %s26
      %s43 = sphi 0, %s27
      %s47 = sphi 0, %s47
      %s49 = sphi 0, %s47
      %s50 = sphi 0, %s49
      %s64 = sphi 0, %s50
      %s68 = sphi 0, %s68
      %s70 = sphi 0, %s68
      %s71 = sphi 0, %s70
      %s85 = sphi 0, %s71
      %s91 = sphi 0, %s93
      %s94 = sphi 0, %s91
      %s95 = sphi 0, %s94
      %s111 = sphi 0, %s95
    $region4: #{tpu_custom_call.1} parent=1 // loop_header_branch
      %16 = sbr.rel (%p14) target = $region8
    $region5: #{tpu_custom_call.1} parent=1 // loop_body
      %s18 = ssub.s32 %s13, 1
      %s19 = ssub.s32 %s13, 2
      %s20 = sadd.s32 %s13, 1
      %s21 = ssub.s32 %s13, %s20
      %p22 = scmp.eq.s32.totalorder %s21, 0
      %s24 = sadd.s32 %s23, 1
      %s25 = scalar_select %p22, %s23, %s24
      %p28 = pneg %p22
      %p29 = scmp.eq.s32.totalorder %s13, 1
      %p30 = por %p28, %p29
      %p31 = scmp.ne.s32.totalorder %s23, %s26
      %p32 = scmp.eq.s32.totalorder %s13, 0
      %p33 = por %p31, %p32
      %p34 = scmp.ne.s32.totalorder %s23, %s26
      %p35 = scmp.eq.s32.totalorder %s18, 1
      %p36 = por %p34, %p35
      %p37 = scmp.ne.s32.totalorder %s26, %s27
      %p38 = scmp.eq.s32.totalorder %s18, 0
      %p39 = por %p37, %p38
      %p40 = scmp.ne.s32.totalorder %s26, %s27
      %p41 = scmp.eq.s32.totalorder %s19, 1
      %p42 = por %p40, %p41
      %p44 = scmp.ne.s32.totalorder %s27, %s43
      %p45 = scmp.eq.s32.totalorder %s19, 0
      %p46 = por %p44, %p45
      %s48 = sadd.s32 %s47, 1
      %p51 = scmp.eq.s32.totalorder %s13, 1
      %p52 = scmp.ne.s32.totalorder %s47, %s49
      %p53 = scmp.eq.s32.totalorder %s13, 0
      %p54 = por %p52, %p53
      %p55 = scmp.ne.s32.totalorder %s47, %s49
      %p56 = scmp.eq.s32.totalorder %s18, 1
      %p57 = por %p55, %p56
      %p58 = scmp.ne.s32.totalorder %s49, %s50
      %p59 = scmp.eq.s32.totalorder %s18, 0
      %p60 = por %p58, %p59
      %p61 = scmp.ne.s32.totalorder %s49, %s50
      %p62 = scmp.eq.s32.totalorder %s19, 1
      %p63 = por %p61, %p62
      %p65 = scmp.ne.s32.totalorder %s50, %s64
      %p66 = scmp.eq.s32.totalorder %s19, 0
      %p67 = por %p65, %p66
      %s69 = sadd.s32 %s68, 1
      %p72 = scmp.eq.s32.totalorder %s13, 1
      %p73 = scmp.ne.s32.totalorder %s68, %s70
      %p74 = scmp.eq.s32.totalorder %s13, 0
      %p75 = por %p73, %p74
      %p76 = scmp.ne.s32.totalorder %s68, %s70
      %p77 = scmp.eq.s32.totalorder %s18, 1
      %p78 = por %p76, %p77
      %p79 = scmp.ne.s32.totalorder %s70, %s71
      %p80 = scmp.eq.s32.totalorder %s18, 0
      %p81 = por %p79, %p80
      %p82 = scmp.ne.s32.totalorder %s70, %s71
      %p83 = scmp.eq.s32.totalorder %s19, 1
      %p84 = por %p82, %p83
      %p86 = scmp.ne.s32.totalorder %s71, %s85
      %p87 = scmp.eq.s32.totalorder %s19, 0
      %p88 = por %p86, %p87
      %s89 = ssub.s32 %s13, %s20
      %p90 = scmp.eq.s32.totalorder %s89, 0
      %s92 = sadd.s32 %s91, 1
      %s93 = scalar_select %p90, %s91, %s92
      %p96 = pneg %p90
      %p97 = scmp.eq.s32.totalorder %s13, 1
      %p98 = por %p96, %p97
      %p99 = scmp.ne.s32.totalorder %s91, %s94
      %p100 = scmp.eq.s32.totalorder %s13, 0
      %p101 = por %p99, %p100
      %p102 = scmp.ne.s32.totalorder %s91, %s94
      %p103 = scmp.eq.s32.totalorder %s18, 1
      %p104 = por %p102, %p103
      %p105 = scmp.ne.s32.totalorder %s94, %s95
      %p106 = scmp.eq.s32.totalorder %s18, 0
      %p107 = por %p105, %p106
      %p108 = scmp.ne.s32.totalorder %s94, %s95
      %p109 = scmp.eq.s32.totalorder %s19, 1
      %p110 = por %p108, %p109
      %p112 = scmp.ne.s32.totalorder %s95, %s111
      %p113 = scmp.eq.s32.totalorder %s19, 0
      %p114 = por %p112, %p113
      %p115 = scmp.le.s32.totalorder 1, %s13
      %p116 = scmp.lt.s32.totalorder %s13, 3
      %p117 = pnand %p115, %p116
      %p118 = pneg %p117
      // Predicated region
      $region9: #{tpu_custom_call.1} parent=5 // pred_check
        _
      $region10: #{tpu_custom_call.1} parent=5 // pred_check_branch
        %120 = sbr.rel (%p117) target = $region12
      $region11: #{tpu_custom_call.1} parent=5 // pred_region
        %s121 = ssub.s32 %s13, 1
        // Predicated region
        $region13: #{tpu_custom_call.1} parent=11 // pred_check
          %p122 = pneg %p60
        $region14: #{tpu_custom_call.1} parent=11 // pred_check_branch
          %124 = sbr.rel (%p122) target = $region16
        $region15: #{tpu_custom_call.1} parent=11 // pred_region
          _
        $region16: #{tpu_custom_call.1} parent=11 // pred_fallthru
          _
        // Predicated region
        $region17: #{tpu_custom_call.1} parent=11 // pred_check
          %p125 = pneg %p81
        $region18: #{tpu_custom_call.1} parent=11 // pred_check_branch
          %127 = sbr.rel (%p125) target = $region20
        $region19: #{tpu_custom_call.1} parent=11 // pred_region
          _
        $region20: #{tpu_custom_call.1} parent=11 // pred_fallthru
          _
      $region12: #{tpu_custom_call.1} parent=5 // pred_fallthru
        _
      %p128 = scmp.lt.s32.totalorder %s13, 2
      // Predicated region
      $region21: #{tpu_custom_call.1} parent=5 // pred_check
        %p129 = pneg %p128
      $region22: #{tpu_custom_call.1} parent=5 // pred_check_branch
        %131 = sbr.rel (%p129) target = $region24
      $region23: #{tpu_custom_call.1} parent=5 // pred_region
        // Predicated region
        $region25: #{tpu_custom_call.1} parent=23 // pred_check
          %p132 = pneg %p33
        $region26: #{tpu_custom_call.1} parent=23 // pred_check_branch
          %134 = sbr.rel (%p132) target = $region28
        $region27: #{tpu_custom_call.1} parent=23 // pred_region
          %s135 = sand.u32 %s23, 1
          %s136 = scalar_lea.sflag [#allocation4], %s135
          %s137 = sand.u32 %s23, 1
          %s138 = smul.addr %s137, 512
          %s139 = scalar_lea.vmem [#allocation3], %s138
          %s140 = smul.u32 64, %s13
          %s142 = ssub.s32 8192, 8192
          %143 = vsyncadd %s136, %s142
          %s144 = smul.addr %s140, 128
          %s145 = scalar_lea.hbm %s0, %s144
          %s146 = sshll.u32 %s139, 4
          %s147 = int_to_ptr.vmem [resolvable:$true] %s146
          %152 = dma.hbm_to_vmem [thread:$0]  %s145, 8192, %s147, %s136, 128, 128, 8
        $region28: #{tpu_custom_call.1} parent=23 // pred_fallthru
          _
      $region24: #{tpu_custom_call.1} parent=5 // pred_fallthru
        _
      %p153 = scmp.le.s32.totalorder 1, %s13
      %p154 = scmp.lt.s32.totalorder %s13, 3
      %p155 = pnand %p153, %p154
      %p156 = pneg %p155
      // Predicated region
      $region29: #{tpu_custom_call.1} parent=5 // pred_check
        _
      $region30: #{tpu_custom_call.1} parent=5 // pred_check_branch
        %158 = sbr.rel (%p155) target = $region32
      $region31: #{tpu_custom_call.1} parent=5 // pred_region
        %s159 = ssub.s32 %s13, 1
        %s160 = sand.u32 %s26, 1
        %s161 = scalar_lea.sflag [#allocation4], %s160
        %s162 = sand.u32 %s26, 1
        %s163 = smul.addr %s162, 512
        %s164 = scalar_lea.vmem [#allocation3], %s163
        // Predicated region
        $region33: #{tpu_custom_call.1} parent=31 // pred_check
          %p165 = pneg %p39
        $region34: #{tpu_custom_call.1} parent=31 // pred_check_branch
          %167 = sbr.rel (%p165) target = $region36
        $region35: #{tpu_custom_call.1} parent=31 // pred_region
          %168 = dma.done %s161, 8192
        $region36: #{tpu_custom_call.1} parent=31 // pred_fallthru
          _
        %s169 = sand.u32 %s26, 1
        %s170 = scalar_lea.sflag [#allocation4], %s169
        %s171 = sand.u32 %s26, 1
        %s172 = smul.addr %s171, 512
        %s173 = scalar_lea.vmem [#allocation3], %s172
        %p174 = pneg %p39
        %p175 = pneg %p36
        %p176 = pneg %p60
        %p177 = pneg %p57
        %p178 = pneg %p81
        %p179 = pneg %p78
        %p180 = pneg %p107
        %p181 = pneg %p104
        %s182 = smul.u32 64, %s18
        %p183 = scmp.lt.s32.totalorder %s182, 127
        %s184 = scalar_select %p183, %s182, 127
        %s185 = smul.addr %s184, 8
        %s186 = scalar_lea.vmem %s3, %s185
        %s187 = smul.u32 64, %s18
        %s188 = smul.u32 64, %s18
        %p189 = scmp.lt.s32.totalorder %s188, 127
        %s190 = scalar_select %p189, %s188, 127
        %s191 = smul.addr %s190, 8
        %s192 = scalar_lea.vmem %s3, %s191
        %s193 = smul.u32 64, %s18
        %v194 = vld [vmem:[%s164] sm:$0xff]
        %v195 = vld [vmem:[%s164 + $0x8] sm:$0xff]
        %v196 = vld [vmem:[%s164 + $0x10] sm:$0xff]
        %v197 = vld [vmem:[%s164 + $0x18] sm:$0xff]
        %v198 = vld [vmem:[%s164 + $0x20] sm:$0xff]
        %v199 = vld [vmem:[%s164 + $0x28] sm:$0xff]
        %v200 = vld [vmem:[%s164 + $0x30] sm:$0xff]
        %v201 = vld [vmem:[%s164 + $0x38] sm:$0xff]
        %v202 = vld [vmem:[%s164 + $0x40] sm:$0xff]
        %v203 = vld [vmem:[%s164 + $0x48] sm:$0xff]
        %v204 = vld [vmem:[%s164 + $0x50] sm:$0xff]
        %v205 = vld [vmem:[%s164 + $0x58] sm:$0xff]
        %v206 = vld [vmem:[%s164 + $0x60] sm:$0xff]
        %v207 = vld [vmem:[%s164 + $0x68] sm:$0xff]
        %v208 = vld [vmem:[%s164 + $0x70] sm:$0xff]
        %v209 = vld [vmem:[%s164 + $0x78] sm:$0xff]
        %v210 = vld [vmem:[%s164 + $0x80] sm:$0xff]
        %v211 = vld [vmem:[%s164 + $0x88] sm:$0xff]
        %v212 = vld [vmem:[%s164 + $0x90] sm:$0xff]
        %v213 = vld [vmem:[%s164 + $0x98] sm:$0xff]
        %v214 = vld [vmem:[%s164 + $0xa0] sm:$0xff]
        %v215 = vld [vmem:[%s164 + $0xa8] sm:$0xff]
        %v216 = vld [vmem:[%s164 + $0xb0] sm:$0xff]
        %v217 = vld [vmem:[%s164 + $0xb8] sm:$0xff]
        %v218 = vld [vmem:[%s164 + $0xc0] sm:$0xff]
        %v219 = vld [vmem:[%s164 + $0xc8] sm:$0xff]
        %v220 = vld [vmem:[%s164 + $0xd0] sm:$0xff]
        %v221 = vld [vmem:[%s164 + $0xd8] sm:$0xff]
        %v222 = vld [vmem:[%s164 + $0xe0] sm:$0xff]
        %v223 = vld [vmem:[%s164 + $0xe8] sm:$0xff]
        %v224 = vld [vmem:[%s164 + $0xf0] sm:$0xff]
        %v225 = vld [vmem:[%s164 + $0xf8] sm:$0xff]
        %v226 = vld [vmem:[%s164 + $0x100] sm:$0xff]
        %v227 = vld [vmem:[%s164 + $0x108] sm:$0xff]
        %v228 = vld [vmem:[%s164 + $0x110] sm:$0xff]
        %v229 = vld [vmem:[%s164 + $0x118] sm:$0xff]
        %v230 = vld [vmem:[%s164 + $0x120] sm:$0xff]
        %v231 = vld [vmem:[%s164 + $0x128] sm:$0xff]
        %v232 = vld [vmem:[%s164 + $0x130] sm:$0xff]
        %v233 = vld [vmem:[%s164 + $0x138] sm:$0xff]
        %v234 = vld [vmem:[%s164 + $0x140] sm:$0xff]
        %v235 = vld [vmem:[%s164 + $0x148] sm:$0xff]
        %v236 = vld [vmem:[%s164 + $0x150] sm:$0xff]
        %v237 = vld [vmem:[%s164 + $0x158] sm:$0xff]
        %v238 = vld [vmem:[%s164 + $0x160] sm:$0xff]
        %v239 = vld [vmem:[%s164 + $0x168] sm:$0xff]
        %v240 = vld [vmem:[%s164 + $0x170] sm:$0xff]
        %v241 = vld [vmem:[%s164 + $0x178] sm:$0xff]
        %v242 = vld [vmem:[%s164 + $0x180] sm:$0xff]
        %v243 = vld [vmem:[%s164 + $0x188] sm:$0xff]
        %v244 = vld [vmem:[%s164 + $0x190] sm:$0xff]
        %v245 = vld [vmem:[%s164 + $0x198] sm:$0xff]
        %v246 = vld [vmem:[%s164 + $0x1a0] sm:$0xff]
        %v247 = vld [vmem:[%s164 + $0x1a8] sm:$0xff]
        %v248 = vld [vmem:[%s164 + $0x1b0] sm:$0xff]
        %v249 = vld [vmem:[%s164 + $0x1b8] sm:$0xff]
        %v250 = vld [vmem:[%s164 + $0x1c0] sm:$0xff]
        %v251 = vld [vmem:[%s164 + $0x1c8] sm:$0xff]
        %v252 = vld [vmem:[%s164 + $0x1d0] sm:$0xff]
        %v253 = vld [vmem:[%s164 + $0x1d8] sm:$0xff]
        %v254 = vld [vmem:[%s164 + $0x1e0] sm:$0xff]
        %v255 = vld [vmem:[%s164 + $0x1e8] sm:$0xff]
        %v256 = vld [vmem:[%s164 + $0x1f0] sm:$0xff]
        %v257 = vld [vmem:[%s164 + $0x1f8] sm:$0xff]
        %v258 = vld [vmem:[%s1] sm:$0xff]
        %v259 = vld [vmem:[%s1 + $0x8] sm:$0xff]
        %v260 = vld [vmem:[%s1 + $0x10] sm:$0xff]
        %v261 = vld [vmem:[%s1 + $0x18] sm:$0xff]
        %v262 = vld [vmem:[%s1 + $0x20] sm:$0xff]
        %v263 = vld [vmem:[%s1 + $0x28] sm:$0xff]
        %v264 = vld [vmem:[%s1 + $0x30] sm:$0xff]
        %v265 = vld [vmem:[%s1 + $0x38] sm:$0xff]
        %v266 = vld [vmem:[%s1 + $0x40] sm:$0xff]
        %v267 = vld [vmem:[%s1 + $0x48] sm:$0xff]
        %v268 = vld [vmem:[%s1 + $0x50] sm:$0xff]
        %v269 = vld [vmem:[%s1 + $0x58] sm:$0xff]
        %v270 = vld [vmem:[%s1 + $0x60] sm:$0xff]
        %v271 = vld [vmem:[%s1 + $0x68] sm:$0xff]
        %v272 = vld [vmem:[%s1 + $0x70] sm:$0xff]
        %v273 = vld [vmem:[%s1 + $0x78] sm:$0xff]
        %s274 = sld [smem:[#allocation2]]
        %v275 = vstv %s274
        %276 = vmatprep.subr.mxu0 0.0
        %v277 = vand.u32 %v258, 4294901760
        %278 = vmatpush1.msra.mxu0 %v277
        %279 = vmatprep.subr.mxu0 0.0
        %v280 = vand.u32 %v259, 4294901760
        %281 = vmatpush1.msra.mxu0 %v280
        %282 = vmatprep.subr.mxu0 0.0
        %v283 = vand.u32 %v260, 4294901760
        %284 = vmatpush1.msra.mxu0 %v283
        %285 = vmatprep.subr.mxu0 0.0
        %v286 = vand.u32 %v261, 4294901760
        %287 = vmatpush1.msra.mxu0 %v286
        %288 = vmatprep.subr.mxu0 0.0
        %v289 = vand.u32 %v262, 4294901760
        %290 = vmatpush1.msra.mxu0 %v289
        %291 = vmatprep.subr.mxu0 0.0
        %v292 = vand.u32 %v263, 4294901760
        %293 = vmatpush1.msra.mxu0 %v292
        %294 = vmatprep.subr.mxu0 0.0
        %v295 = vand.u32 %v264, 4294901760
        %296 = vmatpush1.msra.mxu0 %v295
        %297 = vmatprep.subr.mxu0 0.0
        %v298 = vand.u32 %v265, 4294901760
        %299 = vmatpush1.msra.mxu0 %v298
        %300 = vmatprep.subr.mxu0 0.0
        %v301 = vand.u32 %v266, 4294901760
        %302 = vmatpush1.msra.mxu0 %v301
        %303 = vmatprep.subr.mxu0 0.0
        %v304 = vand.u32 %v267, 4294901760
        %305 = vmatpush1.msra.mxu0 %v304
        %306 = vmatprep.subr.mxu0 0.0
        %v307 = vand.u32 %v268, 4294901760
        %308 = vmatpush1.msra.mxu0 %v307
        %309 = vmatprep.subr.mxu0 0.0
        %v310 = vand.u32 %v269, 4294901760
        %311 = vmatpush1.msra.mxu0 %v310
        %312 = vmatprep.subr.mxu0 0.0
        %v313 = vand.u32 %v270, 4294901760
        %314 = vmatpush1.msra.mxu0 %v313
        %315 = vmatprep.subr.mxu0 0.0
        %v316 = vand.u32 %v271, 4294901760
        %317 = vmatpush1.msra.mxu0 %v316
        %318 = vmatprep.subr.mxu0 0.0
        %v319 = vand.u32 %v272, 4294901760
        %320 = vmatpush1.msra.mxu0 %v319
        %321 = vmatprep.subr.mxu0 0.0
        %v322 = vand.u32 %v273, 4294901760
        %323 = vmatpush1.msra.mxu0 %v322
        %324 = vmatprep.subr.mxu0 0.0
        %325 = vmatpush1.msra.mxu0 0.0
        %326 = vmatprep.subr.mxu0 0.0
        %327 = vmatpush1.msra.mxu0 0.0
        %328 = vmatprep.subr.mxu0 0.0
        %329 = vmatpush1.msra.mxu0 0.0
        %330 = vmatprep.subr.mxu0 0.0
        %331 = vmatpush1.msra.mxu0 0.0
        %332 = vmatprep.subr.mxu0 0.0
        %333 = vmatpush1.msra.mxu0 0.0
        %334 = vmatprep.subr.mxu0 0.0
        %335 = vmatpush1.msra.mxu0 0.0
        %336 = vmatprep.subr.mxu0 0.0
        %337 = vmatpush1.msra.mxu0 0.0
        %338 = vmatprep.subr.mxu0 0.0
        %339 = vmatpush1.msra.mxu0 0.0
        %340 = vmatprep.subr.mxu0 0.0
        %341 = vmatpush1.msra.mxu0 0.0
        %342 = vmatprep.subr.mxu0 0.0
        %343 = vmatpush1.msra.mxu0 0.0
        %344 = vmatprep.subr.mxu0 0.0
        %345 = vmatpush1.msra.mxu0 0.0
        %346 = vmatprep.subr.mxu0 0.0
        %347 = vmatpush1.msra.mxu0 0.0
        %348 = vmatprep.subr.mxu0 0.0
        %349 = vmatpush1.msra.mxu0 0.0
        %350 = vmatprep.subr.mxu0 0.0
        %351 = vmatpush1.msra.mxu0 0.0
        %352 = vmatprep.subr.mxu0 0.0
        %353 = vmatpush1.msra.mxu0 0.0
        %354 = vmatprep.subr.mxu0 0.0
        %355 = vmatpush1.msra.mxu0 0.0
        %356 = vmatprep.mubr.f32.mxu0 0.0
        %v357 = vand.u32 %v194, 4294901760
        %v358 = vsub.f32 %v194, %v357
        %v359 = vand.u32 %v358, 4294901760
        %v360 = vsub.f32 %v358, %v359
        %v361 = vand.u32 %v360, 4294901760
        %362 = vmatmul.mubr.f32.gmra.mrb[0].mxu0 %v361
        %v363 = vpop.f32.mrb[0].mxu0
        %v364 = vadd.f32 %v275, %v363
        %v365 = vpop.f32.mrb[0].mxu0
        %366 = vmatprep.mubr.f32.mxu0 0.0
        %v367 = vand.u32 %v195, 4294901760
        %v368 = vsub.f32 %v195, %v367
        %v369 = vand.u32 %v368, 4294901760
        %v370 = vsub.f32 %v368, %v369
        %v371 = vand.u32 %v370, 4294901760
        %372 = vmatmul.mubr.f32.gmra.mrb[0].mxu0 %v371
        %v373 = vpop.f32.mrb[0].mxu0
        %v374 = vadd.f32 %v275, %v373
        %v375 = vpop.f32.mrb[0].mxu0
        %376 = vmatprep.mubr.f32.mxu0 0.0
        %v377 = vand.u32 %v196, 4294901760
        %v378 = vsub.f32 %v196, %v377
        %v379 = vand.u32 %v378, 4294901760
        %v380 = vsub.f32 %v378, %v379
        %v381 = vand.u32 %v380, 4294901760
        %382 = vmatmul.mubr.f32.gmra.mrb[0].mxu0 %v381
        %v383 = vpop.f32.mrb[0].mxu0
        %v384 = vadd.f32 %v275, %v383
        %v385 = vpop.f32.mrb[0].mxu0
        %386 = vmatprep.mubr.f32.mxu0 0.0
        %v387 = vand.u32 %v197, 4294901760
        %v388 = vsub.f32 %v197, %v387
        %v389 = vand.u32 %v388, 4294901760
        %v390 = vsub.f32 %v388, %v389
        %v391 = vand.u32 %v390, 4294901760
        %392 = vmatmul.mubr.f32.gmra.mrb[0].mxu0 %v391
        %v393 = vpop.f32.mrb[0].mxu0
        %v394 = vadd.f32 %v275, %v393
        %v395 = vpop.f32.mrb[0].mxu0
        %396 = vmatprep.mubr.f32.mxu0 0.0
        %v397 = vand.u32 %v198, 4294901760
        %v398 = vsub.f32 %v198, %v397
        %v399 = vand.u32 %v398, 4294901760
        %v400 = vsub.f32 %v398, %v399
        %v401 = vand.u32 %v400, 4294901760
        %402 = vmatmul.mubr.f32.gmra.mrb[0].mxu0 %v401
        %v403 = vpop.f32.mrb[0].mxu0
        %v404 = vadd.f32 %v275, %v403
        %v405 = vpop.f32.mrb[0].mxu0
        %406 = vmatprep.mubr.f32.mxu0 0.0
        %v407 = vand.u32 %v199, 4294901760
        %v408 = vsub.f32 %v199, %v407
        %v409 = vand.u32 %v408, 4294901760
        %v410 = vsub.f32 %v408, %v409
        %v411 = vand.u32 %v410, 4294901760
        %412 = vmatmul.mubr.f32.gmra.mrb[0].mxu0 %v411
        %v413 = vpop.f32.mrb[0].mxu0
        %v414 = vadd.f32 %v275, %v413
        %v415 = vpop.f32.mrb[0].mxu0
        %416 = vmatprep.mubr.f32.mxu0 0.0
        %v417 = vand.u32 %v200, 4294901760
        %v418 = vsub.f32 %v200, %v417
        %v419 = vand.u32 %v418, 4294901760
        %v420 = vsub.f32 %v418, %v419
        %v421 = vand.u32 %v420, 4294901760
        %422 = vmatmul.mubr.f32.gmra.mrb[0].mxu0 %v421
        %v423 = vpop.f32.mrb[0].mxu0
        %v424 = vadd.f32 %v275, %v423
        %v425 = vpop.f32.mrb[0].mxu0
        %426 = vmatprep.mubr.f32.mxu0 0.0
        %v427 = vand.u32 %v201, 4294901760
        %v428 = vsub.f32 %v201, %v427
        %v429 = vand.u32 %v428, 4294901760
        %v430 = vsub.f32 %v428, %v429
        %v431 = vand.u32 %v430, 4294901760
        %432 = vmatmul.mubr.f32.gmra.mrb[0].mxu0 %v431
        %v433 = vpop.f32.mrb[0].mxu0
        %v434 = vadd.f32 %v275, %v433
        %v435 = vpop.f32.mrb[0].mxu0
        %436 = vmatprep.mubr.f32.mxu0 0.0
        %v437 = vand.u32 %v202, 4294901760
        %v438 = vsub.f32 %v202, %v437
        %v439 = vand.u32 %v438, 4294901760
        %v440 = vsub.f32 %v438, %v439
        %v441 = vand.u32 %v440, 4294901760
        %442 = vmatmul.mubr.f32.gmra.mrb[0].mxu0 %v441
        %v443 = vpop.f32.mrb[0].mxu0
        %v444 = vadd.f32 %v275, %v443
        %v445 = vpop.f32.mrb[0].mxu0
        %446 = vmatprep.mubr.f32.mxu0 0.0
        %v447 = vand.u32 %v203, 4294901760
        %v448 = vsub.f32 %v203, %v447
        %v449 = vand.u32 %v448, 4294901760
        %v450 = vsub.f32 %v448, %v449
        %v451 = vand.u32 %v450, 4294901760
        %452 = vmatmul.mubr.f32.gmra.mrb[0].mxu0 %v451
        %v453 = vpop.f32.mrb[0].mxu0
        %v454 = vadd.f32 %v275, %v453
        %v455 = vpop.f32.mrb[0].mxu0
        %456 = vmatprep.mubr.f32.mxu0 0.0
        %v457 = vand.u32 %v204, 4294901760
        %v458 = vsub.f32 %v204, %v457
        %v459 = vand.u32 %v458, 4294901760
        %v460 = vsub.f32 %v458, %v459
        %v461 = vand.u32 %v460, 4294901760
        %462 = vmatmul.mubr.f32.gmra.mrb[0].mxu0 %v461
        %v463 = vpop.f32.mrb[0].mxu0
        %v464 = vadd.f32 %v275, %v463
        %v465 = vpop.f32.mrb[0].mxu0
        %466 = vmatprep.mubr.f32.mxu0 0.0
        %v467 = vand.u32 %v205, 4294901760
        %v468 = vsub.f32 %v205, %v467
        %v469 = vand.u32 %v468, 4294901760
        %v470 = vsub.f32 %v468, %v469
        %v471 = vand.u32 %v470, 4294901760
        %472 = vmatmul.mubr.f32.gmra.mrb[0].mxu0 %v471
        %v473 = vpop.f32.mrb[0].mxu0
        %v474 = vadd.f32 %v275, %v473
        %v475 = vpop.f32.mrb[0].mxu0
        %476 = vmatprep.mubr.f32.mxu0 0.0
        %v477 = vand.u32 %v206, 4294901760
        %v478 = vsub.f32 %v206, %v477
        %v479 = vand.u32 %v478, 4294901760
        %v480 = vsub.f32 %v478, %v479
        %v481 = vand.u32 %v480, 4294901760
        %482 = vmatmul.mubr.f32.gmra.mrb[0].mxu0 %v481
        %v483 = vpop.f32.mrb[0].mxu0
        %v484 = vadd.f32 %v275, %v483
        %v485 = vpop.f32.mrb[0].mxu0
        %486 = vmatprep.mubr.f32.mxu0 0.0
        %v487 = vand.u32 %v207, 4294901760
        %v488 = vsub.f32 %v207, %v487
        %v489 = vand.u32 %v488, 4294901760
        %v490 = vsub.f32 %v488, %v489
        %v491 = vand.u32 %v490, 4294901760
        %492 = vmatmul.mubr.f32.gmra.mrb[0].mxu0 %v491
        %v493 = vpop.f32.mrb[0].mxu0
        %v494 = vadd.f32 %v275, %v493
        %v495 = vpop.f32.mrb[0].mxu0
        %496 = vmatprep.mubr.f32.mxu0 0.0
        %v497 = vand.u32 %v208, 4294901760
        %v498 = vsub.f32 %v208, %v497
        %v499 = vand.u32 %v498, 4294901760
        %v500 = vsub.f32 %v498, %v499
        %v501 = vand.u32 %v500, 4294901760
        %502 = vmatmul.mubr.f32.gmra.mrb[0].mxu0 %v501
        %v503 = vpop.f32.mrb[0].mxu0
        %v504 = vadd.f32 %v275, %v503
        %v505 = vpop.f32.mrb[0].mxu0
        %506 = vmatprep.mubr.f32.mxu0 0.0
        %v507 = vand.u32 %v209, 4294901760
        %v508 = vsub.f32 %v209, %v507
        %v509 = vand.u32 %v508, 4294901760
        %v510 = vsub.f32 %v508, %v509
        %v511 = vand.u32 %v510, 4294901760
        %512 = vmatmul.mubr.f32.gmra.mrb[0].mxu0 %v511
        %v513 = vpop.f32.mrb[0].mxu0
        %v514 = vadd.f32 %v275, %v513
        %v515 = vpop.f32.mrb[0].mxu0
        %516 = vmatprep.mubr.f32.mxu0 0.0
        %v517 = vand.u32 %v210, 4294901760
        %v518 = vsub.f32 %v210, %v517
        %v519 = vand.u32 %v518, 4294901760
        %v520 = vsub.f32 %v518, %v519
        %v521 = vand.u32 %v520, 4294901760
        %522 = vmatmul.mubr.f32.gmra.mrb[0].mxu0 %v521
        %v523 = vpop.f32.mrb[0].mxu0
        %v524 = vadd.f32 %v275, %v523
        %v525 = vpop.f32.mrb[0].mxu0
        %526 = vmatprep.mubr.f32.mxu0 0.0
        %v527 = vand.u32 %v211, 4294901760
        %v528 = vsub.f32 %v211, %v527
        %v529 = vand.u32 %v528, 4294901760
        %v530 = vsub.f32 %v528, %v529
        %v531 = vand.u32 %v530, 4294901760
        %532 = vmatmul.mubr.f32.gmra.mrb[0].mxu0 %v531
        %v533 = vpop.f32.mrb[0].mxu0
        %v534 = vadd.f32 %v275, %v533
        %v535 = vpop.f32.mrb[0].mxu0
        %536 = vmatprep.mubr.f32.mxu0 0.0
        %v537 = vand.u32 %v212, 4294901760
        %v538 = vsub.f32 %v212, %v537
        %v539 = vand.u32 %v538, 4294901760
        %v540 = vsub.f32 %v538, %v539
        %v541 = vand.u32 %v540, 4294901760
        %542 = vmatmul.mubr.f32.gmra.mrb[0].mxu0 %v541
        %v543 = vpop.f32.mrb[0].mxu0
        %v544 = vadd.f32 %v275, %v543
        %v545 = vpop.f32.mrb[0].mxu0
        %546 = vmatprep.mubr.f32.mxu0 0.0
        %v547 = vand.u32 %v213, 4294901760
        %v548 = vsub.f32 %v213, %v547
        %v549 = vand.u32 %v548, 4294901760
        %v550 = vsub.f32 %v548, %v549
        %v551 = vand.u32 %v550, 4294901760
        %552 = vmatmul.mubr.f32.gmra.mrb[0].mxu0 %v551
        %v553 = vpop.f32.mrb[0].mxu0
        %v554 = vadd.f32 %v275, %v553
        %v555 = vpop.f32.mrb[0].mxu0
        %556 = vmatprep.mubr.f32.mxu0 0.0
        %v557 = vand.u32 %v214, 4294901760
        %v558 = vsub.f32 %v214, %v557
        %v559 = vand.u32 %v558, 4294901760
        %v560 = vsub.f32 %v558, %v559
        %v561 = vand.u32 %v560, 4294901760
        %562 = vmatmul.mubr.f32.gmra.mrb[0].mxu0 %v561
        %v563 = vpop.f32.mrb[0].mxu0
        %v564 = vadd.f32 %v275, %v563
        %v565 = vpop.f32.mrb[0].mxu0
        %566 = vmatprep.mubr.f32.mxu0 0.0
        %v567 = vand.u32 %v215, 4294901760
        %v568 = vsub.f32 %v215, %v567
        %v569 = vand.u32 %v568, 4294901760
        %v570 = vsub.f32 %v568, %v569
        %v571 = vand.u32 %v570, 4294901760
        %572 = vmatmul.mubr.f32.gmra.mrb[0].mxu0 %v571
        %v573 = vpop.f32.mrb[0].mxu0
        %v574 = vadd.f32 %v275, %v573
        %v575 = vpop.f32.mrb[0].mxu0
        %576 = vmatprep.mubr.f32.mxu0 0.0
        %v577 = vand.u32 %v216, 4294901760
        %v578 = vsub.f32 %v216, %v577
        %v579 = vand.u32 %v578, 4294901760
        %v580 = vsub.f32 %v578, %v579
        %v581 = vand.u32 %v580, 4294901760
        %582 = vmatmul.mubr.f32.gmra.mrb[0].mxu0 %v581
        %v583 = vpop.f32.mrb[0].mxu0
        %v584 = vadd.f32 %v275, %v583
        %v585 = vpop.f32.mrb[0].mxu0
        %586 = vmatprep.mubr.f32.mxu0 0.0
        %v587 = vand.u32 %v217, 4294901760
        %v588 = vsub.f32 %v217, %v587
        %v589 = vand.u32 %v588, 4294901760
        %v590 = vsub.f32 %v588, %v589
        %v591 = vand.u32 %v590, 4294901760
        %592 = vmatmul.mubr.f32.gmra.mrb[0].mxu0 %v591
        %v593 = vpop.f32.mrb[0].mxu0
        %v594 = vadd.f32 %v275, %v593
        %v595 = vpop.f32.mrb[0].mxu0
        %596 = vmatprep.mubr.f32.mxu0 0.0
        %v597 = vand.u32 %v218, 4294901760
        %v598 = vsub.f32 %v218, %v597
        %v599 = vand.u32 %v598, 4294901760
        %v600 = vsub.f32 %v598, %v599
        %v601 = vand.u32 %v600, 4294901760
        %602 = vmatmul.mubr.f32.gmra.mrb[0].mxu0 %v601
        %v603 = vpop.f32.mrb[0].mxu0
        %v604 = vadd.f32 %v275, %v603
        %v605 = vpop.f32.mrb[0].mxu0
        %606 = vmatprep.mubr.f32.mxu0 0.0
        %v607 = vand.u32 %v219, 4294901760
        %v608 = vsub.f32 %v219, %v607
        %v609 = vand.u32 %v608, 4294901760
        %v610 = vsub.f32 %v608, %v609
        %v611 = vand.u32 %v610, 4294901760
        %612 = vmatmul.mubr.f32.gmra.mrb[0].mxu0 %v611
        %v613 = vpop.f32.mrb[0].mxu0
        %v614 = vadd.f32 %v275, %v613
        %v615 = vpop.f32.mrb[0].mxu0
        %616 = vmatprep.mubr.f32.mxu0 0.0
        %v617 = vand.u32 %v220, 4294901760
        %v618 = vsub.f32 %v220, %v617
        %v619 = vand.u32 %v618, 4294901760
        %v620 = vsub.f32 %v618, %v619
        %v621 = vand.u32 %v620, 4294901760
        %622 = vmatmul.mubr.f32.gmra.mrb[0].mxu0 %v621
        %v623 = vpop.f32.mrb[0].mxu0
        %v624 = vadd.f32 %v275, %v623
        %v625 = vpop.f32.mrb[0].mxu0
        %626 = vmatprep.mubr.f32.mxu0 0.0
        %v627 = vand.u32 %v221, 4294901760
        %v628 = vsub.f32 %v221, %v627
        %v629 = vand.u32 %v628, 4294901760
        %v630 = vsub.f32 %v628, %v629
        %v631 = vand.u32 %v630, 4294901760
        %632 = vmatmul.mubr.f32.gmra.mrb[0].mxu0 %v631
        %v633 = vpop.f32.mrb[0].mxu0
        %v634 = vadd.f32 %v275, %v633
        %v635 = vpop.f32.mrb[0].mxu0
        %636 = vmatprep.mubr.f32.mxu0 0.0
        %v637 = vand.u32 %v222, 4294901760
        %v638 = vsub.f32 %v222, %v637
        %v639 = vand.u32 %v638, 4294901760
        %v640 = vsub.f32 %v638, %v639
        %v641 = vand.u32 %v640, 4294901760
        %642 = vmatmul.mubr.f32.gmra.mrb[0].mxu0 %v641
        %v643 = vpop.f32.mrb[0].mxu0
        %v644 = vadd.f32 %v275, %v643
        %v645 = vpop.f32.mrb[0].mxu0
        %646 = vmatprep.mubr.f32.mxu0 0.0
        %v647 = vand.u32 %v223, 4294901760
        %v648 = vsub.f32 %v223, %v647
        %v649 = vand.u32 %v648, 4294901760
        %v650 = vsub.f32 %v648, %v649
        %v651 = vand.u32 %v650, 4294901760
        %652 = vmatmul.mubr.f32.gmra.mrb[0].mxu0 %v651
        %v653 = vpop.f32.mrb[0].mxu0
        %v654 = vadd.f32 %v275, %v653
        %v655 = vpop.f32.mrb[0].mxu0
        %656 = vmatprep.mubr.f32.mxu0 0.0
        %v657 = vand.u32 %v224, 4294901760
        %v658 = vsub.f32 %v224, %v657
        %v659 = vand.u32 %v658, 4294901760
        %v660 = vsub.f32 %v658, %v659
        %v661 = vand.u32 %v660, 4294901760
        %662 = vmatmul.mubr.f32.gmra.mrb[0].mxu0 %v661
        %v663 = vpop.f32.mrb[0].mxu0
        %v664 = vadd.f32 %v275, %v663
        %v665 = vpop.f32.mrb[0].mxu0
        %666 = vmatprep.mubr.f32.mxu0 0.0
        %v667 = vand.u32 %v225, 4294901760
        %v668 = vsub.f32 %v225, %v667
        %v669 = vand.u32 %v668, 4294901760
        %v670 = vsub.f32 %v668, %v669
        %v671 = vand.u32 %v670, 4294901760
        %672 = vmatmul.mubr.f32.gmra.mrb[0].mxu0 %v671
        %v673 = vpop.f32.mrb[0].mxu0
        %v674 = vadd.f32 %v275, %v673
        %v675 = vpop.f32.mrb[0].mxu0
        %676 = vmatprep.mubr.f32.mxu0 0.0
        %v677 = vand.u32 %v226, 4294901760
        %v678 = vsub.f32 %v226, %v677
        %v679 = vand.u32 %v678, 4294901760
        %v680 = vsub.f32 %v678, %v679
        %v681 = vand.u32 %v680, 4294901760
        %682 = vmatmul.mubr.f32.gmra.mrb[0].mxu0 %v681
        %v683 = vpop.f32.mrb[0].mxu0
        %v684 = vadd.f32 %v275, %v683
        %v685 = vpop.f32.mrb[0].mxu0
        %686 = vmatprep.mubr.f32.mxu0 0.0
        %v687 = vand.u32 %v227, 4294901760
        %v688 = vsub.f32 %v227, %v687
        %v689 = vand.u32 %v688, 4294901760
        %v690 = vsub.f32 %v688, %v689
        %v691 = vand.u32 %v690, 4294901760
        %692 = vmatmul.mubr.f32.gmra.mrb[0].mxu0 %v691
        %v693 = vpop.f32.mrb[0].mxu0
        %v694 = vadd.f32 %v275, %v693
        %v695 = vpop.f32.mrb[0].mxu0
        %696 = vmatprep.mubr.f32.mxu0 0.0
        %v697 = vand.u32 %v228, 4294901760
        %v698 = vsub.f32 %v228, %v697
        %v699 = vand.u32 %v698, 4294901760
        %v700 = vsub.f32 %v698, %v699
        %v701 = vand.u32 %v700, 4294901760
        %702 = vmatmul.mubr.f32.gmra.mrb[0].mxu0 %v701
        %v703 = vpop.f32.mrb[0].mxu0
        %v704 = vadd.f32 %v275, %v703
        %v705 = vpop.f32.mrb[0].mxu0
        %706 = vmatprep.mubr.f32.mxu0 0.0
        %v707 = vand.u32 %v229, 4294901760
        %v708 = vsub.f32 %v229, %v707
        %v709 = vand.u32 %v708, 4294901760
        %v710 = vsub.f32 %v708, %v709
        %v711 = vand.u32 %v710, 4294901760
        %712 = vmatmul.mubr.f32.gmra.mrb[0].mxu0 %v711
        %v713 = vpop.f32.mrb[0].mxu0
        %v714 = vadd.f32 %v275, %v713
        %v715 = vpop.f32.mrb[0].mxu0
        %716 = vmatprep.mubr.f32.mxu0 0.0
        %v717 = vand.u32 %v230, 4294901760
        %v718 = vsub.f32 %v230, %v717
        %v719 = vand.u32 %v718, 4294901760
        %v720 = vsub.f32 %v718, %v719
        %v721 = vand.u32 %v720, 4294901760
        %722 = vmatmul.mubr.f32.gmra.mrb[0].mxu0 %v721
        %v723 = vpop.f32.mrb[0].mxu0
        %v724 = vadd.f32 %v275, %v723
        %v725 = vpop.f32.mrb[0].mxu0
        %726 = vmatprep.mubr.f32.mxu0 0.0
        %v727 = vand.u32 %v231, 4294901760
        %v728 = vsub.f32 %v231, %v727
        %v729 = vand.u32 %v728, 4294901760
        %v730 = vsub.f32 %v728, %v729
        %v731 = vand.u32 %v730, 4294901760
        %732 = vmatmul.mubr.f32.gmra.mrb[0].mxu0 %v731
        %v733 = vpop.f32.mrb[0].mxu0
        %v734 = vadd.f32 %v275, %v733
        %v735 = vpop.f32.mrb[0].mxu0
        %736 = vmatprep.mubr.f32.mxu0 0.0
        %v737 = vand.u32 %v232, 4294901760
        %v738 = vsub.f32 %v232, %v737
        %v739 = vand.u32 %v738, 4294901760
        %v740 = vsub.f32 %v738, %v739
        %v741 = vand.u32 %v740, 4294901760
        %742 = vmatmul.mubr.f32.gmra.mrb[0].mxu0 %v741
        %v743 = vpop.f32.mrb[0].mxu0
        %v744 = vadd.f32 %v275, %v743
        %v745 = vpop.f32.mrb[0].mxu0
        %746 = vmatprep.mubr.f32.mxu0 0.0
        %v747 = vand.u32 %v233, 4294901760
        %v748 = vsub.f32 %v233, %v747
        %v749 = vand.u32 %v748, 4294901760
        %v750 = vsub.f32 %v748, %v749
        %v751 = vand.u32 %v750, 4294901760
        %752 = vmatmul.mubr.f32.gmra.mrb[0].mxu0 %v751
        %v753 = vpop.f32.mrb[0].mxu0
        %v754 = vadd.f32 %v275, %v753
        %v755 = vpop.f32.mrb[0].mxu0
        %756 = vmatprep.mubr.f32.mxu0 0.0
        %v757 = vand.u32 %v234, 4294901760
        %v758 = vsub.f32 %v234, %v757
        %v759 = vand.u32 %v758, 4294901760
        %v760 = vsub.f32 %v758, %v759
        %v761 = vand.u32 %v760, 4294901760
        %762 = vmatmul.mubr.f32.gmra.mrb[0].mxu0 %v761
        %v763 = vpop.f32.mrb[0].mxu0
        %v764 = vadd.f32 %v275, %v763
        %v765 = vpop.f32.mrb[0].mxu0
        %766 = vmatprep.mubr.f32.mxu0 0.0
        %v767 = vand.u32 %v235, 4294901760
        %v768 = vsub.f32 %v235, %v767
        %v769 = vand.u32 %v768, 4294901760
        %v770 = vsub.f32 %v768, %v769
        %v771 = vand.u32 %v770, 4294901760
        %772 = vmatmul.mubr.f32.gmra.mrb[0].mxu0 %v771
        %v773 = vpop.f32.mrb[0].mxu0
        %v774 = vadd.f32 %v275, %v773
        %v775 = vpop.f32.mrb[0].mxu0
        %776 = vmatprep.mubr.f32.mxu0 0.0
        %v777 = vand.u32 %v236, 4294901760
        %v778 = vsub.f32 %v236, %v777
        %v779 = vand.u32 %v778, 4294901760
        %v780 = vsub.f32 %v778, %v779
        %v781 = vand.u32 %v780, 4294901760
        %782 = vmatmul.mubr.f32.gmra.mrb[0].mxu0 %v781
        %v783 = vpop.f32.mrb[0].mxu0
        %v784 = vadd.f32 %v275, %v783
        %v785 = vpop.f32.mrb[0].mxu0
        %786 = vmatprep.mubr.f32.mxu0 0.0
        %v787 = vand.u32 %v237, 4294901760
        %v788 = vsub.f32 %v237, %v787
        %v789 = vand.u32 %v788, 4294901760
        %v790 = vsub.f32 %v788, %v789
        %v791 = vand.u32 %v790, 4294901760
        %792 = vmatmul.mubr.f32.gmra.mrb[0].mxu0 %v791
        %v793 = vpop.f32.mrb[0].mxu0
        %v794 = vadd.f32 %v275, %v793
        %v795 = vpop.f32.mrb[0].mxu0
        %796 = vmatprep.mubr.f32.mxu0 0.0
        %v797 = vand.u32 %v238, 4294901760
        %v798 = vsub.f32 %v238, %v797
        %v799 = vand.u32 %v798, 4294901760
        %v800 = vsub.f32 %v798, %v799
        %v801 = vand.u32 %v800, 4294901760
        %802 = vmatmul.mubr.f32.gmra.mrb[0].mxu0 %v801
        %v803 = vpop.f32.mrb[0].mxu0
        %v804 = vadd.f32 %v275, %v803
        %v805 = vpop.f32.mrb[0].mxu0
        %806 = vmatprep.mubr.f32.mxu0 0.0
        %v807 = vand.u32 %v239, 4294901760
        %v808 = vsub.f32 %v239, %v807
        %v809 = vand.u32 %v808, 4294901760
        %v810 = vsub.f32 %v808, %v809
        %v811 = vand.u32 %v810, 4294901760
        %812 = vmatmul.mubr.f32.gmra.mrb[0].mxu0 %v811
        %v813 = vpop.f32.mrb[0].mxu0
        %v814 = vadd.f32 %v275, %v813
        %v815 = vpop.f32.mrb[0].mxu0
        %816 = vmatprep.mubr.f32.mxu0 0.0
        %v817 = vand.u32 %v240, 4294901760
        %v818 = vsub.f32 %v240, %v817
        %v819 = vand.u32 %v818, 4294901760
        %v820 = vsub.f32 %v818, %v819
        %v821 = vand.u32 %v820, 4294901760
        %822 = vmatmul.mubr.f32.gmra.mrb[0].mxu0 %v821
        %v823 = vpop.f32.mrb[0].mxu0
        %v824 = vadd.f32 %v275, %v823
        %v825 = vpop.f32.mrb[0].mxu0
        %826 = vmatprep.mubr.f32.mxu0 0.0
        %v827 = vand.u32 %v241, 4294901760
        %v828 = vsub.f32 %v241, %v827
        %v829 = vand.u32 %v828, 4294901760
        %v830 = vsub.f32 %v828, %v829
        %v831 = vand.u32 %v830, 4294901760
        %832 = vmatmul.mubr.f32.gmra.mrb[0].mxu0 %v831
        %v833 = vpop.f32.mrb[0].mxu0
        %v834 = vadd.f32 %v275, %v833
        %v835 = vpop.f32.mrb[0].mxu0
        %836 = vmatprep.mubr.f32.mxu0 0.0
        %v837 = vand.u32 %v242, 4294901760
        %v838 = vsub.f32 %v242, %v837
        %v839 = vand.u32 %v838, 4294901760
        %v840 = vsub.f32 %v838, %v839
        %v841 = vand.u32 %v840, 4294901760
        %842 = vmatmul.mubr.f32.gmra.mrb[0].mxu0 %v841
        %v843 = vpop.f32.mrb[0].mxu0
        %v844 = vadd.f32 %v275, %v843
        %v845 = vpop.f32.mrb[0].mxu0
        %846 = vmatprep.mubr.f32.mxu0 0.0
        %v847 = vand.u32 %v243, 4294901760
        %v848 = vsub.f32 %v243, %v847
        %v849 = vand.u32 %v848, 4294901760
        %v850 = vsub.f32 %v848, %v849
        %v851 = vand.u32 %v850, 4294901760
        %852 = vmatmul.mubr.f32.gmra.mrb[0].mxu0 %v851
        %v853 = vpop.f32.mrb[0].mxu0
        %v854 = vadd.f32 %v275, %v853
        %v855 = vpop.f32.mrb[0].mxu0
        %856 = vmatprep.mubr.f32.mxu0 0.0
        %v857 = vand.u32 %v244, 4294901760
        %v858 = vsub.f32 %v244, %v857
        %v859 = vand.u32 %v858, 4294901760
        %v860 = vsub.f32 %v858, %v859
        %v861 = vand.u32 %v860, 4294901760
        %862 = vmatmul.mubr.f32.gmra.mrb[0].mxu0 %v861
        %v863 = vpop.f32.mrb[0].mxu0
        %v864 = vadd.f32 %v275, %v863
        %v865 = vpop.f32.mrb[0].mxu0
        %866 = vmatprep.mubr.f32.mxu0 0.0
        %v867 = vand.u32 %v245, 4294901760
        %v868 = vsub.f32 %v245, %v867
        %v869 = vand.u32 %v868, 4294901760
        %v870 = vsub.f32 %v868, %v869
        %v871 = vand.u32 %v870, 4294901760
        %872 = vmatmul.mubr.f32.gmra.mrb[0].mxu0 %v871
        %v873 = vpop.f32.mrb[0].mxu0
        %v874 = vadd.f32 %v275, %v873
        %v875 = vpop.f32.mrb[0].mxu0
        %876 = vmatprep.mubr.f32.mxu0 0.0
        %v877 = vand.u32 %v246, 4294901760
        %v878 = vsub.f32 %v246, %v877
        %v879 = vand.u32 %v878, 4294901760
        %v880 = vsub.f32 %v878, %v879
        %v881 = vand.u32 %v880, 4294901760
        %882 = vmatmul.mubr.f32.gmra.mrb[0].mxu0 %v881
        %v883 = vpop.f32.mrb[0].mxu0
        %v884 = vadd.f32 %v275, %v883
        %v885 = vpop.f32.mrb[0].mxu0
        %886 = vmatprep.mubr.f32.mxu0 0.0
        %v887 = vand.u32 %v247, 4294901760
        %v888 = vsub.f32 %v247, %v887
        %v889 = vand.u32 %v888, 4294901760
        %v890 = vsub.f32 %v888, %v889
        %v891 = vand.u32 %v890, 4294901760
        %892 = vmatmul.mubr.f32.gmra.mrb[0].mxu0 %v891
        %v893 = vpop.f32.mrb[0].mxu0
        %v894 = vadd.f32 %v275, %v893
        %v895 = vpop.f32.mrb[0].mxu0
        %896 = vmatprep.mubr.f32.mxu0 0.0
        %v897 = vand.u32 %v248, 4294901760
        %v898 = vsub.f32 %v248, %v897
        %v899 = vand.u32 %v898, 4294901760
        %v900 = vsub.f32 %v898, %v899
        %v901 = vand.u32 %v900, 4294901760
        %902 = vmatmul.mubr.f32.gmra.mrb[0].mxu0 %v901
        %v903 = vpop.f32.mrb[0].mxu0
        %v904 = vadd.f32 %v275, %v903
        %v905 = vpop.f32.mrb[0].mxu0
        %906 = vmatprep.mubr.f32.mxu0 0.0
        %v907 = vand.u32 %v249, 4294901760
        %v908 = vsub.f32 %v249, %v907
        %v909 = vand.u32 %v908, 4294901760
        %v910 = vsub.f32 %v908, %v909
        %v911 = vand.u32 %v910, 4294901760
        %912 = vmatmul.mubr.f32.gmra.mrb[0].mxu0 %v911
        %v913 = vpop.f32.mrb[0].mxu0
        %v914 = vadd.f32 %v275, %v913
        %v915 = vpop.f32.mrb[0].mxu0
        %916 = vmatprep.mubr.f32.mxu0 0.0
        %v917 = vand.u32 %v250, 4294901760
        %v918 = vsub.f32 %v250, %v917
        %v919 = vand.u32 %v918, 4294901760
        %v920 = vsub.f32 %v918, %v919
        %v921 = vand.u32 %v920, 4294901760
        %922 = vmatmul.mubr.f32.gmra.mrb[0].mxu0 %v921
        %v923 = vpop.f32.mrb[0].mxu0
        %v924 = vadd.f32 %v275, %v923
        %v925 = vpop.f32.mrb[0].mxu0
        %926 = vmatprep.mubr.f32.mxu0 0.0
        %v927 = vand.u32 %v251, 4294901760
        %v928 = vsub.f32 %v251, %v927
        %v929 = vand.u32 %v928, 4294901760
        %v930 = vsub.f32 %v928, %v929
        %v931 = vand.u32 %v930, 4294901760
        %932 = vmatmul.mubr.f32.gmra.mrb[0].mxu0 %v931
        %v933 = vpop.f32.mrb[0].mxu0
        %v934 = vadd.f32 %v275, %v933
        %v935 = vpop.f32.mrb[0].mxu0
        %936 = vmatprep.mubr.f32.mxu0 0.0
        %v937 = vand.u32 %v252, 4294901760
        %v938 = vsub.f32 %v252, %v937
        %v939 = vand.u32 %v938, 4294901760
        %v940 = vsub.f32 %v938, %v939
        %v941 = vand.u32 %v940, 4294901760
        %942 = vmatmul.mubr.f32.gmra.mrb[0].mxu0 %v941
        %v943 = vpop.f32.mrb[0].mxu0
        %v944 = vadd.f32 %v275, %v943
        %v945 = vpop.f32.mrb[0].mxu0
        %946 = vmatprep.mubr.f32.mxu0 0.0
        %v947 = vand.u32 %v253, 4294901760
        %v948 = vsub.f32 %v253, %v947
        %v949 = vand.u32 %v948, 4294901760
        %v950 = vsub.f32 %v948, %v949
        %v951 = vand.u32 %v950, 4294901760
        %952 = vmatmul.mubr.f32.gmra.mrb[0].mxu0 %v951
        %v953 = vpop.f32.mrb[0].mxu0
        %v954 = vadd.f32 %v275, %v953
        %v955 = vpop.f32.mrb[0].mxu0
        %956 = vmatprep.mubr.f32.mxu0 0.0
        %v957 = vand.u32 %v254, 4294901760
        %v958 = vsub.f32 %v254, %v957
        %v959 = vand.u32 %v958, 4294901760
        %v960 = vsub.f32 %v958, %v959
        %v961 = vand.u32 %v960, 4294901760
        %962 = vmatmul.mubr.f32.gmra.mrb[0].mxu0 %v961
        %v963 = vpop.f32.mrb[0].mxu0
        %v964 = vadd.f32 %v275, %v963
        %v965 = vpop.f32.mrb[0].mxu0
        %966 = vmatprep.mubr.f32.mxu0 0.0
        %v967 = vand.u32 %v255, 4294901760
        %v968 = vsub.f32 %v255, %v967
        %v969 = vand.u32 %v968, 4294901760
        %v970 = vsub.f32 %v968, %v969
        %v971 = vand.u32 %v970, 4294901760
        %972 = vmatmul.mubr.f32.gmra.mrb[0].mxu0 %v971
        %v973 = vpop.f32.mrb[0].mxu0
        %v974 = vadd.f32 %v275, %v973
        %v975 = vpop.f32.mrb[0].mxu0
        %976 = vmatprep.mubr.f32.mxu0 0.0
        %v977 = vand.u32 %v256, 4294901760
        %v978 = vsub.f32 %v256, %v977
        %v979 = vand.u32 %v978, 4294901760
        %v980 = vsub.f32 %v978, %v979
        %v981 = vand.u32 %v980, 4294901760
        %982 = vmatmul.mubr.f32.gmra.mrb[0].mxu0 %v981
        %v983 = vpop.f32.mrb[0].mxu0
        %v984 = vadd.f32 %v275, %v983
        %v985 = vpop.f32.mrb[0].mxu0
        %986 = vmatprep.mubr.f32.mxu0 0.0
        %v987 = vand.u32 %v257, 4294901760
        %v988 = vsub.f32 %v257, %v987
        %v989 = vand.u32 %v988, 4294901760
        %v990 = vsub.f32 %v988, %v989
        %v991 = vand.u32 %v990, 4294901760
        %992 = vmatmul.mubr.f32.gmra.mrb[0].mxu0 %v991
        %v993 = vpop.f32.mrb[0].mxu0
        %v994 = vadd.f32 %v275, %v993
        %v995 = vpop.f32.mrb[0].mxu0
        %996 = vdwg.mxu0
        %997 = vmatprep.subr.mxu0 0.0
        %v998 = vand.u32 %v258, 4294901760
        %v999 = vsub.f32 %v258, %v998
        %v1000 = vand.u32 %v999, 4294901760
        %v1001 = vsub.f32 %v999, %v1000
        %v1002 = vand.u32 %v1001, 4294901760
        %1003 = vmatpush1.msra.mxu0 %v1002
        %1004 = vmatprep.subr.mxu0 0.0
        %v1005 = vand.u32 %v259, 4294901760
        %v1006 = vsub.f32 %v259, %v1005
        %v1007 = vand.u32 %v1006, 4294901760
        %v1008 = vsub.f32 %v1006, %v1007
        %v1009 = vand.u32 %v1008, 4294901760
        %1010 = vmatpush1.msra.mxu0 %v1009
        %1011 = vmatprep.subr.mxu0 0.0
        %v1012 = vand.u32 %v260, 4294901760
        %v1013 = vsub.f32 %v260, %v1012
        %v1014 = vand.u32 %v1013, 4294901760
        %v1015 = vsub.f32 %v1013, %v1014
        %v1016 = vand.u32 %v1015, 4294901760
        %1017 = vmatpush1.msra.mxu0 %v1016
        %1018 = vmatprep.subr.mxu0 0.0
        %v1019 = vand.u32 %v261, 4294901760
        %v1020 = vsub.f32 %v261, %v1019
        %v1021 = vand.u32 %v1020, 4294901760
        %v1022 = vsub.f32 %v1020, %v1021
        %v1023 = vand.u32 %v1022, 4294901760
        %1024 = vmatpush1.msra.mxu0 %v1023
        %1025 = vmatprep.subr.mxu0 0.0
        %v1026 = vand.u32 %v262, 4294901760
        %v1027 = vsub.f32 %v262, %v1026
        %v1028 = vand.u32 %v1027, 4294901760
        %v1029 = vsub.f32 %v1027, %v1028
        %v1030 = vand.u32 %v1029, 4294901760
        %1031 = vmatpush1.msra.mxu0 %v1030
        %1032 = vmatprep.subr.mxu0 0.0
        %v1033 = vand.u32 %v263, 4294901760
        %v1034 = vsub.f32 %v263, %v1033
        %v1035 = vand.u32 %v1034, 4294901760
        %v1036 = vsub.f32 %v1034, %v1035
        %v1037 = vand.u32 %v1036, 4294901760
        %1038 = vmatpush1.msra.mxu0 %v1037
        %1039 = vmatprep.subr.mxu0 0.0
        %v1040 = vand.u32 %v264, 4294901760
        %v1041 = vsub.f32 %v264, %v1040
        %v1042 = vand.u32 %v1041, 4294901760
        %v1043 = vsub.f32 %v1041, %v1042
        %v1044 = vand.u32 %v1043, 4294901760
        %1045 = vmatpush1.msra.mxu0 %v1044
        %1046 = vmatprep.subr.mxu0 0.0
        %v1047 = vand.u32 %v265, 4294901760
        %v1048 = vsub.f32 %v265, %v1047
        %v1049 = vand.u32 %v1048, 4294901760
        %v1050 = vsub.f32 %v1048, %v1049
        %v1051 = vand.u32 %v1050, 4294901760
        %1052 = vmatpush1.msra.mxu0 %v1051
        %1053 = vmatprep.subr.mxu0 0.0
        %v1054 = vand.u32 %v266, 4294901760
        %v1055 = vsub.f32 %v266, %v1054
        %v1056 = vand.u32 %v1055, 4294901760
        %v1057 = vsub.f32 %v1055, %v1056
        %v1058 = vand.u32 %v1057, 4294901760
        %1059 = vmatpush1.msra.mxu0 %v1058
        %1060 = vmatprep.subr.mxu0 0.0
        %v1061 = vand.u32 %v267, 4294901760
        %v1062 = vsub.f32 %v267, %v1061
        %v1063 = vand.u32 %v1062, 4294901760
        %v1064 = vsub.f32 %v1062, %v1063
        %v1065 = vand.u32 %v1064, 4294901760
        %1066 = vmatpush1.msra.mxu0 %v1065
        %1067 = vmatprep.subr.mxu0 0.0
        %v1068 = vand.u32 %v268, 4294901760
        %v1069 = vsub.f32 %v268, %v1068
        %v1070 = vand.u32 %v1069, 4294901760
        %v1071 = vsub.f32 %v1069, %v1070
        %v1072 = vand.u32 %v1071, 4294901760
        %1073 = vmatpush1.msra.mxu0 %v1072
        %1074 = vmatprep.subr.mxu0 0.0
        %v1075 = vand.u32 %v269, 4294901760
        %v1076 = vsub.f32 %v269, %v1075
        %v1077 = vand.u32 %v1076, 4294901760
        %v1078 = vsub.f32 %v1076, %v1077
        %v1079 = vand.u32 %v1078, 4294901760
        %1080 = vmatpush1.msra.mxu0 %v1079
        %1081 = vmatprep.subr.mxu0 0.0
        %v1082 = vand.u32 %v270, 4294901760
        %v1083 = vsub.f32 %v270, %v1082
        %v1084 = vand.u32 %v1083, 4294901760
        %v1085 = vsub.f32 %v1083, %v1084
        %v1086 = vand.u32 %v1085, 4294901760
        %1087 = vmatpush1.msra.mxu0 %v1086
        %1088 = vmatprep.subr.mxu0 0.0
        %v1089 = vand.u32 %v271, 4294901760
        %v1090 = vsub.f32 %v271, %v1089
        %v1091 = vand.u32 %v1090, 4294901760
        %v1092 = vsub.f32 %v1090, %v1091
        %v1093 = vand.u32 %v1092, 4294901760
        %1094 = vmatpush1.msra.mxu0 %v1093
        %1095 = vmatprep.subr.mxu0 0.0
        %v1096 = vand.u32 %v272, 4294901760
        %v1097 = vsub.f32 %v272, %v1096
        %v1098 = vand.u32 %v1097, 4294901760
        %v1099 = vsub.f32 %v1097, %v1098
        %v1100 = vand.u32 %v1099, 4294901760
        %1101 = vmatpush1.msra.mxu0 %v1100
        %1102 = vmatprep.subr.mxu0 0.0
        %v1103 = vand.u32 %v273, 4294901760
        %v1104 = vsub.f32 %v273, %v1103
        %v1105 = vand.u32 %v1104, 4294901760
        %v1106 = vsub.f32 %v1104, %v1105
        %v1107 = vand.u32 %v1106, 4294901760
        %1108 = vmatpush1.msra.mxu0 %v1107
        %1109 = vmatprep.subr.mxu0 0.0
        %1110 = vmatpush1.msra.mxu0 0.0
        %1111 = vmatprep.subr.mxu0 0.0
        %1112 = vmatpush1.msra.mxu0 0.0
        %1113 = vmatprep.subr.mxu0 0.0
        %1114 = vmatpush1.msra.mxu0 0.0
        %1115 = vmatprep.subr.mxu0 0.0
        %1116 = vmatpush1.msra.mxu0 0.0
        %1117 = vmatprep.subr.mxu0 0.0
        %1118 = vmatpush1.msra.mxu0 0.0
        %1119 = vmatprep.subr.mxu0 0.0
        %1120 = vmatpush1.msra.mxu0 0.0
        %1121 = vmatprep.subr.mxu0 0.0
        %1122 = vmatpush1.msra.mxu0 0.0
        %1123 = vmatprep.subr.mxu0 0.0
        %1124 = vmatpush1.msra.mxu0 0.0
        %1125 = vmatprep.subr.mxu0 0.0
        %1126 = vmatpush1.msra.mxu0 0.0
        %1127 = vmatprep.subr.mxu0 0.0
        %1128 = vmatpush1.msra.mxu0 0.0
        %1129 = vmatprep.subr.mxu0 0.0
        %1130 = vmatpush1.msra.mxu0 0.0
        %1131 = vmatprep.subr.mxu0 0.0
        %1132 = vmatpush1.msra.mxu0 0.0
        %1133 = vmatprep.subr.mxu0 0.0
        %1134 = vmatpush1.msra.mxu0 0.0
        %1135 = vmatprep.subr.mxu0 0.0
        %1136 = vmatpush1.msra.mxu0 0.0
        %1137 = vmatprep.subr.mxu0 0.0
        %1138 = vmatpush1.msra.mxu0 0.0
        %1139 = vmatprep.subr.mxu0 0.0
        %1140 = vmatpush1.msra.mxu0 0.0
        %1141 = vmatprep.mubr.f32.mxu0 0.0
        %v1142 = vand.u32 %v194, 4294901760
        %1143 = vmatmul.mubr.f32.gmra.mrb[0].mxu0 %v1142
        %v1144 = vpop.f32.mrb[0].mxu0
        %v1145 = vadd.f32 %v364, %v1144
        %v1146 = vpop.f32.mrb[0].mxu0
        %1147 = vmatprep.mubr.f32.mxu0 0.0
        %v1148 = vand.u32 %v195, 4294901760
        %1149 = vmatmul.mubr.f32.gmra.mrb[0].mxu0 %v1148
        %v1150 = vpop.f32.mrb[0].mxu0
        %v1151 = vadd.f32 %v374, %v1150
        %v1152 = vpop.f32.mrb[0].mxu0
        %1153 = vmatprep.mubr.f32.mxu0 0.0
        %v1154 = vand.u32 %v196, 4294901760
        %1155 = vmatmul.mubr.f32.gmra.mrb[0].mxu0 %v1154
        %v1156 = vpop.f32.mrb[0].mxu0
        %v1157 = vadd.f32 %v384, %v1156
        %v1158 = vpop.f32.mrb[0].mxu0
        %1159 = vmatprep.mubr.f32.mxu0 0.0
        %v1160 = vand.u32 %v197, 4294901760
        %1161 = vmatmul.mubr.f32.gmra.mrb[0].mxu0 %v1160
        %v1162 = vpop.f32.mrb[0].mxu0
        %v1163 = vadd.f32 %v394, %v1162
        %v1164 = vpop.f32.mrb[0].mxu0
        %1165 = vmatprep.mubr.f32.mxu0 0.0
        %v1166 = vand.u32 %v198, 4294901760
        %1167 = vmatmul.mubr.f32.gmra.mrb[0].mxu0 %v1166
        %v1168 = vpop.f32.mrb[0].mxu0
        %v1169 = vadd.f32 %v404, %v1168
        %v1170 = vpop.f32.mrb[0].mxu0
        %1171 = vmatprep.mubr.f32.mxu0 0.0
        %v1172 = vand.u32 %v199, 4294901760
        %1173 = vmatmul.mubr.f32.gmra.mrb[0].mxu0 %v1172
        %v1174 = vpop.f32.mrb[0].mxu0
        %v1175 = vadd.f32 %v414, %v1174
        %v1176 = vpop.f32.mrb[0].mxu0
        %1177 = vmatprep.mubr.f32.mxu0 0.0
        %v1178 = vand.u32 %v200, 4294901760
        %1179 = vmatmul.mubr.f32.gmra.mrb[0].mxu0 %v1178
        %v1180 = vpop.f32.mrb[0].mxu0
        %v1181 = vadd.f32 %v424, %v1180
        %v1182 = vpop.f32.mrb[0].mxu0
        %1183 = vmatprep.mubr.f32.mxu0 0.0
        %v1184 = vand.u32 %v201, 4294901760
        %1185 = vmatmul.mubr.f32.gmra.mrb[0].mxu0 %v1184
        %v1186 = vpop.f32.mrb[0].mxu0
        %v1187 = vadd.f32 %v434, %v1186
        %v1188 = vpop.f32.mrb[0].mxu0
        %1189 = vmatprep.mubr.f32.mxu0 0.0
        %v1190 = vand.u32 %v202, 4294901760
        %1191 = vmatmul.mubr.f32.gmra.mrb[0].mxu0 %v1190
        %v1192 = vpop.f32.mrb[0].mxu0
        %v1193 = vadd.f32 %v444, %v1192
        %v1194 = vpop.f32.mrb[0].mxu0
        %1195 = vmatprep.mubr.f32.mxu0 0.0
        %v1196 = vand.u32 %v203, 4294901760
        %1197 = vmatmul.mubr.f32.gmra.mrb[0].mxu0 %v1196
        %v1198 = vpop.f32.mrb[0].mxu0
        %v1199 = vadd.f32 %v454, %v1198
        %v1200 = vpop.f32.mrb[0].mxu0
        %1201 = vmatprep.mubr.f32.mxu0 0.0
        %v1202 = vand.u32 %v204, 4294901760
        %1203 = vmatmul.mubr.f32.gmra.mrb[0].mxu0 %v1202
        %v1204 = vpop.f32.mrb[0].mxu0
        %v1205 = vadd.f32 %v464, %v1204
        %v1206 = vpop.f32.mrb[0].mxu0
        %1207 = vmatprep.mubr.f32.mxu0 0.0
        %v1208 = vand.u32 %v205, 4294901760
        %1209 = vmatmul.mubr.f32.gmra.mrb[0].mxu0 %v1208
        %v1210 = vpop.f32.mrb[0].mxu0
        %v1211 = vadd.f32 %v474, %v1210
        %v1212 = vpop.f32.mrb[0].mxu0
        %1213 = vmatprep.mubr.f32.mxu0 0.0
        %v1214 = vand.u32 %v206, 4294901760
        %1215 = vmatmul.mubr.f32.gmra.mrb[0].mxu0 %v1214
        %v1216 = vpop.f32.mrb[0].mxu0
        %v1217 = vadd.f32 %v484, %v1216
        %v1218 = vpop.f32.mrb[0].mxu0
        %1219 = vmatprep.mubr.f32.mxu0 0.0
        %v1220 = vand.u32 %v207, 4294901760
        %1221 = vmatmul.mubr.f32.gmra.mrb[0].mxu0 %v1220
        %v1222 = vpop.f32.mrb[0].mxu0
        %v1223 = vadd.f32 %v494, %v1222
        %v1224 = vpop.f32.mrb[0].mxu0
        %1225 = vmatprep.mubr.f32.mxu0 0.0
        %v1226 = vand.u32 %v208, 4294901760
        %1227 = vmatmul.mubr.f32.gmra.mrb[0].mxu0 %v1226
        %v1228 = vpop.f32.mrb[0].mxu0
        %v1229 = vadd.f32 %v504, %v1228
        %v1230 = vpop.f32.mrb[0].mxu0
        %1231 = vmatprep.mubr.f32.mxu0 0.0
        %v1232 = vand.u32 %v209, 4294901760
        %1233 = vmatmul.mubr.f32.gmra.mrb[0].mxu0 %v1232
        %v1234 = vpop.f32.mrb[0].mxu0
        %v1235 = vadd.f32 %v514, %v1234
        %v1236 = vpop.f32.mrb[0].mxu0
        %1237 = vmatprep.mubr.f32.mxu0 0.0
        %v1238 = vand.u32 %v210, 4294901760
        %1239 = vmatmul.mubr.f32.gmra.mrb[0].mxu0 %v1238
        %v1240 = vpop.f32.mrb[0].mxu0
        %v1241 = vadd.f32 %v524, %v1240
        %v1242 = vpop.f32.mrb[0].mxu0
        %1243 = vmatprep.mubr.f32.mxu0 0.0
        %v1244 = vand.u32 %v211, 4294901760
        %1245 = vmatmul.mubr.f32.gmra.mrb[0].mxu0 %v1244
        %v1246 = vpop.f32.mrb[0].mxu0
        %v1247 = vadd.f32 %v534, %v1246
        %v1248 = vpop.f32.mrb[0].mxu0
        %1249 = vmatprep.mubr.f32.mxu0 0.0
        %v1250 = vand.u32 %v212, 4294901760
        %1251 = vmatmul.mubr.f32.gmra.mrb[0].mxu0 %v1250
        %v1252 = vpop.f32.mrb[0].mxu0
        %v1253 = vadd.f32 %v544, %v1252
        %v1254 = vpop.f32.mrb[0].mxu0
        %1255 = vmatprep.mubr.f32.mxu0 0.0
        %v1256 = vand.u32 %v213, 4294901760
        %1257 = vmatmul.mubr.f32.gmra.mrb[0].mxu0 %v1256
        %v1258 = vpop.f32.mrb[0].mxu0
        %v1259 = vadd.f32 %v554, %v1258
        %v1260 = vpop.f32.mrb[0].mxu0
        %1261 = vmatprep.mubr.f32.mxu0 0.0
        %v1262 = vand.u32 %v214, 4294901760
        %1263 = vmatmul.mubr.f32.gmra.mrb[0].mxu0 %v1262
        %v1264 = vpop.f32.mrb[0].mxu0
        %v1265 = vadd.f32 %v564, %v1264
        %v1266 = vpop.f32.mrb[0].mxu0
        %1267 = vmatprep.mubr.f32.mxu0 0.0
        %v1268 = vand.u32 %v215, 4294901760
        %1269 = vmatmul.mubr.f32.gmra.mrb[0].mxu0 %v1268
        %v1270 = vpop.f32.mrb[0].mxu0
        %v1271 = vadd.f32 %v574, %v1270
        %v1272 = vpop.f32.mrb[0].mxu0
        %1273 = vmatprep.mubr.f32.mxu0 0.0
        %v1274 = vand.u32 %v216, 4294901760
        %1275 = vmatmul.mubr.f32.gmra.mrb[0].mxu0 %v1274
        %v1276 = vpop.f32.mrb[0].mxu0
        %v1277 = vadd.f32 %v584, %v1276
        %v1278 = vpop.f32.mrb[0].mxu0
        %1279 = vmatprep.mubr.f32.mxu0 0.0
        %v1280 = vand.u32 %v217, 4294901760
        %1281 = vmatmul.mubr.f32.gmra.mrb[0].mxu0 %v1280
        %v1282 = vpop.f32.mrb[0].mxu0
        %v1283 = vadd.f32 %v594, %v1282
        %v1284 = vpop.f32.mrb[0].mxu0
        %1285 = vmatprep.mubr.f32.mxu0 0.0
        %v1286 = vand.u32 %v218, 4294901760
        %1287 = vmatmul.mubr.f32.gmra.mrb[0].mxu0 %v1286
        %v1288 = vpop.f32.mrb[0].mxu0
        %v1289 = vadd.f32 %v604, %v1288
        %v1290 = vpop.f32.mrb[0].mxu0
        %1291 = vmatprep.mubr.f32.mxu0 0.0
        %v1292 = vand.u32 %v219, 4294901760
        %1293 = vmatmul.mubr.f32.gmra.mrb[0].mxu0 %v1292
        %v1294 = vpop.f32.mrb[0].mxu0
        %v1295 = vadd.f32 %v614, %v1294
        %v1296 = vpop.f32.mrb[0].mxu0
        %1297 = vmatprep.mubr.f32.mxu0 0.0
        %v1298 = vand.u32 %v220, 4294901760
        %1299 = vmatmul.mubr.f32.gmra.mrb[0].mxu0 %v1298
        %v1300 = vpop.f32.mrb[0].mxu0
        %v1301 = vadd.f32 %v624, %v1300
        %v1302 = vpop.f32.mrb[0].mxu0
        %1303 = vmatprep.mubr.f32.mxu0 0.0
        %v1304 = vand.u32 %v221, 4294901760
        %1305 = vmatmul.mubr.f32.gmra.mrb[0].mxu0 %v1304
        %v1306 = vpop.f32.mrb[0].mxu0
        %v1307 = vadd.f32 %v634, %v1306
        %v1308 = vpop.f32.mrb[0].mxu0
        %1309 = vmatprep.mubr.f32.mxu0 0.0
        %v1310 = vand.u32 %v222, 4294901760
        %1311 = vmatmul.mubr.f32.gmra.mrb[0].mxu0 %v1310
        %v1312 = vpop.f32.mrb[0].mxu0
        %v1313 = vadd.f32 %v644, %v1312
        %v1314 = vpop.f32.mrb[0].mxu0
        %1315 = vmatprep.mubr.f32.mxu0 0.0
        %v1316 = vand.u32 %v223, 4294901760
        %1317 = vmatmul.mubr.f32.gmra.mrb[0].mxu0 %v1316
        %v1318 = vpop.f32.mrb[0].mxu0
        %v1319 = vadd.f32 %v654, %v1318
        %v1320 = vpop.f32.mrb[0].mxu0
        %1321 = vmatprep.mubr.f32.mxu0 0.0
        %v1322 = vand.u32 %v224, 4294901760
        %1323 = vmatmul.mubr.f32.gmra.mrb[0].mxu0 %v1322
        %v1324 = vpop.f32.mrb[0].mxu0
        %v1325 = vadd.f32 %v664, %v1324
        %v1326 = vpop.f32.mrb[0].mxu0
        %1327 = vmatprep.mubr.f32.mxu0 0.0
        %v1328 = vand.u32 %v225, 4294901760
        %1329 = vmatmul.mubr.f32.gmra.mrb[0].mxu0 %v1328
        %v1330 = vpop.f32.mrb[0].mxu0
        %v1331 = vadd.f32 %v674, %v1330
        %v1332 = vpop.f32.mrb[0].mxu0
        %1333 = vmatprep.mubr.f32.mxu0 0.0
        %v1334 = vand.u32 %v226, 4294901760
        %1335 = vmatmul.mubr.f32.gmra.mrb[0].mxu0 %v1334
        %v1336 = vpop.f32.mrb[0].mxu0
        %v1337 = vadd.f32 %v684, %v1336
        %v1338 = vpop.f32.mrb[0].mxu0
        %1339 = vmatprep.mubr.f32.mxu0 0.0
        %v1340 = vand.u32 %v227, 4294901760
        %1341 = vmatmul.mubr.f32.gmra.mrb[0].mxu0 %v1340
        %v1342 = vpop.f32.mrb[0].mxu0
        %v1343 = vadd.f32 %v694, %v1342
        %v1344 = vpop.f32.mrb[0].mxu0
        %1345 = vmatprep.mubr.f32.mxu0 0.0
        %v1346 = vand.u32 %v228, 4294901760
        %1347 = vmatmul.mubr.f32.gmra.mrb[0].mxu0 %v1346
        %v1348 = vpop.f32.mrb[0].mxu0
        %v1349 = vadd.f32 %v704, %v1348
        %v1350 = vpop.f32.mrb[0].mxu0
        %1351 = vmatprep.mubr.f32.mxu0 0.0
        %v1352 = vand.u32 %v229, 4294901760
        %1353 = vmatmul.mubr.f32.gmra.mrb[0].mxu0 %v1352
        %v1354 = vpop.f32.mrb[0].mxu0
        %v1355 = vadd.f32 %v714, %v1354
        %v1356 = vpop.f32.mrb[0].mxu0
        %1357 = vmatprep.mubr.f32.mxu0 0.0
        %v1358 = vand.u32 %v230, 4294901760
        %1359 = vmatmul.mubr.f32.gmra.mrb[0].mxu0 %v1358
        %v1360 = vpop.f32.mrb[0].mxu0
        %v1361 = vadd.f32 %v724, %v1360
        %v1362 = vpop.f32.mrb[0].mxu0
        %1363 = vmatprep.mubr.f32.mxu0 0.0
        %v1364 = vand.u32 %v231, 4294901760
        %1365 = vmatmul.mubr.f32.gmra.mrb[0].mxu0 %v1364
        %v1366 = vpop.f32.mrb[0].mxu0
        %v1367 = vadd.f32 %v734, %v1366
        %v1368 = vpop.f32.mrb[0].mxu0
        %1369 = vmatprep.mubr.f32.mxu0 0.0
        %v1370 = vand.u32 %v232, 4294901760
        %1371 = vmatmul.mubr.f32.gmra.mrb[0].mxu0 %v1370
        %v1372 = vpop.f32.mrb[0].mxu0
        %v1373 = vadd.f32 %v744, %v1372
        %v1374 = vpop.f32.mrb[0].mxu0
        %1375 = vmatprep.mubr.f32.mxu0 0.0
        %v1376 = vand.u32 %v233, 4294901760
        %1377 = vmatmul.mubr.f32.gmra.mrb[0].mxu0 %v1376
        %v1378 = vpop.f32.mrb[0].mxu0
        %v1379 = vadd.f32 %v754, %v1378
        %v1380 = vpop.f32.mrb[0].mxu0
        %1381 = vmatprep.mubr.f32.mxu0 0.0
        %v1382 = vand.u32 %v234, 4294901760
        %1383 = vmatmul.mubr.f32.gmra.mrb[0].mxu0 %v1382
        %v1384 = vpop.f32.mrb[0].mxu0
        %v1385 = vadd.f32 %v764, %v1384
        %v1386 = vpop.f32.mrb[0].mxu0
        %1387 = vmatprep.mubr.f32.mxu0 0.0
        %v1388 = vand.u32 %v235, 4294901760
        %1389 = vmatmul.mubr.f32.gmra.mrb[0].mxu0 %v1388
        %v1390 = vpop.f32.mrb[0].mxu0
        %v1391 = vadd.f32 %v774, %v1390
        %v1392 = vpop.f32.mrb[0].mxu0
        %1393 = vmatprep.mubr.f32.mxu0 0.0
        %v1394 = vand.u32 %v236, 4294901760
        %1395 = vmatmul.mubr.f32.gmra.mrb[0].mxu0 %v1394
        %v1396 = vpop.f32.mrb[0].mxu0
        %v1397 = vadd.f32 %v784, %v1396
        %v1398 = vpop.f32.mrb[0].mxu0
        %1399 = vmatprep.mubr.f32.mxu0 0.0
        %v1400 = vand.u32 %v237, 4294901760
        %1401 = vmatmul.mubr.f32.gmra.mrb[0].mxu0 %v1400
        %v1402 = vpop.f32.mrb[0].mxu0
        %v1403 = vadd.f32 %v794, %v1402
        %v1404 = vpop.f32.mrb[0].mxu0
        %1405 = vmatprep.mubr.f32.mxu0 0.0
        %v1406 = vand.u32 %v238, 4294901760
        %1407 = vmatmul.mubr.f32.gmra.mrb[0].mxu0 %v1406
        %v1408 = vpop.f32.mrb[0].mxu0
        %v1409 = vadd.f32 %v804, %v1408
        %v1410 = vpop.f32.mrb[0].mxu0
        %1411 = vmatprep.mubr.f32.mxu0 0.0
        %v1412 = vand.u32 %v239, 4294901760
        %1413 = vmatmul.mubr.f32.gmra.mrb[0].mxu0 %v1412
        %v1414 = vpop.f32.mrb[0].mxu0
        %v1415 = vadd.f32 %v814, %v1414
        %v1416 = vpop.f32.mrb[0].mxu0
        %1417 = vmatprep.mubr.f32.mxu0 0.0
        %v1418 = vand.u32 %v240, 4294901760
        %1419 = vmatmul.mubr.f32.gmra.mrb[0].mxu0 %v1418
        %v1420 = vpop.f32.mrb[0].mxu0
        %v1421 = vadd.f32 %v824, %v1420
        %v1422 = vpop.f32.mrb[0].mxu0
        %1423 = vmatprep.mubr.f32.mxu0 0.0
        %v1424 = vand.u32 %v241, 4294901760
        %1425 = vmatmul.mubr.f32.gmra.mrb[0].mxu0 %v1424
        %v1426 = vpop.f32.mrb[0].mxu0
        %v1427 = vadd.f32 %v834, %v1426
        %v1428 = vpop.f32.mrb[0].mxu0
        %1429 = vmatprep.mubr.f32.mxu0 0.0
        %v1430 = vand.u32 %v242, 4294901760
        %1431 = vmatmul.mubr.f32.gmra.mrb[0].mxu0 %v1430
        %v1432 = vpop.f32.mrb[0].mxu0
        %v1433 = vadd.f32 %v844, %v1432
        %v1434 = vpop.f32.mrb[0].mxu0
        %1435 = vmatprep.mubr.f32.mxu0 0.0
        %v1436 = vand.u32 %v243, 4294901760
        %1437 = vmatmul.mubr.f32.gmra.mrb[0].mxu0 %v1436
        %v1438 = vpop.f32.mrb[0].mxu0
        %v1439 = vadd.f32 %v854, %v1438
        %v1440 = vpop.f32.mrb[0].mxu0
        %1441 = vmatprep.mubr.f32.mxu0 0.0
        %v1442 = vand.u32 %v244, 4294901760
        %1443 = vmatmul.mubr.f32.gmra.mrb[0].mxu0 %v1442
        %v1444 = vpop.f32.mrb[0].mxu0
        %v1445 = vadd.f32 %v864, %v1444
        %v1446 = vpop.f32.mrb[0].mxu0
        %1447 = vmatprep.mubr.f32.mxu0 0.0
        %v1448 = vand.u32 %v245, 4294901760
        %1449 = vmatmul.mubr.f32.gmra.mrb[0].mxu0 %v1448
        %v1450 = vpop.f32.mrb[0].mxu0
        %v1451 = vadd.f32 %v874, %v1450
        %v1452 = vpop.f32.mrb[0].mxu0
        %1453 = vmatprep.mubr.f32.mxu0 0.0
        %v1454 = vand.u32 %v246, 4294901760
        %1455 = vmatmul.mubr.f32.gmra.mrb[0].mxu0 %v1454
        %v1456 = vpop.f32.mrb[0].mxu0
        %v1457 = vadd.f32 %v884, %v1456
        %v1458 = vpop.f32.mrb[0].mxu0
        %1459 = vmatprep.mubr.f32.mxu0 0.0
        %v1460 = vand.u32 %v247, 4294901760
        %1461 = vmatmul.mubr.f32.gmra.mrb[0].mxu0 %v1460
        %v1462 = vpop.f32.mrb[0].mxu0
        %v1463 = vadd.f32 %v894, %v1462
        %v1464 = vpop.f32.mrb[0].mxu0
        %1465 = vmatprep.mubr.f32.mxu0 0.0
        %v1466 = vand.u32 %v248, 4294901760
        %1467 = vmatmul.mubr.f32.gmra.mrb[0].mxu0 %v1466
        %v1468 = vpop.f32.mrb[0].mxu0
        %v1469 = vadd.f32 %v904, %v1468
        %v1470 = vpop.f32.mrb[0].mxu0
        %1471 = vmatprep.mubr.f32.mxu0 0.0
        %v1472 = vand.u32 %v249, 4294901760
        %1473 = vmatmul.mubr.f32.gmra.mrb[0].mxu0 %v1472
        %v1474 = vpop.f32.mrb[0].mxu0
        %v1475 = vadd.f32 %v914, %v1474
        %v1476 = vpop.f32.mrb[0].mxu0
        %1477 = vmatprep.mubr.f32.mxu0 0.0
        %v1478 = vand.u32 %v250, 4294901760
        %1479 = vmatmul.mubr.f32.gmra.mrb[0].mxu0 %v1478
        %v1480 = vpop.f32.mrb[0].mxu0
        %v1481 = vadd.f32 %v924, %v1480
        %v1482 = vpop.f32.mrb[0].mxu0
        %1483 = vmatprep.mubr.f32.mxu0 0.0
        %v1484 = vand.u32 %v251, 4294901760
        %1485 = vmatmul.mubr.f32.gmra.mrb[0].mxu0 %v1484
        %v1486 = vpop.f32.mrb[0].mxu0
        %v1487 = vadd.f32 %v934, %v1486
        %v1488 = vpop.f32.mrb[0].mxu0
        %1489 = vmatprep.mubr.f32.mxu0 0.0
        %v1490 = vand.u32 %v252, 4294901760
        %1491 = vmatmul.mubr.f32.gmra.mrb[0].mxu0 %v1490
        %v1492 = vpop.f32.mrb[0].mxu0
        %v1493 = vadd.f32 %v944, %v1492
        %v1494 = vpop.f32.mrb[0].mxu0
        %1495 = vmatprep.mubr.f32.mxu0 0.0
        %v1496 = vand.u32 %v253, 4294901760
        %1497 = vmatmul.mubr.f32.gmra.mrb[0].mxu0 %v1496
        %v1498 = vpop.f32.mrb[0].mxu0
        %v1499 = vadd.f32 %v954, %v1498
        %v1500 = vpop.f32.mrb[0].mxu0
        %1501 = vmatprep.mubr.f32.mxu0 0.0
        %v1502 = vand.u32 %v254, 4294901760
        %1503 = vmatmul.mubr.f32.gmra.mrb[0].mxu0 %v1502
        %v1504 = vpop.f32.mrb[0].mxu0
        %v1505 = vadd.f32 %v964, %v1504
        %v1506 = vpop.f32.mrb[0].mxu0
        %1507 = vmatprep.mubr.f32.mxu0 0.0
        %v1508 = vand.u32 %v255, 4294901760
        %1509 = vmatmul.mubr.f32.gmra.mrb[0].mxu0 %v1508
        %v1510 = vpop.f32.mrb[0].mxu0
        %v1511 = vadd.f32 %v974, %v1510
        %v1512 = vpop.f32.mrb[0].mxu0
        %1513 = vmatprep.mubr.f32.mxu0 0.0
        %v1514 = vand.u32 %v256, 4294901760
        %1515 = vmatmul.mubr.f32.gmra.mrb[0].mxu0 %v1514
        %v1516 = vpop.f32.mrb[0].mxu0
        %v1517 = vadd.f32 %v984, %v1516
        %v1518 = vpop.f32.mrb[0].mxu0
        %1519 = vmatprep.mubr.f32.mxu0 0.0
        %v1520 = vand.u32 %v257, 4294901760
        %1521 = vmatmul.mubr.f32.gmra.mrb[0].mxu0 %v1520
        %v1522 = vpop.f32.mrb[0].mxu0
        %v1523 = vadd.f32 %v994, %v1522
        %v1524 = vpop.f32.mrb[0].mxu0
        %1525 = vdwg.mxu0
        %1526 = vmatprep.subr.mxu0 0.0
        %v1527 = vand.u32 %v258, 4294901760
        %v1528 = vsub.f32 %v258, %v1527
        %1529 = vmatpush1.msra.mxu0 %v1528
        %1530 = vmatprep.subr.mxu0 0.0
        %v1531 = vand.u32 %v259, 4294901760
        %v1532 = vsub.f32 %v259, %v1531
        %1533 = vmatpush1.msra.mxu0 %v1532
        %1534 = vmatprep.subr.mxu0 0.0
        %v1535 = vand.u32 %v260, 4294901760
        %v1536 = vsub.f32 %v260, %v1535
        %1537 = vmatpush1.msra.mxu0 %v1536
        %1538 = vmatprep.subr.mxu0 0.0
        %v1539 = vand.u32 %v261, 4294901760
        %v1540 = vsub.f32 %v261, %v1539
        %1541 = vmatpush1.msra.mxu0 %v1540
        %1542 = vmatprep.subr.mxu0 0.0
        %v1543 = vand.u32 %v262, 4294901760
        %v1544 = vsub.f32 %v262, %v1543
        %1545 = vmatpush1.msra.mxu0 %v1544
        %1546 = vmatprep.subr.mxu0 0.0
        %v1547 = vand.u32 %v263, 4294901760
        %v1548 = vsub.f32 %v263, %v1547
        %1549 = vmatpush1.msra.mxu0 %v1548
        %1550 = vmatprep.subr.mxu0 0.0
        %v1551 = vand.u32 %v264, 4294901760
        %v1552 = vsub.f32 %v264, %v1551
        %1553 = vmatpush1.msra.mxu0 %v1552
        %1554 = vmatprep.subr.mxu0 0.0
        %v1555 = vand.u32 %v265, 4294901760
        %v1556 = vsub.f32 %v265, %v1555
        %1557 = vmatpush1.msra.mxu0 %v1556
        %1558 = vmatprep.subr.mxu0 0.0
        %v1559 = vand.u32 %v266, 4294901760
        %v1560 = vsub.f32 %v266, %v1559
        %1561 = vmatpush1.msra.mxu0 %v1560
        %1562 = vmatprep.subr.mxu0 0.0
        %v1563 = vand.u32 %v267, 4294901760
        %v1564 = vsub.f32 %v267, %v1563
        %1565 = vmatpush1.msra.mxu0 %v1564
        %1566 = vmatprep.subr.mxu0 0.0
        %v1567 = vand.u32 %v268, 4294901760
        %v1568 = vsub.f32 %v268, %v1567
        %1569 = vmatpush1.msra.mxu0 %v1568
        %1570 = vmatprep.subr.mxu0 0.0
        %v1571 = vand.u32 %v269, 4294901760
        %v1572 = vsub.f32 %v269, %v1571
        %1573 = vmatpush1.msra.mxu0 %v1572
        %1574 = vmatprep.subr.mxu0 0.0
        %v1575 = vand.u32 %v270, 4294901760
        %v1576 = vsub.f32 %v270, %v1575
        %1577 = vmatpush1.msra.mxu0 %v1576
        %1578 = vmatprep.subr.mxu0 0.0
        %v1579 = vand.u32 %v271, 4294901760
        %v1580 = vsub.f32 %v271, %v1579
        %1581 = vmatpush1.msra.mxu0 %v1580
        %1582 = vmatprep.subr.mxu0 0.0
        %v1583 = vand.u32 %v272, 4294901760
        %v1584 = vsub.f32 %v272, %v1583
        %1585 = vmatpush1.msra.mxu0 %v1584
        %1586 = vmatprep.subr.mxu0 0.0
        %v1587 = vand.u32 %v273, 4294901760
        %v1588 = vsub.f32 %v273, %v1587
        %1589 = vmatpush1.msra.mxu0 %v1588
        %1590 = vmatprep.subr.mxu0 0.0
        %1591 = vmatpush1.msra.mxu0 0.0
        %1592 = vmatprep.subr.mxu0 0.0
        %1593 = vmatpush1.msra.mxu0 0.0
        %1594 = vmatprep.subr.mxu0 0.0
        %1595 = vmatpush1.msra.mxu0 0.0
        %1596 = vmatprep.subr.mxu0 0.0
        %1597 = vmatpush1.msra.mxu0 0.0
        %1598 = vmatprep.subr.mxu0 0.0
        %1599 = vmatpush1.msra.mxu0 0.0
        %1600 = vmatprep.subr.mxu0 0.0
        %1601 = vmatpush1.msra.mxu0 0.0
        %1602 = vmatprep.subr.mxu0 0.0
        %1603 = vmatpush1.msra.mxu0 0.0
        %1604 = vmatprep.subr.mxu0 0.0
        %1605 = vmatpush1.msra.mxu0 0.0
        %1606 = vmatprep.subr.mxu0 0.0
        %1607 = vmatpush1.msra.mxu0 0.0
        %1608 = vmatprep.subr.mxu0 0.0
        %1609 = vmatpush1.msra.mxu0 0.0
        %1610 = vmatprep.subr.mxu0 0.0
        %1611 = vmatpush1.msra.mxu0 0.0
        %1612 = vmatprep.subr.mxu0 0.0
        %1613 = vmatpush1.msra.mxu0 0.0
        %1614 = vmatprep.subr.mxu0 0.0
        %1615 = vmatpush1.msra.mxu0 0.0
        %1616 = vmatprep.subr.mxu0 0.0
        %1617 = vmatpush1.msra.mxu0 0.0
        %1618 = vmatprep.subr.mxu0 0.0
        %1619 = vmatpush1.msra.mxu0 0.0
        %1620 = vmatprep.subr.mxu0 0.0
        %1621 = vmatpush1.msra.mxu0 0.0
        %1622 = vmatprep.mubr.f32.mxu0 0.0
        %v1623 = vand.u32 %v194, 4294901760
        %v1624 = vsub.f32 %v194, %v1623
        %1625 = vmatmul.mubr.f32.gmra.mrb[0].mxu0 %v1624
        %v1626 = vpop.f32.mrb[0].mxu0
        %v1627 = vadd.f32 %v1145, %v1626
        %v1628 = vpop.f32.mrb[0].mxu0
        %1629 = vmatprep.mubr.f32.mxu0 0.0
        %v1630 = vand.u32 %v195, 4294901760
        %v1631 = vsub.f32 %v195, %v1630
        %1632 = vmatmul.mubr.f32.gmra.mrb[0].mxu0 %v1631
        %v1633 = vpop.f32.mrb[0].mxu0
        %v1634 = vadd.f32 %v1151, %v1633
        %v1635 = vpop.f32.mrb[0].mxu0
        %1636 = vmatprep.mubr.f32.mxu0 0.0
        %v1637 = vand.u32 %v196, 4294901760
        %v1638 = vsub.f32 %v196, %v1637
        %1639 = vmatmul.mubr.f32.gmra.mrb[0].mxu0 %v1638
        %v1640 = vpop.f32.mrb[0].mxu0
        %v1641 = vadd.f32 %v1157, %v1640
        %v1642 = vpop.f32.mrb[0].mxu0
        %1643 = vmatprep.mubr.f32.mxu0 0.0
        %v1644 = vand.u32 %v197, 4294901760
        %v1645 = vsub.f32 %v197, %v1644
        %1646 = vmatmul.mubr.f32.gmra.mrb[0].mxu0 %v1645
        %v1647 = vpop.f32.mrb[0].mxu0
        %v1648 = vadd.f32 %v1163, %v1647
        %v1649 = vpop.f32.mrb[0].mxu0
        %1650 = vmatprep.mubr.f32.mxu0 0.0
        %v1651 = vand.u32 %v198, 4294901760
        %v1652 = vsub.f32 %v198, %v1651
        %1653 = vmatmul.mubr.f32.gmra.mrb[0].mxu0 %v1652
        %v1654 = vpop.f32.mrb[0].mxu0
        %v1655 = vadd.f32 %v1169, %v1654
        %v1656 = vpop.f32.mrb[0].mxu0
        %1657 = vmatprep.mubr.f32.mxu0 0.0
        %v1658 = vand.u32 %v199, 4294901760
        %v1659 = vsub.f32 %v199, %v1658
        %1660 = vmatmul.mubr.f32.gmra.mrb[0].mxu0 %v1659
        %v1661 = vpop.f32.mrb[0].mxu0
        %v1662 = vadd.f32 %v1175, %v1661
        %v1663 = vpop.f32.mrb[0].mxu0
        %1664 = vmatprep.mubr.f32.mxu0 0.0
        %v1665 = vand.u32 %v200, 4294901760
        %v1666 = vsub.f32 %v200, %v1665
        %1667 = vmatmul.mubr.f32.gmra.mrb[0].mxu0 %v1666
        %v1668 = vpop.f32.mrb[0].mxu0
        %v1669 = vadd.f32 %v1181, %v1668
        %v1670 = vpop.f32.mrb[0].mxu0
        %1671 = vmatprep.mubr.f32.mxu0 0.0
        %v1672 = vand.u32 %v201, 4294901760
        %v1673 = vsub.f32 %v201, %v1672
        %1674 = vmatmul.mubr.f32.gmra.mrb[0].mxu0 %v1673
        %v1675 = vpop.f32.mrb[0].mxu0
        %v1676 = vadd.f32 %v1187, %v1675
        %v1677 = vpop.f32.mrb[0].mxu0
        %1678 = vmatprep.mubr.f32.mxu0 0.0
        %v1679 = vand.u32 %v202, 4294901760
        %v1680 = vsub.f32 %v202, %v1679
        %1681 = vmatmul.mubr.f32.gmra.mrb[0].mxu0 %v1680
        %v1682 = vpop.f32.mrb[0].mxu0
        %v1683 = vadd.f32 %v1193, %v1682
        %v1684 = vpop.f32.mrb[0].mxu0
        %1685 = vmatprep.mubr.f32.mxu0 0.0
        %v1686 = vand.u32 %v203, 4294901760
        %v1687 = vsub.f32 %v203, %v1686
        %1688 = vmatmul.mubr.f32.gmra.mrb[0].mxu0 %v1687
        %v1689 = vpop.f32.mrb[0].mxu0
        %v1690 = vadd.f32 %v1199, %v1689
        %v1691 = vpop.f32.mrb[0].mxu0
        %1692 = vmatprep.mubr.f32.mxu0 0.0
        %v1693 = vand.u32 %v204, 4294901760
        %v1694 = vsub.f32 %v204, %v1693
        %1695 = vmatmul.mubr.f32.gmra.mrb[0].mxu0 %v1694
        %v1696 = vpop.f32.mrb[0].mxu0
        %v1697 = vadd.f32 %v1205, %v1696
        %v1698 = vpop.f32.mrb[0].mxu0
        %1699 = vmatprep.mubr.f32.mxu0 0.0
        %v1700 = vand.u32 %v205, 4294901760
        %v1701 = vsub.f32 %v205, %v1700
        %1702 = vmatmul.mubr.f32.gmra.mrb[0].mxu0 %v1701
        %v1703 = vpop.f32.mrb[0].mxu0
        %v1704 = vadd.f32 %v1211, %v1703
        %v1705 = vpop.f32.mrb[0].mxu0
        %1706 = vmatprep.mubr.f32.mxu0 0.0
        %v1707 = vand.u32 %v206, 4294901760
        %v1708 = vsub.f32 %v206, %v1707
        %1709 = vmatmul.mubr.f32.gmra.mrb[0].mxu0 %v1708
        %v1710 = vpop.f32.mrb[0].mxu0
        %v1711 = vadd.f32 %v1217, %v1710
        %v1712 = vpop.f32.mrb[0].mxu0
        %1713 = vmatprep.mubr.f32.mxu0 0.0
        %v1714 = vand.u32 %v207, 4294901760
        %v1715 = vsub.f32 %v207, %v1714
        %1716 = vmatmul.mubr.f32.gmra.mrb[0].mxu0 %v1715
        %v1717 = vpop.f32.mrb[0].mxu0
        %v1718 = vadd.f32 %v1223, %v1717
        %v1719 = vpop.f32.mrb[0].mxu0
        %1720 = vmatprep.mubr.f32.mxu0 0.0
        %v1721 = vand.u32 %v208, 4294901760
        %v1722 = vsub.f32 %v208, %v1721
        %1723 = vmatmul.mubr.f32.gmra.mrb[0].mxu0 %v1722
        %v1724 = vpop.f32.mrb[0].mxu0
        %v1725 = vadd.f32 %v1229, %v1724
        %v1726 = vpop.f32.mrb[0].mxu0
        %1727 = vmatprep.mubr.f32.mxu0 0.0
        %v1728 = vand.u32 %v209, 4294901760
        %v1729 = vsub.f32 %v209, %v1728
        %1730 = vmatmul.mubr.f32.gmra.mrb[0].mxu0 %v1729
        %v1731 = vpop.f32.mrb[0].mxu0
        %v1732 = vadd.f32 %v1235, %v1731
        %v1733 = vpop.f32.mrb[0].mxu0
        %1734 = vmatprep.mubr.f32.mxu0 0.0
        %v1735 = vand.u32 %v210, 4294901760
        %v1736 = vsub.f32 %v210, %v1735
        %1737 = vmatmul.mubr.f32.gmra.mrb[0].mxu0 %v1736
        %v1738 = vpop.f32.mrb[0].mxu0
        %v1739 = vadd.f32 %v1241, %v1738
        %v1740 = vpop.f32.mrb[0].mxu0
        %1741 = vmatprep.mubr.f32.mxu0 0.0
        %v1742 = vand.u32 %v211, 4294901760
        %v1743 = vsub.f32 %v211, %v1742
        %1744 = vmatmul.mubr.f32.gmra.mrb[0].mxu0 %v1743
        %v1745 = vpop.f32.mrb[0].mxu0
        %v1746 = vadd.f32 %v1247, %v1745
        %v1747 = vpop.f32.mrb[0].mxu0
        %1748 = vmatprep.mubr.f32.mxu0 0.0
        %v1749 = vand.u32 %v212, 4294901760
        %v1750 = vsub.f32 %v212, %v1749
        %1751 = vmatmul.mubr.f32.gmra.mrb[0].mxu0 %v1750
        %v1752 = vpop.f32.mrb[0].mxu0
        %v1753 = vadd.f32 %v1253, %v1752
        %v1754 = vpop.f32.mrb[0].mxu0
        %1755 = vmatprep.mubr.f32.mxu0 0.0
        %v1756 = vand.u32 %v213, 4294901760
        %v1757 = vsub.f32 %v213, %v1756
        %1758 = vmatmul.mubr.f32.gmra.mrb[0].mxu0 %v1757
        %v1759 = vpop.f32.mrb[0].mxu0
        %v1760 = vadd.f32 %v1259, %v1759
        %v1761 = vpop.f32.mrb[0].mxu0
        %1762 = vmatprep.mubr.f32.mxu0 0.0
        %v1763 = vand.u32 %v214, 4294901760
        %v1764 = vsub.f32 %v214, %v1763
        %1765 = vmatmul.mubr.f32.gmra.mrb[0].mxu0 %v1764
        %v1766 = vpop.f32.mrb[0].mxu0
        %v1767 = vadd.f32 %v1265, %v1766
        %v1768 = vpop.f32.mrb[0].mxu0
        %1769 = vmatprep.mubr.f32.mxu0 0.0
        %v1770 = vand.u32 %v215, 4294901760
        %v1771 = vsub.f32 %v215, %v1770
        %1772 = vmatmul.mubr.f32.gmra.mrb[0].mxu0 %v1771
        %v1773 = vpop.f32.mrb[0].mxu0
        %v1774 = vadd.f32 %v1271, %v1773
        %v1775 = vpop.f32.mrb[0].mxu0
        %1776 = vmatprep.mubr.f32.mxu0 0.0
        %v1777 = vand.u32 %v216, 4294901760
        %v1778 = vsub.f32 %v216, %v1777
        %1779 = vmatmul.mubr.f32.gmra.mrb[0].mxu0 %v1778
        %v1780 = vpop.f32.mrb[0].mxu0
        %v1781 = vadd.f32 %v1277, %v1780
        %v1782 = vpop.f32.mrb[0].mxu0
        %1783 = vmatprep.mubr.f32.mxu0 0.0
        %v1784 = vand.u32 %v217, 4294901760
        %v1785 = vsub.f32 %v217, %v1784
        %1786 = vmatmul.mubr.f32.gmra.mrb[0].mxu0 %v1785
        %v1787 = vpop.f32.mrb[0].mxu0
        %v1788 = vadd.f32 %v1283, %v1787
        %v1789 = vpop.f32.mrb[0].mxu0
        %1790 = vmatprep.mubr.f32.mxu0 0.0
        %v1791 = vand.u32 %v218, 4294901760
        %v1792 = vsub.f32 %v218, %v1791
        %1793 = vmatmul.mubr.f32.gmra.mrb[0].mxu0 %v1792
        %v1794 = vpop.f32.mrb[0].mxu0
        %v1795 = vadd.f32 %v1289, %v1794
        %v1796 = vpop.f32.mrb[0].mxu0
        %1797 = vmatprep.mubr.f32.mxu0 0.0
        %v1798 = vand.u32 %v219, 4294901760
        %v1799 = vsub.f32 %v219, %v1798
        %1800 = vmatmul.mubr.f32.gmra.mrb[0].mxu0 %v1799
        %v1801 = vpop.f32.mrb[0].mxu0
        %v1802 = vadd.f32 %v1295, %v1801
        %v1803 = vpop.f32.mrb[0].mxu0
        %1804 = vmatprep.mubr.f32.mxu0 0.0
        %v1805 = vand.u32 %v220, 4294901760
        %v1806 = vsub.f32 %v220, %v1805
        %1807 = vmatmul.mubr.f32.gmra.mrb[0].mxu0 %v1806
        %v1808 = vpop.f32.mrb[0].mxu0
        %v1809 = vadd.f32 %v1301, %v1808
        %v1810 = vpop.f32.mrb[0].mxu0
        %1811 = vmatprep.mubr.f32.mxu0 0.0
        %v1812 = vand.u32 %v221, 4294901760
        %v1813 = vsub.f32 %v221, %v1812
        %1814 = vmatmul.mubr.f32.gmra.mrb[0].mxu0 %v1813
        %v1815 = vpop.f32.mrb[0].mxu0
        %v1816 = vadd.f32 %v1307, %v1815
        %v1817 = vpop.f32.mrb[0].mxu0
        %1818 = vmatprep.mubr.f32.mxu0 0.0
        %v1819 = vand.u32 %v222, 4294901760
        %v1820 = vsub.f32 %v222, %v1819
        %1821 = vmatmul.mubr.f32.gmra.mrb[0].mxu0 %v1820
        %v1822 = vpop.f32.mrb[0].mxu0
        %v1823 = vadd.f32 %v1313, %v1822
        %v1824 = vpop.f32.mrb[0].mxu0
        %1825 = vmatprep.mubr.f32.mxu0 0.0
        %v1826 = vand.u32 %v223, 4294901760
        %v1827 = vsub.f32 %v223, %v1826
        %1828 = vmatmul.mubr.f32.gmra.mrb[0].mxu0 %v1827
        %v1829 = vpop.f32.mrb[0].mxu0
        %v1830 = vadd.f32 %v1319, %v1829
        %v1831 = vpop.f32.mrb[0].mxu0
        %1832 = vmatprep.mubr.f32.mxu0 0.0
        %v1833 = vand.u32 %v224, 4294901760
        %v1834 = vsub.f32 %v224, %v1833
        %1835 = vmatmul.mubr.f32.gmra.mrb[0].mxu0 %v1834
        %v1836 = vpop.f32.mrb[0].mxu0
        %v1837 = vadd.f32 %v1325, %v1836
        %v1838 = vpop.f32.mrb[0].mxu0
        %1839 = vmatprep.mubr.f32.mxu0 0.0
        %v1840 = vand.u32 %v225, 4294901760
        %v1841 = vsub.f32 %v225, %v1840
        %1842 = vmatmul.mubr.f32.gmra.mrb[0].mxu0 %v1841
        %v1843 = vpop.f32.mrb[0].mxu0
        %v1844 = vadd.f32 %v1331, %v1843
        %v1845 = vpop.f32.mrb[0].mxu0
        %1846 = vmatprep.mubr.f32.mxu0 0.0
        %v1847 = vand.u32 %v226, 4294901760
        %v1848 = vsub.f32 %v226, %v1847
        %1849 = vmatmul.mubr.f32.gmra.mrb[0].mxu0 %v1848
        %v1850 = vpop.f32.mrb[0].mxu0
        %v1851 = vadd.f32 %v1337, %v1850
        %v1852 = vpop.f32.mrb[0].mxu0
        %1853 = vmatprep.mubr.f32.mxu0 0.0
        %v1854 = vand.u32 %v227, 4294901760
        %v1855 = vsub.f32 %v227, %v1854
        %1856 = vmatmul.mubr.f32.gmra.mrb[0].mxu0 %v1855
        %v1857 = vpop.f32.mrb[0].mxu0
        %v1858 = vadd.f32 %v1343, %v1857
        %v1859 = vpop.f32.mrb[0].mxu0
        %1860 = vmatprep.mubr.f32.mxu0 0.0
        %v1861 = vand.u32 %v228, 4294901760
        %v1862 = vsub.f32 %v228, %v1861
        %1863 = vmatmul.mubr.f32.gmra.mrb[0].mxu0 %v1862
        %v1864 = vpop.f32.mrb[0].mxu0
        %v1865 = vadd.f32 %v1349, %v1864
        %v1866 = vpop.f32.mrb[0].mxu0
        %1867 = vmatprep.mubr.f32.mxu0 0.0
        %v1868 = vand.u32 %v229, 4294901760
        %v1869 = vsub.f32 %v229, %v1868
        %1870 = vmatmul.mubr.f32.gmra.mrb[0].mxu0 %v1869
        %v1871 = vpop.f32.mrb[0].mxu0
        %v1872 = vadd.f32 %v1355, %v1871
        %v1873 = vpop.f32.mrb[0].mxu0
        %1874 = vmatprep.mubr.f32.mxu0 0.0
        %v1875 = vand.u32 %v230, 4294901760
        %v1876 = vsub.f32 %v230, %v1875
        %1877 = vmatmul.mubr.f32.gmra.mrb[0].mxu0 %v1876
        %v1878 = vpop.f32.mrb[0].mxu0
        %v1879 = vadd.f32 %v1361, %v1878
        %v1880 = vpop.f32.mrb[0].mxu0
        %1881 = vmatprep.mubr.f32.mxu0 0.0
        %v1882 = vand.u32 %v231, 4294901760
        %v1883 = vsub.f32 %v231, %v1882
        %1884 = vmatmul.mubr.f32.gmra.mrb[0].mxu0 %v1883
        %v1885 = vpop.f32.mrb[0].mxu0
        %v1886 = vadd.f32 %v1367, %v1885
        %v1887 = vpop.f32.mrb[0].mxu0
        %1888 = vmatprep.mubr.f32.mxu0 0.0
        %v1889 = vand.u32 %v232, 4294901760
        %v1890 = vsub.f32 %v232, %v1889
        %1891 = vmatmul.mubr.f32.gmra.mrb[0].mxu0 %v1890
        %v1892 = vpop.f32.mrb[0].mxu0
        %v1893 = vadd.f32 %v1373, %v1892
        %v1894 = vpop.f32.mrb[0].mxu0
        %1895 = vmatprep.mubr.f32.mxu0 0.0
        %v1896 = vand.u32 %v233, 4294901760
        %v1897 = vsub.f32 %v233, %v1896
        %1898 = vmatmul.mubr.f32.gmra.mrb[0].mxu0 %v1897
        %v1899 = vpop.f32.mrb[0].mxu0
        %v1900 = vadd.f32 %v1379, %v1899
        %v1901 = vpop.f32.mrb[0].mxu0
        %1902 = vmatprep.mubr.f32.mxu0 0.0
        %v1903 = vand.u32 %v234, 4294901760
        %v1904 = vsub.f32 %v234, %v1903
        %1905 = vmatmul.mubr.f32.gmra.mrb[0].mxu0 %v1904
        %v1906 = vpop.f32.mrb[0].mxu0
        %v1907 = vadd.f32 %v1385, %v1906
        %v1908 = vpop.f32.mrb[0].mxu0
        %1909 = vmatprep.mubr.f32.mxu0 0.0
        %v1910 = vand.u32 %v235, 4294901760
        %v1911 = vsub.f32 %v235, %v1910
        %1912 = vmatmul.mubr.f32.gmra.mrb[0].mxu0 %v1911
        %v1913 = vpop.f32.mrb[0].mxu0
        %v1914 = vadd.f32 %v1391, %v1913
        %v1915 = vpop.f32.mrb[0].mxu0
        %1916 = vmatprep.mubr.f32.mxu0 0.0
        %v1917 = vand.u32 %v236, 4294901760
        %v1918 = vsub.f32 %v236, %v1917
        %1919 = vmatmul.mubr.f32.gmra.mrb[0].mxu0 %v1918
        %v1920 = vpop.f32.mrb[0].mxu0
        %v1921 = vadd.f32 %v1397, %v1920
        %v1922 = vpop.f32.mrb[0].mxu0
        %1923 = vmatprep.mubr.f32.mxu0 0.0
        %v1924 = vand.u32 %v237, 4294901760
        %v1925 = vsub.f32 %v237, %v1924
        %1926 = vmatmul.mubr.f32.gmra.mrb[0].mxu0 %v1925
        %v1927 = vpop.f32.mrb[0].mxu0
        %v1928 = vadd.f32 %v1403, %v1927
        %v1929 = vpop.f32.mrb[0].mxu0
        %1930 = vmatprep.mubr.f32.mxu0 0.0
        %v1931 = vand.u32 %v238, 4294901760
        %v1932 = vsub.f32 %v238, %v1931
        %1933 = vmatmul.mubr.f32.gmra.mrb[0].mxu0 %v1932
        %v1934 = vpop.f32.mrb[0].mxu0
        %v1935 = vadd.f32 %v1409, %v1934
        %v1936 = vpop.f32.mrb[0].mxu0
        %1937 = vmatprep.mubr.f32.mxu0 0.0
        %v1938 = vand.u32 %v239, 4294901760
        %v1939 = vsub.f32 %v239, %v1938
        %1940 = vmatmul.mubr.f32.gmra.mrb[0].mxu0 %v1939
        %v1941 = vpop.f32.mrb[0].mxu0
        %v1942 = vadd.f32 %v1415, %v1941
        %v1943 = vpop.f32.mrb[0].mxu0
        %1944 = vmatprep.mubr.f32.mxu0 0.0
        %v1945 = vand.u32 %v240, 4294901760
        %v1946 = vsub.f32 %v240, %v1945
        %1947 = vmatmul.mubr.f32.gmra.mrb[0].mxu0 %v1946
        %v1948 = vpop.f32.mrb[0].mxu0
        %v1949 = vadd.f32 %v1421, %v1948
        %v1950 = vpop.f32.mrb[0].mxu0
        %1951 = vmatprep.mubr.f32.mxu0 0.0
        %v1952 = vand.u32 %v241, 4294901760
        %v1953 = vsub.f32 %v241, %v1952
        %1954 = vmatmul.mubr.f32.gmra.mrb[0].mxu0 %v1953
        %v1955 = vpop.f32.mrb[0].mxu0
        %v1956 = vadd.f32 %v1427, %v1955
        %v1957 = vpop.f32.mrb[0].mxu0
        %1958 = vmatprep.mubr.f32.mxu0 0.0
        %v1959 = vand.u32 %v242, 4294901760
        %v1960 = vsub.f32 %v242, %v1959
        %1961 = vmatmul.mubr.f32.gmra.mrb[0].mxu0 %v1960
        %v1962 = vpop.f32.mrb[0].mxu0
        %v1963 = vadd.f32 %v1433, %v1962
        %v1964 = vpop.f32.mrb[0].mxu0
        %1965 = vmatprep.mubr.f32.mxu0 0.0
        %v1966 = vand.u32 %v243, 4294901760
        %v1967 = vsub.f32 %v243, %v1966
        %1968 = vmatmul.mubr.f32.gmra.mrb[0].mxu0 %v1967
        %v1969 = vpop.f32.mrb[0].mxu0
        %v1970 = vadd.f32 %v1439, %v1969
        %v1971 = vpop.f32.mrb[0].mxu0
        %1972 = vmatprep.mubr.f32.mxu0 0.0
        %v1973 = vand.u32 %v244, 4294901760
        %v1974 = vsub.f32 %v244, %v1973
        %1975 = vmatmul.mubr.f32.gmra.mrb[0].mxu0 %v1974
        %v1976 = vpop.f32.mrb[0].mxu0
        %v1977 = vadd.f32 %v1445, %v1976
        %v1978 = vpop.f32.mrb[0].mxu0
        %1979 = vmatprep.mubr.f32.mxu0 0.0
        %v1980 = vand.u32 %v245, 4294901760
        %v1981 = vsub.f32 %v245, %v1980
        %1982 = vmatmul.mubr.f32.gmra.mrb[0].mxu0 %v1981
        %v1983 = vpop.f32.mrb[0].mxu0
        %v1984 = vadd.f32 %v1451, %v1983
        %v1985 = vpop.f32.mrb[0].mxu0
        %1986 = vmatprep.mubr.f32.mxu0 0.0
        %v1987 = vand.u32 %v246, 4294901760
        %v1988 = vsub.f32 %v246, %v1987
        %1989 = vmatmul.mubr.f32.gmra.mrb[0].mxu0 %v1988
        %v1990 = vpop.f32.mrb[0].mxu0
        %v1991 = vadd.f32 %v1457, %v1990
        %v1992 = vpop.f32.mrb[0].mxu0
        %1993 = vmatprep.mubr.f32.mxu0 0.0
        %v1994 = vand.u32 %v247, 4294901760
        %v1995 = vsub.f32 %v247, %v1994
        %1996 = vmatmul.mubr.f32.gmra.mrb[0].mxu0 %v1995
        %v1997 = vpop.f32.mrb[0].mxu0
        %v1998 = vadd.f32 %v1463, %v1997
        %v1999 = vpop.f32.mrb[0].mxu0
        %2000 = vmatprep.mubr.f32.mxu0 0.0
        %v2001 = vand.u32 %v248, 4294901760
        %v2002 = vsub.f32 %v248, %v2001
        %2003 = vmatmul.mubr.f32.gmra.mrb[0].mxu0 %v2002
        %v2004 = vpop.f32.mrb[0].mxu0
        %v2005 = vadd.f32 %v1469, %v2004
        %v2006 = vpop.f32.mrb[0].mxu0
        %2007 = vmatprep.mubr.f32.mxu0 0.0
        %v2008 = vand.u32 %v249, 4294901760
        %v2009 = vsub.f32 %v249, %v2008
        %2010 = vmatmul.mubr.f32.gmra.mrb[0].mxu0 %v2009
        %v2011 = vpop.f32.mrb[0].mxu0
        %v2012 = vadd.f32 %v1475, %v2011
        %v2013 = vpop.f32.mrb[0].mxu0
        %2014 = vmatprep.mubr.f32.mxu0 0.0
        %v2015 = vand.u32 %v250, 4294901760
        %v2016 = vsub.f32 %v250, %v2015
        %2017 = vmatmul.mubr.f32.gmra.mrb[0].mxu0 %v2016
        %v2018 = vpop.f32.mrb[0].mxu0
        %v2019 = vadd.f32 %v1481, %v2018
        %v2020 = vpop.f32.mrb[0].mxu0
        %2021 = vmatprep.mubr.f32.mxu0 0.0
        %v2022 = vand.u32 %v251, 4294901760
        %v2023 = vsub.f32 %v251, %v2022
        %2024 = vmatmul.mubr.f32.gmra.mrb[0].mxu0 %v2023
        %v2025 = vpop.f32.mrb[0].mxu0
        %v2026 = vadd.f32 %v1487, %v2025
        %v2027 = vpop.f32.mrb[0].mxu0
        %2028 = vmatprep.mubr.f32.mxu0 0.0
        %v2029 = vand.u32 %v252, 4294901760
        %v2030 = vsub.f32 %v252, %v2029
        %2031 = vmatmul.mubr.f32.gmra.mrb[0].mxu0 %v2030
        %v2032 = vpop.f32.mrb[0].mxu0
        %v2033 = vadd.f32 %v1493, %v2032
        %v2034 = vpop.f32.mrb[0].mxu0
        %2035 = vmatprep.mubr.f32.mxu0 0.0
        %v2036 = vand.u32 %v253, 4294901760
        %v2037 = vsub.f32 %v253, %v2036
        %2038 = vmatmul.mubr.f32.gmra.mrb[0].mxu0 %v2037
        %v2039 = vpop.f32.mrb[0].mxu0
        %v2040 = vadd.f32 %v1499, %v2039
        %v2041 = vpop.f32.mrb[0].mxu0
        %2042 = vmatprep.mubr.f32.mxu0 0.0
        %v2043 = vand.u32 %v254, 4294901760
        %v2044 = vsub.f32 %v254, %v2043
        %2045 = vmatmul.mubr.f32.gmra.mrb[0].mxu0 %v2044
        %v2046 = vpop.f32.mrb[0].mxu0
        %v2047 = vadd.f32 %v1505, %v2046
        %v2048 = vpop.f32.mrb[0].mxu0
        %2049 = vmatprep.mubr.f32.mxu0 0.0
        %v2050 = vand.u32 %v255, 4294901760
        %v2051 = vsub.f32 %v255, %v2050
        %2052 = vmatmul.mubr.f32.gmra.mrb[0].mxu0 %v2051
        %v2053 = vpop.f32.mrb[0].mxu0
        %v2054 = vadd.f32 %v1511, %v2053
        %v2055 = vpop.f32.mrb[0].mxu0
        %2056 = vmatprep.mubr.f32.mxu0 0.0
        %v2057 = vand.u32 %v256, 4294901760
        %v2058 = vsub.f32 %v256, %v2057
        %2059 = vmatmul.mubr.f32.gmra.mrb[0].mxu0 %v2058
        %v2060 = vpop.f32.mrb[0].mxu0
        %v2061 = vadd.f32 %v1517, %v2060
        %v2062 = vpop.f32.mrb[0].mxu0
        %2063 = vmatprep.mubr.f32.mxu0 0.0
        %v2064 = vand.u32 %v257, 4294901760
        %v2065 = vsub.f32 %v257, %v2064
        %2066 = vmatmul.mubr.f32.gmra.mrb[0].mxu0 %v2065
        %v2067 = vpop.f32.mrb[0].mxu0
        %v2068 = vadd.f32 %v1523, %v2067
        %v2069 = vpop.f32.mrb[0].mxu0
        %2070 = vdwg.mxu0
        %2071 = vmatprep.subr.mxu0 0.0
        %v2072 = vand.u32 %v258, 4294901760
        %2073 = vmatpush1.msra.mxu0 %v2072
        %2074 = vmatprep.subr.mxu0 0.0
        %v2075 = vand.u32 %v259, 4294901760
        %2076 = vmatpush1.msra.mxu0 %v2075
        %2077 = vmatprep.subr.mxu0 0.0
        %v2078 = vand.u32 %v260, 4294901760
        %2079 = vmatpush1.msra.mxu0 %v2078
        %2080 = vmatprep.subr.mxu0 0.0
        %v2081 = vand.u32 %v261, 4294901760
        %2082 = vmatpush1.msra.mxu0 %v2081
        %2083 = vmatprep.subr.mxu0 0.0
        %v2084 = vand.u32 %v262, 4294901760
        %2085 = vmatpush1.msra.mxu0 %v2084
        %2086 = vmatprep.subr.mxu0 0.0
        %v2087 = vand.u32 %v263, 4294901760
        %2088 = vmatpush1.msra.mxu0 %v2087
        %2089 = vmatprep.subr.mxu0 0.0
        %v2090 = vand.u32 %v264, 4294901760
        %2091 = vmatpush1.msra.mxu0 %v2090
        %2092 = vmatprep.subr.mxu0 0.0
        %v2093 = vand.u32 %v265, 4294901760
        %2094 = vmatpush1.msra.mxu0 %v2093
        %2095 = vmatprep.subr.mxu0 0.0
        %v2096 = vand.u32 %v266, 4294901760
        %2097 = vmatpush1.msra.mxu0 %v2096
        %2098 = vmatprep.subr.mxu0 0.0
        %v2099 = vand.u32 %v267, 4294901760
        %2100 = vmatpush1.msra.mxu0 %v2099
        %2101 = vmatprep.subr.mxu0 0.0
        %v2102 = vand.u32 %v268, 4294901760
        %2103 = vmatpush1.msra.mxu0 %v2102
        %2104 = vmatprep.subr.mxu0 0.0
        %v2105 = vand.u32 %v269, 4294901760
        %2106 = vmatpush1.msra.mxu0 %v2105
        %2107 = vmatprep.subr.mxu0 0.0
        %v2108 = vand.u32 %v270, 4294901760
        %2109 = vmatpush1.msra.mxu0 %v2108
        %2110 = vmatprep.subr.mxu0 0.0
        %v2111 = vand.u32 %v271, 4294901760
        %2112 = vmatpush1.msra.mxu0 %v2111
        %2113 = vmatprep.subr.mxu0 0.0
        %v2114 = vand.u32 %v272, 4294901760
        %2115 = vmatpush1.msra.mxu0 %v2114
        %2116 = vmatprep.subr.mxu0 0.0
        %v2117 = vand.u32 %v273, 4294901760
        %2118 = vmatpush1.msra.mxu0 %v2117
        %2119 = vmatprep.subr.mxu0 0.0
        %2120 = vmatpush1.msra.mxu0 0.0
        %2121 = vmatprep.subr.mxu0 0.0
        %2122 = vmatpush1.msra.mxu0 0.0
        %2123 = vmatprep.subr.mxu0 0.0
        %2124 = vmatpush1.msra.mxu0 0.0
        %2125 = vmatprep.subr.mxu0 0.0
        %2126 = vmatpush1.msra.mxu0 0.0
        %2127 = vmatprep.subr.mxu0 0.0
        %2128 = vmatpush1.msra.mxu0 0.0
        %2129 = vmatprep.subr.mxu0 0.0
        %2130 = vmatpush1.msra.mxu0 0.0
        %2131 = vmatprep.subr.mxu0 0.0
        %2132 = vmatpush1.msra.mxu0 0.0
        %2133 = vmatprep.subr.mxu0 0.0
        %2134 = vmatpush1.msra.mxu0 0.0
        %2135 = vmatprep.subr.mxu0 0.0
        %2136 = vmatpush1.msra.mxu0 0.0
        %2137 = vmatprep.subr.mxu0 0.0
        %2138 = vmatpush1.msra.mxu0 0.0
        %2139 = vmatprep.subr.mxu0 0.0
        %2140 = vmatpush1.msra.mxu0 0.0
        %2141 = vmatprep.subr.mxu0 0.0
        %2142 = vmatpush1.msra.mxu0 0.0
        %2143 = vmatprep.subr.mxu0 0.0
        %2144 = vmatpush1.msra.mxu0 0.0
        %2145 = vmatprep.subr.mxu0 0.0
        %2146 = vmatpush1.msra.mxu0 0.0
        %2147 = vmatprep.subr.mxu0 0.0
        %2148 = vmatpush1.msra.mxu0 0.0
        %2149 = vmatprep.subr.mxu0 0.0
        %2150 = vmatpush1.msra.mxu0 0.0
        %2151 = vmatprep.mubr.f32.mxu0 0.0
        %v2152 = vand.u32 %v194, 4294901760
        %v2153 = vsub.f32 %v194, %v2152
        %v2154 = vand.u32 %v2153, 4294901760
        %2155 = vmatmul.mubr.f32.gmra.mrb[0].mxu0 %v2154
        %v2156 = vpop.f32.mrb[0].mxu0
        %v2157 = vadd.f32 %v1627, %v2156
        %v2158 = vpop.f32.mrb[0].mxu0
        %2159 = vmatprep.mubr.f32.mxu0 0.0
        %v2160 = vand.u32 %v195, 4294901760
        %v2161 = vsub.f32 %v195, %v2160
        %v2162 = vand.u32 %v2161, 4294901760
        %2163 = vmatmul.mubr.f32.gmra.mrb[0].mxu0 %v2162
        %v2164 = vpop.f32.mrb[0].mxu0
        %v2165 = vadd.f32 %v1634, %v2164
        %v2166 = vpop.f32.mrb[0].mxu0
        %2167 = vmatprep.mubr.f32.mxu0 0.0
        %v2168 = vand.u32 %v196, 4294901760
        %v2169 = vsub.f32 %v196, %v2168
        %v2170 = vand.u32 %v2169, 4294901760
        %2171 = vmatmul.mubr.f32.gmra.mrb[0].mxu0 %v2170
        %v2172 = vpop.f32.mrb[0].mxu0
        %v2173 = vadd.f32 %v1641, %v2172
        %v2174 = vpop.f32.mrb[0].mxu0
        %2175 = vmatprep.mubr.f32.mxu0 0.0
        %v2176 = vand.u32 %v197, 4294901760
        %v2177 = vsub.f32 %v197, %v2176
        %v2178 = vand.u32 %v2177, 4294901760
        %2179 = vmatmul.mubr.f32.gmra.mrb[0].mxu0 %v2178
        %v2180 = vpop.f32.mrb[0].mxu0
        %v2181 = vadd.f32 %v1648, %v2180
        %v2182 = vpop.f32.mrb[0].mxu0
        %2183 = vmatprep.mubr.f32.mxu0 0.0
        %v2184 = vand.u32 %v198, 4294901760
        %v2185 = vsub.f32 %v198, %v2184
        %v2186 = vand.u32 %v2185, 4294901760
        %2187 = vmatmul.mubr.f32.gmra.mrb[0].mxu0 %v2186
        %v2188 = vpop.f32.mrb[0].mxu0
        %v2189 = vadd.f32 %v1655, %v2188
        %v2190 = vpop.f32.mrb[0].mxu0
        %2191 = vmatprep.mubr.f32.mxu0 0.0
        %v2192 = vand.u32 %v199, 4294901760
        %v2193 = vsub.f32 %v199, %v2192
        %v2194 = vand.u32 %v2193, 4294901760
        %2195 = vmatmul.mubr.f32.gmra.mrb[0].mxu0 %v2194
        %v2196 = vpop.f32.mrb[0].mxu0
        %v2197 = vadd.f32 %v1662, %v2196
        %v2198 = vpop.f32.mrb[0].mxu0
        %2199 = vmatprep.mubr.f32.mxu0 0.0
        %v2200 = vand.u32 %v200, 4294901760
        %v2201 = vsub.f32 %v200, %v2200
        %v2202 = vand.u32 %v2201, 4294901760
        %2203 = vmatmul.mubr.f32.gmra.mrb[0].mxu0 %v2202
        %v2204 = vpop.f32.mrb[0].mxu0
        %v2205 = vadd.f32 %v1669, %v2204
        %v2206 = vpop.f32.mrb[0].mxu0
        %2207 = vmatprep.mubr.f32.mxu0 0.0
        %v2208 = vand.u32 %v201, 4294901760
        %v2209 = vsub.f32 %v201, %v2208
        %v2210 = vand.u32 %v2209, 4294901760
        %2211 = vmatmul.mubr.f32.gmra.mrb[0].mxu0 %v2210
        %v2212 = vpop.f32.mrb[0].mxu0
        %v2213 = vadd.f32 %v1676, %v2212
        %v2214 = vpop.f32.mrb[0].mxu0
        %2215 = vmatprep.mubr.f32.mxu0 0.0
        %v2216 = vand.u32 %v202, 4294901760
        %v2217 = vsub.f32 %v202, %v2216
        %v2218 = vand.u32 %v2217, 4294901760
        %2219 = vmatmul.mubr.f32.gmra.mrb[0].mxu0 %v2218
        %v2220 = vpop.f32.mrb[0].mxu0
        %v2221 = vadd.f32 %v1683, %v2220
        %v2222 = vpop.f32.mrb[0].mxu0
        %2223 = vmatprep.mubr.f32.mxu0 0.0
        %v2224 = vand.u32 %v203, 4294901760
        %v2225 = vsub.f32 %v203, %v2224
        %v2226 = vand.u32 %v2225, 4294901760
        %2227 = vmatmul.mubr.f32.gmra.mrb[0].mxu0 %v2226
        %v2228 = vpop.f32.mrb[0].mxu0
        %v2229 = vadd.f32 %v1690, %v2228
        %v2230 = vpop.f32.mrb[0].mxu0
        %2231 = vmatprep.mubr.f32.mxu0 0.0
        %v2232 = vand.u32 %v204, 4294901760
        %v2233 = vsub.f32 %v204, %v2232
        %v2234 = vand.u32 %v2233, 4294901760
        %2235 = vmatmul.mubr.f32.gmra.mrb[0].mxu0 %v2234
        %v2236 = vpop.f32.mrb[0].mxu0
        %v2237 = vadd.f32 %v1697, %v2236
        %v2238 = vpop.f32.mrb[0].mxu0
        %2239 = vmatprep.mubr.f32.mxu0 0.0
        %v2240 = vand.u32 %v205, 4294901760
        %v2241 = vsub.f32 %v205, %v2240
        %v2242 = vand.u32 %v2241, 4294901760
        %2243 = vmatmul.mubr.f32.gmra.mrb[0].mxu0 %v2242
        %v2244 = vpop.f32.mrb[0].mxu0
        %v2245 = vadd.f32 %v1704, %v2244
        %v2246 = vpop.f32.mrb[0].mxu0
        %2247 = vmatprep.mubr.f32.mxu0 0.0
        %v2248 = vand.u32 %v206, 4294901760
        %v2249 = vsub.f32 %v206, %v2248
        %v2250 = vand.u32 %v2249, 4294901760
        %2251 = vmatmul.mubr.f32.gmra.mrb[0].mxu0 %v2250
        %v2252 = vpop.f32.mrb[0].mxu0
        %v2253 = vadd.f32 %v1711, %v2252
        %v2254 = vpop.f32.mrb[0].mxu0
        %2255 = vmatprep.mubr.f32.mxu0 0.0
        %v2256 = vand.u32 %v207, 4294901760
        %v2257 = vsub.f32 %v207, %v2256
        %v2258 = vand.u32 %v2257, 4294901760
        %2259 = vmatmul.mubr.f32.gmra.mrb[0].mxu0 %v2258
        %v2260 = vpop.f32.mrb[0].mxu0
        %v2261 = vadd.f32 %v1718, %v2260
        %v2262 = vpop.f32.mrb[0].mxu0
        %2263 = vmatprep.mubr.f32.mxu0 0.0
        %v2264 = vand.u32 %v208, 4294901760
        %v2265 = vsub.f32 %v208, %v2264
        %v2266 = vand.u32 %v2265, 4294901760
        %2267 = vmatmul.mubr.f32.gmra.mrb[0].mxu0 %v2266
        %v2268 = vpop.f32.mrb[0].mxu0
        %v2269 = vadd.f32 %v1725, %v2268
        %v2270 = vpop.f32.mrb[0].mxu0
        %2271 = vmatprep.mubr.f32.mxu0 0.0
        %v2272 = vand.u32 %v209, 4294901760
        %v2273 = vsub.f32 %v209, %v2272
        %v2274 = vand.u32 %v2273, 4294901760
        %2275 = vmatmul.mubr.f32.gmra.mrb[0].mxu0 %v2274
        %v2276 = vpop.f32.mrb[0].mxu0
        %v2277 = vadd.f32 %v1732, %v2276
        %v2278 = vpop.f32.mrb[0].mxu0
        %2279 = vmatprep.mubr.f32.mxu0 0.0
        %v2280 = vand.u32 %v210, 4294901760
        %v2281 = vsub.f32 %v210, %v2280
        %v2282 = vand.u32 %v2281, 4294901760
        %2283 = vmatmul.mubr.f32.gmra.mrb[0].mxu0 %v2282
        %v2284 = vpop.f32.mrb[0].mxu0
        %v2285 = vadd.f32 %v1739, %v2284
        %v2286 = vpop.f32.mrb[0].mxu0
        %2287 = vmatprep.mubr.f32.mxu0 0.0
        %v2288 = vand.u32 %v211, 4294901760
        %v2289 = vsub.f32 %v211, %v2288
        %v2290 = vand.u32 %v2289, 4294901760
        %2291 = vmatmul.mubr.f32.gmra.mrb[0].mxu0 %v2290
        %v2292 = vpop.f32.mrb[0].mxu0
        %v2293 = vadd.f32 %v1746, %v2292
        %v2294 = vpop.f32.mrb[0].mxu0
        %2295 = vmatprep.mubr.f32.mxu0 0.0
        %v2296 = vand.u32 %v212, 4294901760
        %v2297 = vsub.f32 %v212, %v2296
        %v2298 = vand.u32 %v2297, 4294901760
        %2299 = vmatmul.mubr.f32.gmra.mrb[0].mxu0 %v2298
        %v2300 = vpop.f32.mrb[0].mxu0
        %v2301 = vadd.f32 %v1753, %v2300
        %v2302 = vpop.f32.mrb[0].mxu0
        %2303 = vmatprep.mubr.f32.mxu0 0.0
        %v2304 = vand.u32 %v213, 4294901760
        %v2305 = vsub.f32 %v213, %v2304
        %v2306 = vand.u32 %v2305, 4294901760
        %2307 = vmatmul.mubr.f32.gmra.mrb[0].mxu0 %v2306
        %v2308 = vpop.f32.mrb[0].mxu0
        %v2309 = vadd.f32 %v1760, %v2308
        %v2310 = vpop.f32.mrb[0].mxu0
        %2311 = vmatprep.mubr.f32.mxu0 0.0
        %v2312 = vand.u32 %v214, 4294901760
        %v2313 = vsub.f32 %v214, %v2312
        %v2314 = vand.u32 %v2313, 4294901760
        %2315 = vmatmul.mubr.f32.gmra.mrb[0].mxu0 %v2314
        %v2316 = vpop.f32.mrb[0].mxu0
        %v2317 = vadd.f32 %v1767, %v2316
        %v2318 = vpop.f32.mrb[0].mxu0
        %2319 = vmatprep.mubr.f32.mxu0 0.0
        %v2320 = vand.u32 %v215, 4294901760
        %v2321 = vsub.f32 %v215, %v2320
        %v2322 = vand.u32 %v2321, 4294901760
        %2323 = vmatmul.mubr.f32.gmra.mrb[0].mxu0 %v2322
        %v2324 = vpop.f32.mrb[0].mxu0
        %v2325 = vadd.f32 %v1774, %v2324
        %v2326 = vpop.f32.mrb[0].mxu0
        %2327 = vmatprep.mubr.f32.mxu0 0.0
        %v2328 = vand.u32 %v216, 4294901760
        %v2329 = vsub.f32 %v216, %v2328
        %v2330 = vand.u32 %v2329, 4294901760
        %2331 = vmatmul.mubr.f32.gmra.mrb[0].mxu0 %v2330
        %v2332 = vpop.f32.mrb[0].mxu0
        %v2333 = vadd.f32 %v1781, %v2332
        %v2334 = vpop.f32.mrb[0].mxu0
        %2335 = vmatprep.mubr.f32.mxu0 0.0
        %v2336 = vand.u32 %v217, 4294901760
        %v2337 = vsub.f32 %v217, %v2336
        %v2338 = vand.u32 %v2337, 4294901760
        %2339 = vmatmul.mubr.f32.gmra.mrb[0].mxu0 %v2338
        %v2340 = vpop.f32.mrb[0].mxu0
        %v2341 = vadd.f32 %v1788, %v2340
        %v2342 = vpop.f32.mrb[0].mxu0
        %2343 = vmatprep.mubr.f32.mxu0 0.0
        %v2344 = vand.u32 %v218, 4294901760
        %v2345 = vsub.f32 %v218, %v2344
        %v2346 = vand.u32 %v2345, 4294901760
        %2347 = vmatmul.mubr.f32.gmra.mrb[0].mxu0 %v2346
        %v2348 = vpop.f32.mrb[0].mxu0
        %v2349 = vadd.f32 %v1795, %v2348
        %v2350 = vpop.f32.mrb[0].mxu0
        %2351 = vmatprep.mubr.f32.mxu0 0.0
        %v2352 = vand.u32 %v219, 4294901760
        %v2353 = vsub.f32 %v219, %v2352
        %v2354 = vand.u32 %v2353, 4294901760
        %2355 = vmatmul.mubr.f32.gmra.mrb[0].mxu0 %v2354
        %v2356 = vpop.f32.mrb[0].mxu0
        %v2357 = vadd.f32 %v1802, %v2356
        %v2358 = vpop.f32.mrb[0].mxu0
        %2359 = vmatprep.mubr.f32.mxu0 0.0
        %v2360 = vand.u32 %v220, 4294901760
        %v2361 = vsub.f32 %v220, %v2360
        %v2362 = vand.u32 %v2361, 4294901760
        %2363 = vmatmul.mubr.f32.gmra.mrb[0].mxu0 %v2362
        %v2364 = vpop.f32.mrb[0].mxu0
        %v2365 = vadd.f32 %v1809, %v2364
        %v2366 = vpop.f32.mrb[0].mxu0
        %2367 = vmatprep.mubr.f32.mxu0 0.0
        %v2368 = vand.u32 %v221, 4294901760
        %v2369 = vsub.f32 %v221, %v2368
        %v2370 = vand.u32 %v2369, 4294901760
        %2371 = vmatmul.mubr.f32.gmra.mrb[0].mxu0 %v2370
        %v2372 = vpop.f32.mrb[0].mxu0
        %v2373 = vadd.f32 %v1816, %v2372
        %v2374 = vpop.f32.mrb[0].mxu0
        %2375 = vmatprep.mubr.f32.mxu0 0.0
        %v2376 = vand.u32 %v222, 4294901760
        %v2377 = vsub.f32 %v222, %v2376
        %v2378 = vand.u32 %v2377, 4294901760
        %2379 = vmatmul.mubr.f32.gmra.mrb[0].mxu0 %v2378
        %v2380 = vpop.f32.mrb[0].mxu0
        %v2381 = vadd.f32 %v1823, %v2380
        %v2382 = vpop.f32.mrb[0].mxu0
        %2383 = vmatprep.mubr.f32.mxu0 0.0
        %v2384 = vand.u32 %v223, 4294901760
        %v2385 = vsub.f32 %v223, %v2384
        %v2386 = vand.u32 %v2385, 4294901760
        %2387 = vmatmul.mubr.f32.gmra.mrb[0].mxu0 %v2386
        %v2388 = vpop.f32.mrb[0].mxu0
        %v2389 = vadd.f32 %v1830, %v2388
        %v2390 = vpop.f32.mrb[0].mxu0
        %2391 = vmatprep.mubr.f32.mxu0 0.0
        %v2392 = vand.u32 %v224, 4294901760
        %v2393 = vsub.f32 %v224, %v2392
        %v2394 = vand.u32 %v2393, 4294901760
        %2395 = vmatmul.mubr.f32.gmra.mrb[0].mxu0 %v2394
        %v2396 = vpop.f32.mrb[0].mxu0
        %v2397 = vadd.f32 %v1837, %v2396
        %v2398 = vpop.f32.mrb[0].mxu0
        %2399 = vmatprep.mubr.f32.mxu0 0.0
        %v2400 = vand.u32 %v225, 4294901760
        %v2401 = vsub.f32 %v225, %v2400
        %v2402 = vand.u32 %v2401, 4294901760
        %2403 = vmatmul.mubr.f32.gmra.mrb[0].mxu0 %v2402
        %v2404 = vpop.f32.mrb[0].mxu0
        %v2405 = vadd.f32 %v1844, %v2404
        %v2406 = vpop.f32.mrb[0].mxu0
        %2407 = vmatprep.mubr.f32.mxu0 0.0
        %v2408 = vand.u32 %v226, 4294901760
        %v2409 = vsub.f32 %v226, %v2408
        %v2410 = vand.u32 %v2409, 4294901760
        %2411 = vmatmul.mubr.f32.gmra.mrb[0].mxu0 %v2410
        %v2412 = vpop.f32.mrb[0].mxu0
        %v2413 = vadd.f32 %v1851, %v2412
        %v2414 = vpop.f32.mrb[0].mxu0
        %2415 = vmatprep.mubr.f32.mxu0 0.0
        %v2416 = vand.u32 %v227, 4294901760
        %v2417 = vsub.f32 %v227, %v2416
        %v2418 = vand.u32 %v2417, 4294901760
        %2419 = vmatmul.mubr.f32.gmra.mrb[0].mxu0 %v2418
        %v2420 = vpop.f32.mrb[0].mxu0
        %v2421 = vadd.f32 %v1858, %v2420
        %v2422 = vpop.f32.mrb[0].mxu0
        %2423 = vmatprep.mubr.f32.mxu0 0.0
        %v2424 = vand.u32 %v228, 4294901760
        %v2425 = vsub.f32 %v228, %v2424
        %v2426 = vand.u32 %v2425, 4294901760
        %2427 = vmatmul.mubr.f32.gmra.mrb[0].mxu0 %v2426
        %v2428 = vpop.f32.mrb[0].mxu0
        %v2429 = vadd.f32 %v1865, %v2428
        %v2430 = vpop.f32.mrb[0].mxu0
        %2431 = vmatprep.mubr.f32.mxu0 0.0
        %v2432 = vand.u32 %v229, 4294901760
        %v2433 = vsub.f32 %v229, %v2432
        %v2434 = vand.u32 %v2433, 4294901760
        %2435 = vmatmul.mubr.f32.gmra.mrb[0].mxu0 %v2434
        %v2436 = vpop.f32.mrb[0].mxu0
        %v2437 = vadd.f32 %v1872, %v2436
        %v2438 = vpop.f32.mrb[0].mxu0
        %2439 = vmatprep.mubr.f32.mxu0 0.0
        %v2440 = vand.u32 %v230, 4294901760
        %v2441 = vsub.f32 %v230, %v2440
        %v2442 = vand.u32 %v2441, 4294901760
        %2443 = vmatmul.mubr.f32.gmra.mrb[0].mxu0 %v2442
        %v2444 = vpop.f32.mrb[0].mxu0
        %v2445 = vadd.f32 %v1879, %v2444
        %v2446 = vpop.f32.mrb[0].mxu0
        %2447 = vmatprep.mubr.f32.mxu0 0.0
        %v2448 = vand.u32 %v231, 4294901760
        %v2449 = vsub.f32 %v231, %v2448
        %v2450 = vand.u32 %v2449, 4294901760
        %2451 = vmatmul.mubr.f32.gmra.mrb[0].mxu0 %v2450
        %v2452 = vpop.f32.mrb[0].mxu0
        %v2453 = vadd.f32 %v1886, %v2452
        %v2454 = vpop.f32.mrb[0].mxu0
        %2455 = vmatprep.mubr.f32.mxu0 0.0
        %v2456 = vand.u32 %v232, 4294901760
        %v2457 = vsub.f32 %v232, %v2456
        %v2458 = vand.u32 %v2457, 4294901760
        %2459 = vmatmul.mubr.f32.gmra.mrb[0].mxu0 %v2458
        %v2460 = vpop.f32.mrb[0].mxu0
        %v2461 = vadd.f32 %v1893, %v2460
        %v2462 = vpop.f32.mrb[0].mxu0
        %2463 = vmatprep.mubr.f32.mxu0 0.0
        %v2464 = vand.u32 %v233, 4294901760
        %v2465 = vsub.f32 %v233, %v2464
        %v2466 = vand.u32 %v2465, 4294901760
        %2467 = vmatmul.mubr.f32.gmra.mrb[0].mxu0 %v2466
        %v2468 = vpop.f32.mrb[0].mxu0
        %v2469 = vadd.f32 %v1900, %v2468
        %v2470 = vpop.f32.mrb[0].mxu0
        %2471 = vmatprep.mubr.f32.mxu0 0.0
        %v2472 = vand.u32 %v234, 4294901760
        %v2473 = vsub.f32 %v234, %v2472
        %v2474 = vand.u32 %v2473, 4294901760
        %2475 = vmatmul.mubr.f32.gmra.mrb[0].mxu0 %v2474
        %v2476 = vpop.f32.mrb[0].mxu0
        %v2477 = vadd.f32 %v1907, %v2476
        %v2478 = vpop.f32.mrb[0].mxu0
        %2479 = vmatprep.mubr.f32.mxu0 0.0
        %v2480 = vand.u32 %v235, 4294901760
        %v2481 = vsub.f32 %v235, %v2480
        %v2482 = vand.u32 %v2481, 4294901760
        %2483 = vmatmul.mubr.f32.gmra.mrb[0].mxu0 %v2482
        %v2484 = vpop.f32.mrb[0].mxu0
        %v2485 = vadd.f32 %v1914, %v2484
        %v2486 = vpop.f32.mrb[0].mxu0
        %2487 = vmatprep.mubr.f32.mxu0 0.0
        %v2488 = vand.u32 %v236, 4294901760
        %v2489 = vsub.f32 %v236, %v2488
        %v2490 = vand.u32 %v2489, 4294901760
        %2491 = vmatmul.mubr.f32.gmra.mrb[0].mxu0 %v2490
        %v2492 = vpop.f32.mrb[0].mxu0
        %v2493 = vadd.f32 %v1921, %v2492
        %v2494 = vpop.f32.mrb[0].mxu0
        %2495 = vmatprep.mubr.f32.mxu0 0.0
        %v2496 = vand.u32 %v237, 4294901760
        %v2497 = vsub.f32 %v237, %v2496
        %v2498 = vand.u32 %v2497, 4294901760
        %2499 = vmatmul.mubr.f32.gmra.mrb[0].mxu0 %v2498
        %v2500 = vpop.f32.mrb[0].mxu0
        %v2501 = vadd.f32 %v1928, %v2500
        %v2502 = vpop.f32.mrb[0].mxu0
        %2503 = vmatprep.mubr.f32.mxu0 0.0
        %v2504 = vand.u32 %v238, 4294901760
        %v2505 = vsub.f32 %v238, %v2504
        %v2506 = vand.u32 %v2505, 4294901760
        %2507 = vmatmul.mubr.f32.gmra.mrb[0].mxu0 %v2506
        %v2508 = vpop.f32.mrb[0].mxu0
        %v2509 = vadd.f32 %v1935, %v2508
        %v2510 = vpop.f32.mrb[0].mxu0
        %2511 = vmatprep.mubr.f32.mxu0 0.0
        %v2512 = vand.u32 %v239, 4294901760
        %v2513 = vsub.f32 %v239, %v2512
        %v2514 = vand.u32 %v2513, 4294901760
        %2515 = vmatmul.mubr.f32.gmra.mrb[0].mxu0 %v2514
        %v2516 = vpop.f32.mrb[0].mxu0
        %v2517 = vadd.f32 %v1942, %v2516
        %v2518 = vpop.f32.mrb[0].mxu0
        %2519 = vmatprep.mubr.f32.mxu0 0.0
        %v2520 = vand.u32 %v240, 4294901760
        %v2521 = vsub.f32 %v240, %v2520
        %v2522 = vand.u32 %v2521, 4294901760
        %2523 = vmatmul.mubr.f32.gmra.mrb[0].mxu0 %v2522
        %v2524 = vpop.f32.mrb[0].mxu0
        %v2525 = vadd.f32 %v1949, %v2524
        %v2526 = vpop.f32.mrb[0].mxu0
        %2527 = vmatprep.mubr.f32.mxu0 0.0
        %v2528 = vand.u32 %v241, 4294901760
        %v2529 = vsub.f32 %v241, %v2528
        %v2530 = vand.u32 %v2529, 4294901760
        %2531 = vmatmul.mubr.f32.gmra.mrb[0].mxu0 %v2530
        %v2532 = vpop.f32.mrb[0].mxu0
        %v2533 = vadd.f32 %v1956, %v2532
        %v2534 = vpop.f32.mrb[0].mxu0
        %2535 = vmatprep.mubr.f32.mxu0 0.0
        %v2536 = vand.u32 %v242, 4294901760
        %v2537 = vsub.f32 %v242, %v2536
        %v2538 = vand.u32 %v2537, 4294901760
        %2539 = vmatmul.mubr.f32.gmra.mrb[0].mxu0 %v2538
        %v2540 = vpop.f32.mrb[0].mxu0
        %v2541 = vadd.f32 %v1963, %v2540
        %v2542 = vpop.f32.mrb[0].mxu0
        %2543 = vmatprep.mubr.f32.mxu0 0.0
        %v2544 = vand.u32 %v243, 4294901760
        %v2545 = vsub.f32 %v243, %v2544
        %v2546 = vand.u32 %v2545, 4294901760
        %2547 = vmatmul.mubr.f32.gmra.mrb[0].mxu0 %v2546
        %v2548 = vpop.f32.mrb[0].mxu0
        %v2549 = vadd.f32 %v1970, %v2548
        %v2550 = vpop.f32.mrb[0].mxu0
        %2551 = vmatprep.mubr.f32.mxu0 0.0
        %v2552 = vand.u32 %v244, 4294901760
        %v2553 = vsub.f32 %v244, %v2552
        %v2554 = vand.u32 %v2553, 4294901760
        %2555 = vmatmul.mubr.f32.gmra.mrb[0].mxu0 %v2554
        %v2556 = vpop.f32.mrb[0].mxu0
        %v2557 = vadd.f32 %v1977, %v2556
        %v2558 = vpop.f32.mrb[0].mxu0
        %2559 = vmatprep.mubr.f32.mxu0 0.0
        %v2560 = vand.u32 %v245, 4294901760
        %v2561 = vsub.f32 %v245, %v2560
        %v2562 = vand.u32 %v2561, 4294901760
        %2563 = vmatmul.mubr.f32.gmra.mrb[0].mxu0 %v2562
        %v2564 = vpop.f32.mrb[0].mxu0
        %v2565 = vadd.f32 %v1984, %v2564
        %v2566 = vpop.f32.mrb[0].mxu0
        %2567 = vmatprep.mubr.f32.mxu0 0.0
        %v2568 = vand.u32 %v246, 4294901760
        %v2569 = vsub.f32 %v246, %v2568
        %v2570 = vand.u32 %v2569, 4294901760
        %2571 = vmatmul.mubr.f32.gmra.mrb[0].mxu0 %v2570
        %v2572 = vpop.f32.mrb[0].mxu0
        %v2573 = vadd.f32 %v1991, %v2572
        %v2574 = vpop.f32.mrb[0].mxu0
        %2575 = vmatprep.mubr.f32.mxu0 0.0
        %v2576 = vand.u32 %v247, 4294901760
        %v2577 = vsub.f32 %v247, %v2576
        %v2578 = vand.u32 %v2577, 4294901760
        %2579 = vmatmul.mubr.f32.gmra.mrb[0].mxu0 %v2578
        %v2580 = vpop.f32.mrb[0].mxu0
        %v2581 = vadd.f32 %v1998, %v2580
        %v2582 = vpop.f32.mrb[0].mxu0
        %2583 = vmatprep.mubr.f32.mxu0 0.0
        %v2584 = vand.u32 %v248, 4294901760
        %v2585 = vsub.f32 %v248, %v2584
        %v2586 = vand.u32 %v2585, 4294901760
        %2587 = vmatmul.mubr.f32.gmra.mrb[0].mxu0 %v2586
        %v2588 = vpop.f32.mrb[0].mxu0
        %v2589 = vadd.f32 %v2005, %v2588
        %v2590 = vpop.f32.mrb[0].mxu0
        %2591 = vmatprep.mubr.f32.mxu0 0.0
        %v2592 = vand.u32 %v249, 4294901760
        %v2593 = vsub.f32 %v249, %v2592
        %v2594 = vand.u32 %v2593, 4294901760
        %2595 = vmatmul.mubr.f32.gmra.mrb[0].mxu0 %v2594
        %v2596 = vpop.f32.mrb[0].mxu0
        %v2597 = vadd.f32 %v2012, %v2596
        %v2598 = vpop.f32.mrb[0].mxu0
        %2599 = vmatprep.mubr.f32.mxu0 0.0
        %v2600 = vand.u32 %v250, 4294901760
        %v2601 = vsub.f32 %v250, %v2600
        %v2602 = vand.u32 %v2601, 4294901760
        %2603 = vmatmul.mubr.f32.gmra.mrb[0].mxu0 %v2602
        %v2604 = vpop.f32.mrb[0].mxu0
        %v2605 = vadd.f32 %v2019, %v2604
        %v2606 = vpop.f32.mrb[0].mxu0
        %2607 = vmatprep.mubr.f32.mxu0 0.0
        %v2608 = vand.u32 %v251, 4294901760
        %v2609 = vsub.f32 %v251, %v2608
        %v2610 = vand.u32 %v2609, 4294901760
        %2611 = vmatmul.mubr.f32.gmra.mrb[0].mxu0 %v2610
        %v2612 = vpop.f32.mrb[0].mxu0
        %v2613 = vadd.f32 %v2026, %v2612
        %v2614 = vpop.f32.mrb[0].mxu0
        %2615 = vmatprep.mubr.f32.mxu0 0.0
        %v2616 = vand.u32 %v252, 4294901760
        %v2617 = vsub.f32 %v252, %v2616
        %v2618 = vand.u32 %v2617, 4294901760
        %2619 = vmatmul.mubr.f32.gmra.mrb[0].mxu0 %v2618
        %v2620 = vpop.f32.mrb[0].mxu0
        %v2621 = vadd.f32 %v2033, %v2620
        %v2622 = vpop.f32.mrb[0].mxu0
        %2623 = vmatprep.mubr.f32.mxu0 0.0
        %v2624 = vand.u32 %v253, 4294901760
        %v2625 = vsub.f32 %v253, %v2624
        %v2626 = vand.u32 %v2625, 4294901760
        %2627 = vmatmul.mubr.f32.gmra.mrb[0].mxu0 %v2626
        %v2628 = vpop.f32.mrb[0].mxu0
        %v2629 = vadd.f32 %v2040, %v2628
        %v2630 = vpop.f32.mrb[0].mxu0
        %2631 = vmatprep.mubr.f32.mxu0 0.0
        %v2632 = vand.u32 %v254, 4294901760
        %v2633 = vsub.f32 %v254, %v2632
        %v2634 = vand.u32 %v2633, 4294901760
        %2635 = vmatmul.mubr.f32.gmra.mrb[0].mxu0 %v2634
        %v2636 = vpop.f32.mrb[0].mxu0
        %v2637 = vadd.f32 %v2047, %v2636
        %v2638 = vpop.f32.mrb[0].mxu0
        %2639 = vmatprep.mubr.f32.mxu0 0.0
        %v2640 = vand.u32 %v255, 4294901760
        %v2641 = vsub.f32 %v255, %v2640
        %v2642 = vand.u32 %v2641, 4294901760
        %2643 = vmatmul.mubr.f32.gmra.mrb[0].mxu0 %v2642
        %v2644 = vpop.f32.mrb[0].mxu0
        %v2645 = vadd.f32 %v2054, %v2644
        %v2646 = vpop.f32.mrb[0].mxu0
        %2647 = vmatprep.mubr.f32.mxu0 0.0
        %v2648 = vand.u32 %v256, 4294901760
        %v2649 = vsub.f32 %v256, %v2648
        %v2650 = vand.u32 %v2649, 4294901760
        %2651 = vmatmul.mubr.f32.gmra.mrb[0].mxu0 %v2650
        %v2652 = vpop.f32.mrb[0].mxu0
        %v2653 = vadd.f32 %v2061, %v2652
        %v2654 = vpop.f32.mrb[0].mxu0
        %2655 = vmatprep.mubr.f32.mxu0 0.0
        %v2656 = vand.u32 %v257, 4294901760
        %v2657 = vsub.f32 %v257, %v2656
        %v2658 = vand.u32 %v2657, 4294901760
        %2659 = vmatmul.mubr.f32.gmra.mrb[0].mxu0 %v2658
        %v2660 = vpop.f32.mrb[0].mxu0
        %v2661 = vadd.f32 %v2068, %v2660
        %v2662 = vpop.f32.mrb[0].mxu0
        %2663 = vdwg.mxu0
        %2664 = vmatprep.subr.mxu0 0.0
        %v2665 = vand.u32 %v258, 4294901760
        %v2666 = vsub.f32 %v258, %v2665
        %v2667 = vand.u32 %v2666, 4294901760
        %2668 = vmatpush1.msra.mxu0 %v2667
        %2669 = vmatprep.subr.mxu0 0.0
        %v2670 = vand.u32 %v259, 4294901760
        %v2671 = vsub.f32 %v259, %v2670
        %v2672 = vand.u32 %v2671, 4294901760
        %2673 = vmatpush1.msra.mxu0 %v2672
        %2674 = vmatprep.subr.mxu0 0.0
        %v2675 = vand.u32 %v260, 4294901760
        %v2676 = vsub.f32 %v260, %v2675
        %v2677 = vand.u32 %v2676, 4294901760
        %2678 = vmatpush1.msra.mxu0 %v2677
        %2679 = vmatprep.subr.mxu0 0.0
        %v2680 = vand.u32 %v261, 4294901760
        %v2681 = vsub.f32 %v261, %v2680
        %v2682 = vand.u32 %v2681, 4294901760
        %2683 = vmatpush1.msra.mxu0 %v2682
        %2684 = vmatprep.subr.mxu0 0.0
        %v2685 = vand.u32 %v262, 4294901760
        %v2686 = vsub.f32 %v262, %v2685
        %v2687 = vand.u32 %v2686, 4294901760
        %2688 = vmatpush1.msra.mxu0 %v2687
        %2689 = vmatprep.subr.mxu0 0.0
        %v2690 = vand.u32 %v263, 4294901760
        %v2691 = vsub.f32 %v263, %v2690
        %v2692 = vand.u32 %v2691, 4294901760
        %2693 = vmatpush1.msra.mxu0 %v2692
        %2694 = vmatprep.subr.mxu0 0.0
        %v2695 = vand.u32 %v264, 4294901760
        %v2696 = vsub.f32 %v264, %v2695
        %v2697 = vand.u32 %v2696, 4294901760
        %2698 = vmatpush1.msra.mxu0 %v2697
        %2699 = vmatprep.subr.mxu0 0.0
        %v2700 = vand.u32 %v265, 4294901760
        %v2701 = vsub.f32 %v265, %v2700
        %v2702 = vand.u32 %v2701, 4294901760
        %2703 = vmatpush1.msra.mxu0 %v2702
        %2704 = vmatprep.subr.mxu0 0.0
        %v2705 = vand.u32 %v266, 4294901760
        %v2706 = vsub.f32 %v266, %v2705
        %v2707 = vand.u32 %v2706, 4294901760
        %2708 = vmatpush1.msra.mxu0 %v2707
        %2709 = vmatprep.subr.mxu0 0.0
        %v2710 = vand.u32 %v267, 4294901760
        %v2711 = vsub.f32 %v267, %v2710
        %v2712 = vand.u32 %v2711, 4294901760
        %2713 = vmatpush1.msra.mxu0 %v2712
        %2714 = vmatprep.subr.mxu0 0.0
        %v2715 = vand.u32 %v268, 4294901760
        %v2716 = vsub.f32 %v268, %v2715
        %v2717 = vand.u32 %v2716, 4294901760
        %2718 = vmatpush1.msra.mxu0 %v2717
        %2719 = vmatprep.subr.mxu0 0.0
        %v2720 = vand.u32 %v269, 4294901760
        %v2721 = vsub.f32 %v269, %v2720
        %v2722 = vand.u32 %v2721, 4294901760
        %2723 = vmatpush1.msra.mxu0 %v2722
        %2724 = vmatprep.subr.mxu0 0.0
        %v2725 = vand.u32 %v270, 4294901760
        %v2726 = vsub.f32 %v270, %v2725
        %v2727 = vand.u32 %v2726, 4294901760
        %2728 = vmatpush1.msra.mxu0 %v2727
        %2729 = vmatprep.subr.mxu0 0.0
        %v2730 = vand.u32 %v271, 4294901760
        %v2731 = vsub.f32 %v271, %v2730
        %v2732 = vand.u32 %v2731, 4294901760
        %2733 = vmatpush1.msra.mxu0 %v2732
        %2734 = vmatprep.subr.mxu0 0.0
        %v2735 = vand.u32 %v272, 4294901760
        %v2736 = vsub.f32 %v272, %v2735
        %v2737 = vand.u32 %v2736, 4294901760
        %2738 = vmatpush1.msra.mxu0 %v2737
        %2739 = vmatprep.subr.mxu0 0.0
        %v2740 = vand.u32 %v273, 4294901760
        %v2741 = vsub.f32 %v273, %v2740
        %v2742 = vand.u32 %v2741, 4294901760
        %2743 = vmatpush1.msra.mxu0 %v2742
        %2744 = vmatprep.subr.mxu0 0.0
        %2745 = vmatpush1.msra.mxu0 0.0
        %2746 = vmatprep.subr.mxu0 0.0
        %2747 = vmatpush1.msra.mxu0 0.0
        %2748 = vmatprep.subr.mxu0 0.0
        %2749 = vmatpush1.msra.mxu0 0.0
        %2750 = vmatprep.subr.mxu0 0.0
        %2751 = vmatpush1.msra.mxu0 0.0
        %2752 = vmatprep.subr.mxu0 0.0
        %2753 = vmatpush1.msra.mxu0 0.0
        %2754 = vmatprep.subr.mxu0 0.0
        %2755 = vmatpush1.msra.mxu0 0.0
        %2756 = vmatprep.subr.mxu0 0.0
        %2757 = vmatpush1.msra.mxu0 0.0
        %2758 = vmatprep.subr.mxu0 0.0
        %2759 = vmatpush1.msra.mxu0 0.0
        %2760 = vmatprep.subr.mxu0 0.0
        %2761 = vmatpush1.msra.mxu0 0.0
        %2762 = vmatprep.subr.mxu0 0.0
        %2763 = vmatpush1.msra.mxu0 0.0
        %2764 = vmatprep.subr.mxu0 0.0
        %2765 = vmatpush1.msra.mxu0 0.0
        %2766 = vmatprep.subr.mxu0 0.0
        %2767 = vmatpush1.msra.mxu0 0.0
        %2768 = vmatprep.subr.mxu0 0.0
        %2769 = vmatpush1.msra.mxu0 0.0
        %2770 = vmatprep.subr.mxu0 0.0
        %2771 = vmatpush1.msra.mxu0 0.0
        %2772 = vmatprep.subr.mxu0 0.0
        %2773 = vmatpush1.msra.mxu0 0.0
        %2774 = vmatprep.subr.mxu0 0.0
        %2775 = vmatpush1.msra.mxu0 0.0
        %2776 = vmatprep.mubr.f32.mxu0 0.0
        %v2777 = vand.u32 %v194, 4294901760
        %2778 = vmatmul.mubr.f32.gmra.mrb[0].mxu0 %v2777
        %v2779 = vpop.f32.mrb[0].mxu0
        %v2780 = vadd.f32 %v2157, %v2779
        %v2781 = vpop.f32.mrb[0].mxu0
        %2782 = vmatprep.mubr.f32.mxu0 0.0
        %v2783 = vand.u32 %v195, 4294901760
        %2784 = vmatmul.mubr.f32.gmra.mrb[0].mxu0 %v2783
        %v2785 = vpop.f32.mrb[0].mxu0
        %v2786 = vadd.f32 %v2165, %v2785
        %v2787 = vpop.f32.mrb[0].mxu0
        %2788 = vmatprep.mubr.f32.mxu0 0.0
        %v2789 = vand.u32 %v196, 4294901760
        %2790 = vmatmul.mubr.f32.gmra.mrb[0].mxu0 %v2789
        %v2791 = vpop.f32.mrb[0].mxu0
        %v2792 = vadd.f32 %v2173, %v2791
        %v2793 = vpop.f32.mrb[0].mxu0
        %2794 = vmatprep.mubr.f32.mxu0 0.0
        %v2795 = vand.u32 %v197, 4294901760
        %2796 = vmatmul.mubr.f32.gmra.mrb[0].mxu0 %v2795
        %v2797 = vpop.f32.mrb[0].mxu0
        %v2798 = vadd.f32 %v2181, %v2797
        %v2799 = vpop.f32.mrb[0].mxu0
        %2800 = vmatprep.mubr.f32.mxu0 0.0
        %v2801 = vand.u32 %v198, 4294901760
        %2802 = vmatmul.mubr.f32.gmra.mrb[0].mxu0 %v2801
        %v2803 = vpop.f32.mrb[0].mxu0
        %v2804 = vadd.f32 %v2189, %v2803
        %v2805 = vpop.f32.mrb[0].mxu0
        %2806 = vmatprep.mubr.f32.mxu0 0.0
        %v2807 = vand.u32 %v199, 4294901760
        %2808 = vmatmul.mubr.f32.gmra.mrb[0].mxu0 %v2807
        %v2809 = vpop.f32.mrb[0].mxu0
        %v2810 = vadd.f32 %v2197, %v2809
        %v2811 = vpop.f32.mrb[0].mxu0
        %2812 = vmatprep.mubr.f32.mxu0 0.0
        %v2813 = vand.u32 %v200, 4294901760
        %2814 = vmatmul.mubr.f32.gmra.mrb[0].mxu0 %v2813
        %v2815 = vpop.f32.mrb[0].mxu0
        %v2816 = vadd.f32 %v2205, %v2815
        %v2817 = vpop.f32.mrb[0].mxu0
        %2818 = vmatprep.mubr.f32.mxu0 0.0
        %v2819 = vand.u32 %v201, 4294901760
        %2820 = vmatmul.mubr.f32.gmra.mrb[0].mxu0 %v2819
        %v2821 = vpop.f32.mrb[0].mxu0
        %v2822 = vadd.f32 %v2213, %v2821
        %v2823 = vpop.f32.mrb[0].mxu0
        %2824 = vmatprep.mubr.f32.mxu0 0.0
        %v2825 = vand.u32 %v202, 4294901760
        %2826 = vmatmul.mubr.f32.gmra.mrb[0].mxu0 %v2825
        %v2827 = vpop.f32.mrb[0].mxu0
        %v2828 = vadd.f32 %v2221, %v2827
        %v2829 = vpop.f32.mrb[0].mxu0
        %2830 = vmatprep.mubr.f32.mxu0 0.0
        %v2831 = vand.u32 %v203, 4294901760
        %2832 = vmatmul.mubr.f32.gmra.mrb[0].mxu0 %v2831
        %v2833 = vpop.f32.mrb[0].mxu0
        %v2834 = vadd.f32 %v2229, %v2833
        %v2835 = vpop.f32.mrb[0].mxu0
        %2836 = vmatprep.mubr.f32.mxu0 0.0
        %v2837 = vand.u32 %v204, 4294901760
        %2838 = vmatmul.mubr.f32.gmra.mrb[0].mxu0 %v2837
        %v2839 = vpop.f32.mrb[0].mxu0
        %v2840 = vadd.f32 %v2237, %v2839
        %v2841 = vpop.f32.mrb[0].mxu0
        %2842 = vmatprep.mubr.f32.mxu0 0.0
        %v2843 = vand.u32 %v205, 4294901760
        %2844 = vmatmul.mubr.f32.gmra.mrb[0].mxu0 %v2843
        %v2845 = vpop.f32.mrb[0].mxu0
        %v2846 = vadd.f32 %v2245, %v2845
        %v2847 = vpop.f32.mrb[0].mxu0
        %2848 = vmatprep.mubr.f32.mxu0 0.0
        %v2849 = vand.u32 %v206, 4294901760
        %2850 = vmatmul.mubr.f32.gmra.mrb[0].mxu0 %v2849
        %v2851 = vpop.f32.mrb[0].mxu0
        %v2852 = vadd.f32 %v2253, %v2851
        %v2853 = vpop.f32.mrb[0].mxu0
        %2854 = vmatprep.mubr.f32.mxu0 0.0
        %v2855 = vand.u32 %v207, 4294901760
        %2856 = vmatmul.mubr.f32.gmra.mrb[0].mxu0 %v2855
        %v2857 = vpop.f32.mrb[0].mxu0
        %v2858 = vadd.f32 %v2261, %v2857
        %v2859 = vpop.f32.mrb[0].mxu0
        %2860 = vmatprep.mubr.f32.mxu0 0.0
        %v2861 = vand.u32 %v208, 4294901760
        %2862 = vmatmul.mubr.f32.gmra.mrb[0].mxu0 %v2861
        %v2863 = vpop.f32.mrb[0].mxu0
        %v2864 = vadd.f32 %v2269, %v2863
        %v2865 = vpop.f32.mrb[0].mxu0
        %2866 = vmatprep.mubr.f32.mxu0 0.0
        %v2867 = vand.u32 %v209, 4294901760
        %2868 = vmatmul.mubr.f32.gmra.mrb[0].mxu0 %v2867
        %v2869 = vpop.f32.mrb[0].mxu0
        %v2870 = vadd.f32 %v2277, %v2869
        %v2871 = vpop.f32.mrb[0].mxu0
        %2872 = vmatprep.mubr.f32.mxu0 0.0
        %v2873 = vand.u32 %v210, 4294901760
        %2874 = vmatmul.mubr.f32.gmra.mrb[0].mxu0 %v2873
        %v2875 = vpop.f32.mrb[0].mxu0
        %v2876 = vadd.f32 %v2285, %v2875
        %v2877 = vpop.f32.mrb[0].mxu0
        %2878 = vmatprep.mubr.f32.mxu0 0.0
        %v2879 = vand.u32 %v211, 4294901760
        %2880 = vmatmul.mubr.f32.gmra.mrb[0].mxu0 %v2879
        %v2881 = vpop.f32.mrb[0].mxu0
        %v2882 = vadd.f32 %v2293, %v2881
        %v2883 = vpop.f32.mrb[0].mxu0
        %2884 = vmatprep.mubr.f32.mxu0 0.0
        %v2885 = vand.u32 %v212, 4294901760
        %2886 = vmatmul.mubr.f32.gmra.mrb[0].mxu0 %v2885
        %v2887 = vpop.f32.mrb[0].mxu0
        %v2888 = vadd.f32 %v2301, %v2887
        %v2889 = vpop.f32.mrb[0].mxu0
        %2890 = vmatprep.mubr.f32.mxu0 0.0
        %v2891 = vand.u32 %v213, 4294901760
        %2892 = vmatmul.mubr.f32.gmra.mrb[0].mxu0 %v2891
        %v2893 = vpop.f32.mrb[0].mxu0
        %v2894 = vadd.f32 %v2309, %v2893
        %v2895 = vpop.f32.mrb[0].mxu0
        %2896 = vmatprep.mubr.f32.mxu0 0.0
        %v2897 = vand.u32 %v214, 4294901760
        %2898 = vmatmul.mubr.f32.gmra.mrb[0].mxu0 %v2897
        %v2899 = vpop.f32.mrb[0].mxu0
        %v2900 = vadd.f32 %v2317, %v2899
        %v2901 = vpop.f32.mrb[0].mxu0
        %2902 = vmatprep.mubr.f32.mxu0 0.0
        %v2903 = vand.u32 %v215, 4294901760
        %2904 = vmatmul.mubr.f32.gmra.mrb[0].mxu0 %v2903
        %v2905 = vpop.f32.mrb[0].mxu0
        %v2906 = vadd.f32 %v2325, %v2905
        %v2907 = vpop.f32.mrb[0].mxu0
        %2908 = vmatprep.mubr.f32.mxu0 0.0
        %v2909 = vand.u32 %v216, 4294901760
        %2910 = vmatmul.mubr.f32.gmra.mrb[0].mxu0 %v2909
        %v2911 = vpop.f32.mrb[0].mxu0
        %v2912 = vadd.f32 %v2333, %v2911
        %v2913 = vpop.f32.mrb[0].mxu0
        %2914 = vmatprep.mubr.f32.mxu0 0.0
        %v2915 = vand.u32 %v217, 4294901760
        %2916 = vmatmul.mubr.f32.gmra.mrb[0].mxu0 %v2915
        %v2917 = vpop.f32.mrb[0].mxu0
        %v2918 = vadd.f32 %v2341, %v2917
        %v2919 = vpop.f32.mrb[0].mxu0
        %2920 = vmatprep.mubr.f32.mxu0 0.0
        %v2921 = vand.u32 %v218, 4294901760
        %2922 = vmatmul.mubr.f32.gmra.mrb[0].mxu0 %v2921
        %v2923 = vpop.f32.mrb[0].mxu0
        %v2924 = vadd.f32 %v2349, %v2923
        %v2925 = vpop.f32.mrb[0].mxu0
        %2926 = vmatprep.mubr.f32.mxu0 0.0
        %v2927 = vand.u32 %v219, 4294901760
        %2928 = vmatmul.mubr.f32.gmra.mrb[0].mxu0 %v2927
        %v2929 = vpop.f32.mrb[0].mxu0
        %v2930 = vadd.f32 %v2357, %v2929
        %v2931 = vpop.f32.mrb[0].mxu0
        %2932 = vmatprep.mubr.f32.mxu0 0.0
        %v2933 = vand.u32 %v220, 4294901760
        %2934 = vmatmul.mubr.f32.gmra.mrb[0].mxu0 %v2933
        %v2935 = vpop.f32.mrb[0].mxu0
        %v2936 = vadd.f32 %v2365, %v2935
        %v2937 = vpop.f32.mrb[0].mxu0
        %2938 = vmatprep.mubr.f32.mxu0 0.0
        %v2939 = vand.u32 %v221, 4294901760
        %2940 = vmatmul.mubr.f32.gmra.mrb[0].mxu0 %v2939
        %v2941 = vpop.f32.mrb[0].mxu0
        %v2942 = vadd.f32 %v2373, %v2941
        %v2943 = vpop.f32.mrb[0].mxu0
        %2944 = vmatprep.mubr.f32.mxu0 0.0
        %v2945 = vand.u32 %v222, 4294901760
        %2946 = vmatmul.mubr.f32.gmra.mrb[0].mxu0 %v2945
        %v2947 = vpop.f32.mrb[0].mxu0
        %v2948 = vadd.f32 %v2381, %v2947
        %v2949 = vpop.f32.mrb[0].mxu0
        %2950 = vmatprep.mubr.f32.mxu0 0.0
        %v2951 = vand.u32 %v223, 4294901760
        %2952 = vmatmul.mubr.f32.gmra.mrb[0].mxu0 %v2951
        %v2953 = vpop.f32.mrb[0].mxu0
        %v2954 = vadd.f32 %v2389, %v2953
        %v2955 = vpop.f32.mrb[0].mxu0
        %2956 = vmatprep.mubr.f32.mxu0 0.0
        %v2957 = vand.u32 %v224, 4294901760
        %2958 = vmatmul.mubr.f32.gmra.mrb[0].mxu0 %v2957
        %v2959 = vpop.f32.mrb[0].mxu0
        %v2960 = vadd.f32 %v2397, %v2959
        %v2961 = vpop.f32.mrb[0].mxu0
        %2962 = vmatprep.mubr.f32.mxu0 0.0
        %v2963 = vand.u32 %v225, 4294901760
        %2964 = vmatmul.mubr.f32.gmra.mrb[0].mxu0 %v2963
        %v2965 = vpop.f32.mrb[0].mxu0
        %v2966 = vadd.f32 %v2405, %v2965
        %v2967 = vpop.f32.mrb[0].mxu0
        %2968 = vmatprep.mubr.f32.mxu0 0.0
        %v2969 = vand.u32 %v226, 4294901760
        %2970 = vmatmul.mubr.f32.gmra.mrb[0].mxu0 %v2969
        %v2971 = vpop.f32.mrb[0].mxu0
        %v2972 = vadd.f32 %v2413, %v2971
        %v2973 = vpop.f32.mrb[0].mxu0
        %2974 = vmatprep.mubr.f32.mxu0 0.0
        %v2975 = vand.u32 %v227, 4294901760
        %2976 = vmatmul.mubr.f32.gmra.mrb[0].mxu0 %v2975
        %v2977 = vpop.f32.mrb[0].mxu0
        %v2978 = vadd.f32 %v2421, %v2977
        %v2979 = vpop.f32.mrb[0].mxu0
        %2980 = vmatprep.mubr.f32.mxu0 0.0
        %v2981 = vand.u32 %v228, 4294901760
        %2982 = vmatmul.mubr.f32.gmra.mrb[0].mxu0 %v2981
        %v2983 = vpop.f32.mrb[0].mxu0
        %v2984 = vadd.f32 %v2429, %v2983
        %v2985 = vpop.f32.mrb[0].mxu0
        %2986 = vmatprep.mubr.f32.mxu0 0.0
        %v2987 = vand.u32 %v229, 4294901760
        %2988 = vmatmul.mubr.f32.gmra.mrb[0].mxu0 %v2987
        %v2989 = vpop.f32.mrb[0].mxu0
        %v2990 = vadd.f32 %v2437, %v2989
        %v2991 = vpop.f32.mrb[0].mxu0
        %2992 = vmatprep.mubr.f32.mxu0 0.0
        %v2993 = vand.u32 %v230, 4294901760
        %2994 = vmatmul.mubr.f32.gmra.mrb[0].mxu0 %v2993
        %v2995 = vpop.f32.mrb[0].mxu0
        %v2996 = vadd.f32 %v2445, %v2995
        %v2997 = vpop.f32.mrb[0].mxu0
        %2998 = vmatprep.mubr.f32.mxu0 0.0
        %v2999 = vand.u32 %v231, 4294901760
        %3000 = vmatmul.mubr.f32.gmra.mrb[0].mxu0 %v2999
        %v3001 = vpop.f32.mrb[0].mxu0
        %v3002 = vadd.f32 %v2453, %v3001
        %v3003 = vpop.f32.mrb[0].mxu0
        %3004 = vmatprep.mubr.f32.mxu0 0.0
        %v3005 = vand.u32 %v232, 4294901760
        %3006 = vmatmul.mubr.f32.gmra.mrb[0].mxu0 %v3005
        %v3007 = vpop.f32.mrb[0].mxu0
        %v3008 = vadd.f32 %v2461, %v3007
        %v3009 = vpop.f32.mrb[0].mxu0
        %3010 = vmatprep.mubr.f32.mxu0 0.0
        %v3011 = vand.u32 %v233, 4294901760
        %3012 = vmatmul.mubr.f32.gmra.mrb[0].mxu0 %v3011
        %v3013 = vpop.f32.mrb[0].mxu0
        %v3014 = vadd.f32 %v2469, %v3013
        %v3015 = vpop.f32.mrb[0].mxu0
        %3016 = vmatprep.mubr.f32.mxu0 0.0
        %v3017 = vand.u32 %v234, 4294901760
        %3018 = vmatmul.mubr.f32.gmra.mrb[0].mxu0 %v3017
        %v3019 = vpop.f32.mrb[0].mxu0
        %v3020 = vadd.f32 %v2477, %v3019
        %v3021 = vpop.f32.mrb[0].mxu0
        %3022 = vmatprep.mubr.f32.mxu0 0.0
        %v3023 = vand.u32 %v235, 4294901760
        %3024 = vmatmul.mubr.f32.gmra.mrb[0].mxu0 %v3023
        %v3025 = vpop.f32.mrb[0].mxu0
        %v3026 = vadd.f32 %v2485, %v3025
        %v3027 = vpop.f32.mrb[0].mxu0
        %3028 = vmatprep.mubr.f32.mxu0 0.0
        %v3029 = vand.u32 %v236, 4294901760
        %3030 = vmatmul.mubr.f32.gmra.mrb[0].mxu0 %v3029
        %v3031 = vpop.f32.mrb[0].mxu0
        %v3032 = vadd.f32 %v2493, %v3031
        %v3033 = vpop.f32.mrb[0].mxu0
        %3034 = vmatprep.mubr.f32.mxu0 0.0
        %v3035 = vand.u32 %v237, 4294901760
        %3036 = vmatmul.mubr.f32.gmra.mrb[0].mxu0 %v3035
        %v3037 = vpop.f32.mrb[0].mxu0
        %v3038 = vadd.f32 %v2501, %v3037
        %v3039 = vpop.f32.mrb[0].mxu0
        %3040 = vmatprep.mubr.f32.mxu0 0.0
        %v3041 = vand.u32 %v238, 4294901760
        %3042 = vmatmul.mubr.f32.gmra.mrb[0].mxu0 %v3041
        %v3043 = vpop.f32.mrb[0].mxu0
        %v3044 = vadd.f32 %v2509, %v3043
        %v3045 = vpop.f32.mrb[0].mxu0
        %3046 = vmatprep.mubr.f32.mxu0 0.0
        %v3047 = vand.u32 %v239, 4294901760
        %3048 = vmatmul.mubr.f32.gmra.mrb[0].mxu0 %v3047
        %v3049 = vpop.f32.mrb[0].mxu0
        %v3050 = vadd.f32 %v2517, %v3049
        %v3051 = vpop.f32.mrb[0].mxu0
        %3052 = vmatprep.mubr.f32.mxu0 0.0
        %v3053 = vand.u32 %v240, 4294901760
        %3054 = vmatmul.mubr.f32.gmra.mrb[0].mxu0 %v3053
        %v3055 = vpop.f32.mrb[0].mxu0
        %v3056 = vadd.f32 %v2525, %v3055
        %v3057 = vpop.f32.mrb[0].mxu0
        %3058 = vmatprep.mubr.f32.mxu0 0.0
        %v3059 = vand.u32 %v241, 4294901760
        %3060 = vmatmul.mubr.f32.gmra.mrb[0].mxu0 %v3059
        %v3061 = vpop.f32.mrb[0].mxu0
        %v3062 = vadd.f32 %v2533, %v3061
        %v3063 = vpop.f32.mrb[0].mxu0
        %3064 = vmatprep.mubr.f32.mxu0 0.0
        %v3065 = vand.u32 %v242, 4294901760
        %3066 = vmatmul.mubr.f32.gmra.mrb[0].mxu0 %v3065
        %v3067 = vpop.f32.mrb[0].mxu0
        %v3068 = vadd.f32 %v2541, %v3067
        %v3069 = vpop.f32.mrb[0].mxu0
        %3070 = vmatprep.mubr.f32.mxu0 0.0
        %v3071 = vand.u32 %v243, 4294901760
        %3072 = vmatmul.mubr.f32.gmra.mrb[0].mxu0 %v3071
        %v3073 = vpop.f32.mrb[0].mxu0
        %v3074 = vadd.f32 %v2549, %v3073
        %v3075 = vpop.f32.mrb[0].mxu0
        %3076 = vmatprep.mubr.f32.mxu0 0.0
        %v3077 = vand.u32 %v244, 4294901760
        %3078 = vmatmul.mubr.f32.gmra.mrb[0].mxu0 %v3077
        %v3079 = vpop.f32.mrb[0].mxu0
        %v3080 = vadd.f32 %v2557, %v3079
        %v3081 = vpop.f32.mrb[0].mxu0
        %3082 = vmatprep.mubr.f32.mxu0 0.0
        %v3083 = vand.u32 %v245, 4294901760
        %3084 = vmatmul.mubr.f32.gmra.mrb[0].mxu0 %v3083
        %v3085 = vpop.f32.mrb[0].mxu0
        %v3086 = vadd.f32 %v2565, %v3085
        %v3087 = vpop.f32.mrb[0].mxu0
        %3088 = vmatprep.mubr.f32.mxu0 0.0
        %v3089 = vand.u32 %v246, 4294901760
        %3090 = vmatmul.mubr.f32.gmra.mrb[0].mxu0 %v3089
        %v3091 = vpop.f32.mrb[0].mxu0
        %v3092 = vadd.f32 %v2573, %v3091
        %v3093 = vpop.f32.mrb[0].mxu0
        %3094 = vmatprep.mubr.f32.mxu0 0.0
        %v3095 = vand.u32 %v247, 4294901760
        %3096 = vmatmul.mubr.f32.gmra.mrb[0].mxu0 %v3095
        %v3097 = vpop.f32.mrb[0].mxu0
        %v3098 = vadd.f32 %v2581, %v3097
        %v3099 = vpop.f32.mrb[0].mxu0
        %3100 = vmatprep.mubr.f32.mxu0 0.0
        %v3101 = vand.u32 %v248, 4294901760
        %3102 = vmatmul.mubr.f32.gmra.mrb[0].mxu0 %v3101
        %v3103 = vpop.f32.mrb[0].mxu0
        %v3104 = vadd.f32 %v2589, %v3103
        %v3105 = vpop.f32.mrb[0].mxu0
        %3106 = vmatprep.mubr.f32.mxu0 0.0
        %v3107 = vand.u32 %v249, 4294901760
        %3108 = vmatmul.mubr.f32.gmra.mrb[0].mxu0 %v3107
        %v3109 = vpop.f32.mrb[0].mxu0
        %v3110 = vadd.f32 %v2597, %v3109
        %v3111 = vpop.f32.mrb[0].mxu0
        %3112 = vmatprep.mubr.f32.mxu0 0.0
        %v3113 = vand.u32 %v250, 4294901760
        %3114 = vmatmul.mubr.f32.gmra.mrb[0].mxu0 %v3113
        %v3115 = vpop.f32.mrb[0].mxu0
        %v3116 = vadd.f32 %v2605, %v3115
        %v3117 = vpop.f32.mrb[0].mxu0
        %3118 = vmatprep.mubr.f32.mxu0 0.0
        %v3119 = vand.u32 %v251, 4294901760
        %3120 = vmatmul.mubr.f32.gmra.mrb[0].mxu0 %v3119
        %v3121 = vpop.f32.mrb[0].mxu0
        %v3122 = vadd.f32 %v2613, %v3121
        %v3123 = vpop.f32.mrb[0].mxu0
        %3124 = vmatprep.mubr.f32.mxu0 0.0
        %v3125 = vand.u32 %v252, 4294901760
        %3126 = vmatmul.mubr.f32.gmra.mrb[0].mxu0 %v3125
        %v3127 = vpop.f32.mrb[0].mxu0
        %v3128 = vadd.f32 %v2621, %v3127
        %v3129 = vpop.f32.mrb[0].mxu0
        %3130 = vmatprep.mubr.f32.mxu0 0.0
        %v3131 = vand.u32 %v253, 4294901760
        %3132 = vmatmul.mubr.f32.gmra.mrb[0].mxu0 %v3131
        %v3133 = vpop.f32.mrb[0].mxu0
        %v3134 = vadd.f32 %v2629, %v3133
        %v3135 = vpop.f32.mrb[0].mxu0
        %3136 = vmatprep.mubr.f32.mxu0 0.0
        %v3137 = vand.u32 %v254, 4294901760
        %3138 = vmatmul.mubr.f32.gmra.mrb[0].mxu0 %v3137
        %v3139 = vpop.f32.mrb[0].mxu0
        %v3140 = vadd.f32 %v2637, %v3139
        %v3141 = vpop.f32.mrb[0].mxu0
        %3142 = vmatprep.mubr.f32.mxu0 0.0
        %v3143 = vand.u32 %v255, 4294901760
        %3144 = vmatmul.mubr.f32.gmra.mrb[0].mxu0 %v3143
        %v3145 = vpop.f32.mrb[0].mxu0
        %v3146 = vadd.f32 %v2645, %v3145
        %v3147 = vpop.f32.mrb[0].mxu0
        %3148 = vmatprep.mubr.f32.mxu0 0.0
        %v3149 = vand.u32 %v256, 4294901760
        %3150 = vmatmul.mubr.f32.gmra.mrb[0].mxu0 %v3149
        %v3151 = vpop.f32.mrb[0].mxu0
        %v3152 = vadd.f32 %v2653, %v3151
        %v3153 = vpop.f32.mrb[0].mxu0
        %3154 = vmatprep.mubr.f32.mxu0 0.0
        %v3155 = vand.u32 %v257, 4294901760
        %3156 = vmatmul.mubr.f32.gmra.mrb[0].mxu0 %v3155
        %v3157 = vpop.f32.mrb[0].mxu0
        %v3158 = vadd.f32 %v2661, %v3157
        %v3159 = vpop.f32.mrb[0].mxu0
        %3160 = vdwg.mxu0
        %3161 = vmatprep.subr.mxu0 0.0
        %v3162 = vand.u32 %v258, 4294901760
        %3163 = vmatpush1.msra.mxu0 %v3162
        %3164 = vmatprep.subr.mxu0 0.0
        %v3165 = vand.u32 %v259, 4294901760
        %3166 = vmatpush1.msra.mxu0 %v3165
        %3167 = vmatprep.subr.mxu0 0.0
        %v3168 = vand.u32 %v260, 4294901760
        %3169 = vmatpush1.msra.mxu0 %v3168
        %3170 = vmatprep.subr.mxu0 0.0
        %v3171 = vand.u32 %v261, 4294901760
        %3172 = vmatpush1.msra.mxu0 %v3171
        %3173 = vmatprep.subr.mxu0 0.0
        %v3174 = vand.u32 %v262, 4294901760
        %3175 = vmatpush1.msra.mxu0 %v3174
        %3176 = vmatprep.subr.mxu0 0.0
        %v3177 = vand.u32 %v263, 4294901760
        %3178 = vmatpush1.msra.mxu0 %v3177
        %3179 = vmatprep.subr.mxu0 0.0
        %v3180 = vand.u32 %v264, 4294901760
        %3181 = vmatpush1.msra.mxu0 %v3180
        %3182 = vmatprep.subr.mxu0 0.0
        %v3183 = vand.u32 %v265, 4294901760
        %3184 = vmatpush1.msra.mxu0 %v3183
        %3185 = vmatprep.subr.mxu0 0.0
        %v3186 = vand.u32 %v266, 4294901760
        %3187 = vmatpush1.msra.mxu0 %v3186
        %3188 = vmatprep.subr.mxu0 0.0
        %v3189 = vand.u32 %v267, 4294901760
        %3190 = vmatpush1.msra.mxu0 %v3189
        %3191 = vmatprep.subr.mxu0 0.0
        %v3192 = vand.u32 %v268, 4294901760
        %3193 = vmatpush1.msra.mxu0 %v3192
        %3194 = vmatprep.subr.mxu0 0.0
        %v3195 = vand.u32 %v269, 4294901760
        %3196 = vmatpush1.msra.mxu0 %v3195
        %3197 = vmatprep.subr.mxu0 0.0
        %v3198 = vand.u32 %v270, 4294901760
        %3199 = vmatpush1.msra.mxu0 %v3198
        %3200 = vmatprep.subr.mxu0 0.0
        %v3201 = vand.u32 %v271, 4294901760
        %3202 = vmatpush1.msra.mxu0 %v3201
        %3203 = vmatprep.subr.mxu0 0.0
        %v3204 = vand.u32 %v272, 4294901760
        %3205 = vmatpush1.msra.mxu0 %v3204
        %3206 = vmatprep.subr.mxu0 0.0
        %v3207 = vand.u32 %v273, 4294901760
        %3208 = vmatpush1.msra.mxu0 %v3207
        %3209 = vmatprep.subr.mxu0 0.0
        %3210 = vmatpush1.msra.mxu0 0.0
        %3211 = vmatprep.subr.mxu0 0.0
        %3212 = vmatpush1.msra.mxu0 0.0
        %3213 = vmatprep.subr.mxu0 0.0
        %3214 = vmatpush1.msra.mxu0 0.0
        %3215 = vmatprep.subr.mxu0 0.0
        %3216 = vmatpush1.msra.mxu0 0.0
        %3217 = vmatprep.subr.mxu0 0.0
        %3218 = vmatpush1.msra.mxu0 0.0
        %3219 = vmatprep.subr.mxu0 0.0
        %3220 = vmatpush1.msra.mxu0 0.0
        %3221 = vmatprep.subr.mxu0 0.0
        %3222 = vmatpush1.msra.mxu0 0.0
        %3223 = vmatprep.subr.mxu0 0.0
        %3224 = vmatpush1.msra.mxu0 0.0
        %3225 = vmatprep.subr.mxu0 0.0
        %3226 = vmatpush1.msra.mxu0 0.0
        %3227 = vmatprep.subr.mxu0 0.0
        %3228 = vmatpush1.msra.mxu0 0.0
        %3229 = vmatprep.subr.mxu0 0.0
        %3230 = vmatpush1.msra.mxu0 0.0
        %3231 = vmatprep.subr.mxu0 0.0
        %3232 = vmatpush1.msra.mxu0 0.0
        %3233 = vmatprep.subr.mxu0 0.0
        %3234 = vmatpush1.msra.mxu0 0.0
        %3235 = vmatprep.subr.mxu0 0.0
        %3236 = vmatpush1.msra.mxu0 0.0
        %3237 = vmatprep.subr.mxu0 0.0
        %3238 = vmatpush1.msra.mxu0 0.0
        %3239 = vmatprep.subr.mxu0 0.0
        %3240 = vmatpush1.msra.mxu0 0.0
        %3241 = vmatprep.mubr.f32.mxu0 0.0
        %v3242 = vand.u32 %v194, 4294901760
        %3243 = vmatmul.mubr.f32.gmra.mrb[0].mxu0 %v3242
        %v3244 = vpop.f32.mrb[0].mxu0
        %v3245 = vadd.f32 %v2780, %v3244
        %v3246 = vpop.f32.mrb[0].mxu0
        %3247 = vmatprep.mubr.f32.mxu0 0.0
        %v3248 = vand.u32 %v195, 4294901760
        %3249 = vmatmul.mubr.f32.gmra.mrb[0].mxu0 %v3248
        %v3250 = vpop.f32.mrb[0].mxu0
        %v3251 = vadd.f32 %v2786, %v3250
        %v3252 = vpop.f32.mrb[0].mxu0
        %3253 = vmatprep.mubr.f32.mxu0 0.0
        %v3254 = vand.u32 %v196, 4294901760
        %3255 = vmatmul.mubr.f32.gmra.mrb[0].mxu0 %v3254
        %v3256 = vpop.f32.mrb[0].mxu0
        %v3257 = vadd.f32 %v2792, %v3256
        %v3258 = vpop.f32.mrb[0].mxu0
        %3259 = vmatprep.mubr.f32.mxu0 0.0
        %v3260 = vand.u32 %v197, 4294901760
        %3261 = vmatmul.mubr.f32.gmra.mrb[0].mxu0 %v3260
        %v3262 = vpop.f32.mrb[0].mxu0
        %v3263 = vadd.f32 %v2798, %v3262
        %v3264 = vpop.f32.mrb[0].mxu0
        %3265 = vmatprep.mubr.f32.mxu0 0.0
        %v3266 = vand.u32 %v198, 4294901760
        %3267 = vmatmul.mubr.f32.gmra.mrb[0].mxu0 %v3266
        %v3268 = vpop.f32.mrb[0].mxu0
        %v3269 = vadd.f32 %v2804, %v3268
        %v3270 = vpop.f32.mrb[0].mxu0
        %3271 = vmatprep.mubr.f32.mxu0 0.0
        %v3272 = vand.u32 %v199, 4294901760
        %3273 = vmatmul.mubr.f32.gmra.mrb[0].mxu0 %v3272
        %v3274 = vpop.f32.mrb[0].mxu0
        %v3275 = vadd.f32 %v2810, %v3274
        %v3276 = vpop.f32.mrb[0].mxu0
        %3277 = vmatprep.mubr.f32.mxu0 0.0
        %v3278 = vand.u32 %v200, 4294901760
        %3279 = vmatmul.mubr.f32.gmra.mrb[0].mxu0 %v3278
        %v3280 = vpop.f32.mrb[0].mxu0
        %v3281 = vadd.f32 %v2816, %v3280
        %v3282 = vpop.f32.mrb[0].mxu0
        %3283 = vmatprep.mubr.f32.mxu0 0.0
        %v3284 = vand.u32 %v201, 4294901760
        %3285 = vmatmul.mubr.f32.gmra.mrb[0].mxu0 %v3284
        %v3286 = vpop.f32.mrb[0].mxu0
        %v3287 = vadd.f32 %v2822, %v3286
        %v3288 = vpop.f32.mrb[0].mxu0
        %3289 = vmatprep.mubr.f32.mxu0 0.0
        %v3290 = vand.u32 %v202, 4294901760
        %3291 = vmatmul.mubr.f32.gmra.mrb[0].mxu0 %v3290
        %v3292 = vpop.f32.mrb[0].mxu0
        %v3293 = vadd.f32 %v2828, %v3292
        %v3294 = vpop.f32.mrb[0].mxu0
        %3295 = vmatprep.mubr.f32.mxu0 0.0
        %v3296 = vand.u32 %v203, 4294901760
        %3297 = vmatmul.mubr.f32.gmra.mrb[0].mxu0 %v3296
        %v3298 = vpop.f32.mrb[0].mxu0
        %v3299 = vadd.f32 %v2834, %v3298
        %v3300 = vpop.f32.mrb[0].mxu0
        %3301 = vmatprep.mubr.f32.mxu0 0.0
        %v3302 = vand.u32 %v204, 4294901760
        %3303 = vmatmul.mubr.f32.gmra.mrb[0].mxu0 %v3302
        %v3304 = vpop.f32.mrb[0].mxu0
        %v3305 = vadd.f32 %v2840, %v3304
        %v3306 = vpop.f32.mrb[0].mxu0
        %3307 = vmatprep.mubr.f32.mxu0 0.0
        %v3308 = vand.u32 %v205, 4294901760
        %3309 = vmatmul.mubr.f32.gmra.mrb[0].mxu0 %v3308
        %v3310 = vpop.f32.mrb[0].mxu0
        %v3311 = vadd.f32 %v2846, %v3310
        %v3312 = vpop.f32.mrb[0].mxu0
        %3313 = vmatprep.mubr.f32.mxu0 0.0
        %v3314 = vand.u32 %v206, 4294901760
        %3315 = vmatmul.mubr.f32.gmra.mrb[0].mxu0 %v3314
        %v3316 = vpop.f32.mrb[0].mxu0
        %v3317 = vadd.f32 %v2852, %v3316
        %v3318 = vpop.f32.mrb[0].mxu0
        %3319 = vmatprep.mubr.f32.mxu0 0.0
        %v3320 = vand.u32 %v207, 4294901760
        %3321 = vmatmul.mubr.f32.gmra.mrb[0].mxu0 %v3320
        %v3322 = vpop.f32.mrb[0].mxu0
        %v3323 = vadd.f32 %v2858, %v3322
        %v3324 = vpop.f32.mrb[0].mxu0
        %3325 = vmatprep.mubr.f32.mxu0 0.0
        %v3326 = vand.u32 %v208, 4294901760
        %3327 = vmatmul.mubr.f32.gmra.mrb[0].mxu0 %v3326
        %v3328 = vpop.f32.mrb[0].mxu0
        %v3329 = vadd.f32 %v2864, %v3328
        %v3330 = vpop.f32.mrb[0].mxu0
        %3331 = vmatprep.mubr.f32.mxu0 0.0
        %v3332 = vand.u32 %v209, 4294901760
        %3333 = vmatmul.mubr.f32.gmra.mrb[0].mxu0 %v3332
        %v3334 = vpop.f32.mrb[0].mxu0
        %v3335 = vadd.f32 %v2870, %v3334
        %v3336 = vpop.f32.mrb[0].mxu0
        %3337 = vmatprep.mubr.f32.mxu0 0.0
        %v3338 = vand.u32 %v210, 4294901760
        %3339 = vmatmul.mubr.f32.gmra.mrb[0].mxu0 %v3338
        %v3340 = vpop.f32.mrb[0].mxu0
        %v3341 = vadd.f32 %v2876, %v3340
        %v3342 = vpop.f32.mrb[0].mxu0
        %3343 = vmatprep.mubr.f32.mxu0 0.0
        %v3344 = vand.u32 %v211, 4294901760
        %3345 = vmatmul.mubr.f32.gmra.mrb[0].mxu0 %v3344
        %v3346 = vpop.f32.mrb[0].mxu0
        %v3347 = vadd.f32 %v2882, %v3346
        %v3348 = vpop.f32.mrb[0].mxu0
        %3349 = vmatprep.mubr.f32.mxu0 0.0
        %v3350 = vand.u32 %v212, 4294901760
        %3351 = vmatmul.mubr.f32.gmra.mrb[0].mxu0 %v3350
        %v3352 = vpop.f32.mrb[0].mxu0
        %v3353 = vadd.f32 %v2888, %v3352
        %v3354 = vpop.f32.mrb[0].mxu0
        %3355 = vmatprep.mubr.f32.mxu0 0.0
        %v3356 = vand.u32 %v213, 4294901760
        %3357 = vmatmul.mubr.f32.gmra.mrb[0].mxu0 %v3356
        %v3358 = vpop.f32.mrb[0].mxu0
        %v3359 = vadd.f32 %v2894, %v3358
        %v3360 = vpop.f32.mrb[0].mxu0
        %3361 = vmatprep.mubr.f32.mxu0 0.0
        %v3362 = vand.u32 %v214, 4294901760
        %3363 = vmatmul.mubr.f32.gmra.mrb[0].mxu0 %v3362
        %v3364 = vpop.f32.mrb[0].mxu0
        %v3365 = vadd.f32 %v2900, %v3364
        %v3366 = vpop.f32.mrb[0].mxu0
        %3367 = vmatprep.mubr.f32.mxu0 0.0
        %v3368 = vand.u32 %v215, 4294901760
        %3369 = vmatmul.mubr.f32.gmra.mrb[0].mxu0 %v3368
        %v3370 = vpop.f32.mrb[0].mxu0
        %v3371 = vadd.f32 %v2906, %v3370
        %v3372 = vpop.f32.mrb[0].mxu0
        %3373 = vmatprep.mubr.f32.mxu0 0.0
        %v3374 = vand.u32 %v216, 4294901760
        %3375 = vmatmul.mubr.f32.gmra.mrb[0].mxu0 %v3374
        %v3376 = vpop.f32.mrb[0].mxu0
        %v3377 = vadd.f32 %v2912, %v3376
        %v3378 = vpop.f32.mrb[0].mxu0
        %3379 = vmatprep.mubr.f32.mxu0 0.0
        %v3380 = vand.u32 %v217, 4294901760
        %3381 = vmatmul.mubr.f32.gmra.mrb[0].mxu0 %v3380
        %v3382 = vpop.f32.mrb[0].mxu0
        %v3383 = vadd.f32 %v2918, %v3382
        %v3384 = vpop.f32.mrb[0].mxu0
        %3385 = vmatprep.mubr.f32.mxu0 0.0
        %v3386 = vand.u32 %v218, 4294901760
        %3387 = vmatmul.mubr.f32.gmra.mrb[0].mxu0 %v3386
        %v3388 = vpop.f32.mrb[0].mxu0
        %v3389 = vadd.f32 %v2924, %v3388
        %v3390 = vpop.f32.mrb[0].mxu0
        %3391 = vmatprep.mubr.f32.mxu0 0.0
        %v3392 = vand.u32 %v219, 4294901760
        %3393 = vmatmul.mubr.f32.gmra.mrb[0].mxu0 %v3392
        %v3394 = vpop.f32.mrb[0].mxu0
        %v3395 = vadd.f32 %v2930, %v3394
        %v3396 = vpop.f32.mrb[0].mxu0
        %3397 = vmatprep.mubr.f32.mxu0 0.0
        %v3398 = vand.u32 %v220, 4294901760
        %3399 = vmatmul.mubr.f32.gmra.mrb[0].mxu0 %v3398
        %v3400 = vpop.f32.mrb[0].mxu0
        %v3401 = vadd.f32 %v2936, %v3400
        %v3402 = vpop.f32.mrb[0].mxu0
        %3403 = vmatprep.mubr.f32.mxu0 0.0
        %v3404 = vand.u32 %v221, 4294901760
        %3405 = vmatmul.mubr.f32.gmra.mrb[0].mxu0 %v3404
        %v3406 = vpop.f32.mrb[0].mxu0
        %v3407 = vadd.f32 %v2942, %v3406
        %v3408 = vpop.f32.mrb[0].mxu0
        %3409 = vmatprep.mubr.f32.mxu0 0.0
        %v3410 = vand.u32 %v222, 4294901760
        %3411 = vmatmul.mubr.f32.gmra.mrb[0].mxu0 %v3410
        %v3412 = vpop.f32.mrb[0].mxu0
        %v3413 = vadd.f32 %v2948, %v3412
        %v3414 = vpop.f32.mrb[0].mxu0
        %3415 = vmatprep.mubr.f32.mxu0 0.0
        %v3416 = vand.u32 %v223, 4294901760
        %3417 = vmatmul.mubr.f32.gmra.mrb[0].mxu0 %v3416
        %v3418 = vpop.f32.mrb[0].mxu0
        %v3419 = vadd.f32 %v2954, %v3418
        %v3420 = vpop.f32.mrb[0].mxu0
        %3421 = vmatprep.mubr.f32.mxu0 0.0
        %v3422 = vand.u32 %v224, 4294901760
        %3423 = vmatmul.mubr.f32.gmra.mrb[0].mxu0 %v3422
        %v3424 = vpop.f32.mrb[0].mxu0
        %v3425 = vadd.f32 %v2960, %v3424
        %v3426 = vpop.f32.mrb[0].mxu0
        %3427 = vmatprep.mubr.f32.mxu0 0.0
        %v3428 = vand.u32 %v225, 4294901760
        %3429 = vmatmul.mubr.f32.gmra.mrb[0].mxu0 %v3428
        %v3430 = vpop.f32.mrb[0].mxu0
        %v3431 = vadd.f32 %v2966, %v3430
        %v3432 = vpop.f32.mrb[0].mxu0
        %3433 = vmatprep.mubr.f32.mxu0 0.0
        %v3434 = vand.u32 %v226, 4294901760
        %3435 = vmatmul.mubr.f32.gmra.mrb[0].mxu0 %v3434
        %v3436 = vpop.f32.mrb[0].mxu0
        %v3437 = vadd.f32 %v2972, %v3436
        %v3438 = vpop.f32.mrb[0].mxu0
        %3439 = vmatprep.mubr.f32.mxu0 0.0
        %v3440 = vand.u32 %v227, 4294901760
        %3441 = vmatmul.mubr.f32.gmra.mrb[0].mxu0 %v3440
        %v3442 = vpop.f32.mrb[0].mxu0
        %v3443 = vadd.f32 %v2978, %v3442
        %v3444 = vpop.f32.mrb[0].mxu0
        %3445 = vmatprep.mubr.f32.mxu0 0.0
        %v3446 = vand.u32 %v228, 4294901760
        %3447 = vmatmul.mubr.f32.gmra.mrb[0].mxu0 %v3446
        %v3448 = vpop.f32.mrb[0].mxu0
        %v3449 = vadd.f32 %v2984, %v3448
        %v3450 = vpop.f32.mrb[0].mxu0
        %3451 = vmatprep.mubr.f32.mxu0 0.0
        %v3452 = vand.u32 %v229, 4294901760
        %3453 = vmatmul.mubr.f32.gmra.mrb[0].mxu0 %v3452
        %v3454 = vpop.f32.mrb[0].mxu0
        %v3455 = vadd.f32 %v2990, %v3454
        %v3456 = vpop.f32.mrb[0].mxu0
        %3457 = vmatprep.mubr.f32.mxu0 0.0
        %v3458 = vand.u32 %v230, 4294901760
        %3459 = vmatmul.mubr.f32.gmra.mrb[0].mxu0 %v3458
        %v3460 = vpop.f32.mrb[0].mxu0
        %v3461 = vadd.f32 %v2996, %v3460
        %v3462 = vpop.f32.mrb[0].mxu0
        %3463 = vmatprep.mubr.f32.mxu0 0.0
        %v3464 = vand.u32 %v231, 4294901760
        %3465 = vmatmul.mubr.f32.gmra.mrb[0].mxu0 %v3464
        %v3466 = vpop.f32.mrb[0].mxu0
        %v3467 = vadd.f32 %v3002, %v3466
        %v3468 = vpop.f32.mrb[0].mxu0
        %3469 = vmatprep.mubr.f32.mxu0 0.0
        %v3470 = vand.u32 %v232, 4294901760
        %3471 = vmatmul.mubr.f32.gmra.mrb[0].mxu0 %v3470
        %v3472 = vpop.f32.mrb[0].mxu0
        %v3473 = vadd.f32 %v3008, %v3472
        %v3474 = vpop.f32.mrb[0].mxu0
        %3475 = vmatprep.mubr.f32.mxu0 0.0
        %v3476 = vand.u32 %v233, 4294901760
        %3477 = vmatmul.mubr.f32.gmra.mrb[0].mxu0 %v3476
        %v3478 = vpop.f32.mrb[0].mxu0
        %v3479 = vadd.f32 %v3014, %v3478
        %v3480 = vpop.f32.mrb[0].mxu0
        %3481 = vmatprep.mubr.f32.mxu0 0.0
        %v3482 = vand.u32 %v234, 4294901760
        %3483 = vmatmul.mubr.f32.gmra.mrb[0].mxu0 %v3482
        %v3484 = vpop.f32.mrb[0].mxu0
        %v3485 = vadd.f32 %v3020, %v3484
        %v3486 = vpop.f32.mrb[0].mxu0
        %3487 = vmatprep.mubr.f32.mxu0 0.0
        %v3488 = vand.u32 %v235, 4294901760
        %3489 = vmatmul.mubr.f32.gmra.mrb[0].mxu0 %v3488
        %v3490 = vpop.f32.mrb[0].mxu0
        %v3491 = vadd.f32 %v3026, %v3490
        %v3492 = vpop.f32.mrb[0].mxu0
        %3493 = vmatprep.mubr.f32.mxu0 0.0
        %v3494 = vand.u32 %v236, 4294901760
        %3495 = vmatmul.mubr.f32.gmra.mrb[0].mxu0 %v3494
        %v3496 = vpop.f32.mrb[0].mxu0
        %v3497 = vadd.f32 %v3032, %v3496
        %v3498 = vpop.f32.mrb[0].mxu0
        %3499 = vmatprep.mubr.f32.mxu0 0.0
        %v3500 = vand.u32 %v237, 4294901760
        %3501 = vmatmul.mubr.f32.gmra.mrb[0].mxu0 %v3500
        %v3502 = vpop.f32.mrb[0].mxu0
        %v3503 = vadd.f32 %v3038, %v3502
        %v3504 = vpop.f32.mrb[0].mxu0
        %3505 = vmatprep.mubr.f32.mxu0 0.0
        %v3506 = vand.u32 %v238, 4294901760
        %3507 = vmatmul.mubr.f32.gmra.mrb[0].mxu0 %v3506
        %v3508 = vpop.f32.mrb[0].mxu0
        %v3509 = vadd.f32 %v3044, %v3508
        %v3510 = vpop.f32.mrb[0].mxu0
        %3511 = vmatprep.mubr.f32.mxu0 0.0
        %v3512 = vand.u32 %v239, 4294901760
        %3513 = vmatmul.mubr.f32.gmra.mrb[0].mxu0 %v3512
        %v3514 = vpop.f32.mrb[0].mxu0
        %v3515 = vadd.f32 %v3050, %v3514
        %v3516 = vpop.f32.mrb[0].mxu0
        %3517 = vmatprep.mubr.f32.mxu0 0.0
        %v3518 = vand.u32 %v240, 4294901760
        %3519 = vmatmul.mubr.f32.gmra.mrb[0].mxu0 %v3518
        %v3520 = vpop.f32.mrb[0].mxu0
        %v3521 = vadd.f32 %v3056, %v3520
        %v3522 = vpop.f32.mrb[0].mxu0
        %3523 = vmatprep.mubr.f32.mxu0 0.0
        %v3524 = vand.u32 %v241, 4294901760
        %3525 = vmatmul.mubr.f32.gmra.mrb[0].mxu0 %v3524
        %v3526 = vpop.f32.mrb[0].mxu0
        %v3527 = vadd.f32 %v3062, %v3526
        %v3528 = vpop.f32.mrb[0].mxu0
        %3529 = vmatprep.mubr.f32.mxu0 0.0
        %v3530 = vand.u32 %v242, 4294901760
        %3531 = vmatmul.mubr.f32.gmra.mrb[0].mxu0 %v3530
        %v3532 = vpop.f32.mrb[0].mxu0
        %v3533 = vadd.f32 %v3068, %v3532
        %v3534 = vpop.f32.mrb[0].mxu0
        %3535 = vmatprep.mubr.f32.mxu0 0.0
        %v3536 = vand.u32 %v243, 4294901760
        %3537 = vmatmul.mubr.f32.gmra.mrb[0].mxu0 %v3536
        %v3538 = vpop.f32.mrb[0].mxu0
        %v3539 = vadd.f32 %v3074, %v3538
        %v3540 = vpop.f32.mrb[0].mxu0
        %3541 = vmatprep.mubr.f32.mxu0 0.0
        %v3542 = vand.u32 %v244, 4294901760
        %3543 = vmatmul.mubr.f32.gmra.mrb[0].mxu0 %v3542
        %v3544 = vpop.f32.mrb[0].mxu0
        %v3545 = vadd.f32 %v3080, %v3544
        %v3546 = vpop.f32.mrb[0].mxu0
        %3547 = vmatprep.mubr.f32.mxu0 0.0
        %v3548 = vand.u32 %v245, 4294901760
        %3549 = vmatmul.mubr.f32.gmra.mrb[0].mxu0 %v3548
        %v3550 = vpop.f32.mrb[0].mxu0
        %v3551 = vadd.f32 %v3086, %v3550
        %v3552 = vpop.f32.mrb[0].mxu0
        %3553 = vmatprep.mubr.f32.mxu0 0.0
        %v3554 = vand.u32 %v246, 4294901760
        %3555 = vmatmul.mubr.f32.gmra.mrb[0].mxu0 %v3554
        %v3556 = vpop.f32.mrb[0].mxu0
        %v3557 = vadd.f32 %v3092, %v3556
        %v3558 = vpop.f32.mrb[0].mxu0
        %3559 = vmatprep.mubr.f32.mxu0 0.0
        %v3560 = vand.u32 %v247, 4294901760
        %3561 = vmatmul.mubr.f32.gmra.mrb[0].mxu0 %v3560
        %v3562 = vpop.f32.mrb[0].mxu0
        %v3563 = vadd.f32 %v3098, %v3562
        %v3564 = vpop.f32.mrb[0].mxu0
        %3565 = vmatprep.mubr.f32.mxu0 0.0
        %v3566 = vand.u32 %v248, 4294901760
        %3567 = vmatmul.mubr.f32.gmra.mrb[0].mxu0 %v3566
        %v3568 = vpop.f32.mrb[0].mxu0
        %v3569 = vadd.f32 %v3104, %v3568
        %v3570 = vpop.f32.mrb[0].mxu0
        %3571 = vmatprep.mubr.f32.mxu0 0.0
        %v3572 = vand.u32 %v249, 4294901760
        %3573 = vmatmul.mubr.f32.gmra.mrb[0].mxu0 %v3572
        %v3574 = vpop.f32.mrb[0].mxu0
        %v3575 = vadd.f32 %v3110, %v3574
        %v3576 = vpop.f32.mrb[0].mxu0
        %3577 = vmatprep.mubr.f32.mxu0 0.0
        %v3578 = vand.u32 %v250, 4294901760
        %3579 = vmatmul.mubr.f32.gmra.mrb[0].mxu0 %v3578
        %v3580 = vpop.f32.mrb[0].mxu0
        %v3581 = vadd.f32 %v3116, %v3580
        %v3582 = vpop.f32.mrb[0].mxu0
        %3583 = vmatprep.mubr.f32.mxu0 0.0
        %v3584 = vand.u32 %v251, 4294901760
        %3585 = vmatmul.mubr.f32.gmra.mrb[0].mxu0 %v3584
        %v3586 = vpop.f32.mrb[0].mxu0
        %v3587 = vadd.f32 %v3122, %v3586
        %v3588 = vpop.f32.mrb[0].mxu0
        %3589 = vmatprep.mubr.f32.mxu0 0.0
        %v3590 = vand.u32 %v252, 4294901760
        %3591 = vmatmul.mubr.f32.gmra.mrb[0].mxu0 %v3590
        %v3592 = vpop.f32.mrb[0].mxu0
        %v3593 = vadd.f32 %v3128, %v3592
        %v3594 = vpop.f32.mrb[0].mxu0
        %3595 = vmatprep.mubr.f32.mxu0 0.0
        %v3596 = vand.u32 %v253, 4294901760
        %3597 = vmatmul.mubr.f32.gmra.mrb[0].mxu0 %v3596
        %v3598 = vpop.f32.mrb[0].mxu0
        %v3599 = vadd.f32 %v3134, %v3598
        %v3600 = vpop.f32.mrb[0].mxu0
        %3601 = vmatprep.mubr.f32.mxu0 0.0
        %v3602 = vand.u32 %v254, 4294901760
        %3603 = vmatmul.mubr.f32.gmra.mrb[0].mxu0 %v3602
        %v3604 = vpop.f32.mrb[0].mxu0
        %v3605 = vadd.f32 %v3140, %v3604
        %v3606 = vpop.f32.mrb[0].mxu0
        %3607 = vmatprep.mubr.f32.mxu0 0.0
        %v3608 = vand.u32 %v255, 4294901760
        %3609 = vmatmul.mubr.f32.gmra.mrb[0].mxu0 %v3608
        %v3610 = vpop.f32.mrb[0].mxu0
        %v3611 = vadd.f32 %v3146, %v3610
        %v3612 = vpop.f32.mrb[0].mxu0
        %3613 = vmatprep.mubr.f32.mxu0 0.0
        %v3614 = vand.u32 %v256, 4294901760
        %3615 = vmatmul.mubr.f32.gmra.mrb[0].mxu0 %v3614
        %v3616 = vpop.f32.mrb[0].mxu0
        %v3617 = vadd.f32 %v3152, %v3616
        %v3618 = vpop.f32.mrb[0].mxu0
        %3619 = vmatprep.mubr.f32.mxu0 0.0
        %v3620 = vand.u32 %v257, 4294901760
        %3621 = vmatmul.mubr.f32.gmra.mrb[0].mxu0 %v3620
        %v3622 = vpop.f32.mrb[0].mxu0
        %v3623 = vadd.f32 %v3158, %v3622
        %v3624 = vpop.f32.mrb[0].mxu0
        %3625 = vdwg.mxu0
        %vm3626 = vcmask 31744
        %3627 = vst.msk [vmem:[%s192] sm:$0xff] %vm3626, %v3245
        %3628 = vst.msk [vmem:[%s192 + $0x8] sm:$0xff] %vm3626, %v3251
        %3629 = vst.msk [vmem:[%s192 + $0x10] sm:$0xff] %vm3626, %v3257
        %3630 = vst.msk [vmem:[%s192 + $0x18] sm:$0xff] %vm3626, %v3263
        %3631 = vst.msk [vmem:[%s192 + $0x20] sm:$0xff] %vm3626, %v3269
        %3632 = vst.msk [vmem:[%s192 + $0x28] sm:$0xff] %vm3626, %v3275
        %3633 = vst.msk [vmem:[%s192 + $0x30] sm:$0xff] %vm3626, %v3281
        %3634 = vst.msk [vmem:[%s192 + $0x38] sm:$0xff] %vm3626, %v3287
        %3635 = vst.msk [vmem:[%s192 + $0x40] sm:$0xff] %vm3626, %v3293
        %3636 = vst.msk [vmem:[%s192 + $0x48] sm:$0xff] %vm3626, %v3299
        %3637 = vst.msk [vmem:[%s192 + $0x50] sm:$0xff] %vm3626, %v3305
        %3638 = vst.msk [vmem:[%s192 + $0x58] sm:$0xff] %vm3626, %v3311
        %3639 = vst.msk [vmem:[%s192 + $0x60] sm:$0xff] %vm3626, %v3317
        %3640 = vst.msk [vmem:[%s192 + $0x68] sm:$0xff] %vm3626, %v3323
        %3641 = vst.msk [vmem:[%s192 + $0x70] sm:$0xff] %vm3626, %v3329
        %3642 = vst.msk [vmem:[%s192 + $0x78] sm:$0xff] %vm3626, %v3335
        %3643 = vst.msk [vmem:[%s192 + $0x80] sm:$0xff] %vm3626, %v3341
        %3644 = vst.msk [vmem:[%s192 + $0x88] sm:$0xff] %vm3626, %v3347
        %3645 = vst.msk [vmem:[%s192 + $0x90] sm:$0xff] %vm3626, %v3353
        %3646 = vst.msk [vmem:[%s192 + $0x98] sm:$0xff] %vm3626, %v3359
        %3647 = vst.msk [vmem:[%s192 + $0xa0] sm:$0xff] %vm3626, %v3365
        %3648 = vst.msk [vmem:[%s192 + $0xa8] sm:$0xff] %vm3626, %v3371
        %3649 = vst.msk [vmem:[%s192 + $0xb0] sm:$0xff] %vm3626, %v3377
        %3650 = vst.msk [vmem:[%s192 + $0xb8] sm:$0xff] %vm3626, %v3383
        %3651 = vst.msk [vmem:[%s192 + $0xc0] sm:$0xff] %vm3626, %v3389
        %3652 = vst.msk [vmem:[%s192 + $0xc8] sm:$0xff] %vm3626, %v3395
        %3653 = vst.msk [vmem:[%s192 + $0xd0] sm:$0xff] %vm3626, %v3401
        %3654 = vst.msk [vmem:[%s192 + $0xd8] sm:$0xff] %vm3626, %v3407
        %3655 = vst.msk [vmem:[%s192 + $0xe0] sm:$0xff] %vm3626, %v3413
        %3656 = vst.msk [vmem:[%s192 + $0xe8] sm:$0xff] %vm3626, %v3419
        %3657 = vst.msk [vmem:[%s192 + $0xf0] sm:$0xff] %vm3626, %v3425
        %3658 = vst.msk [vmem:[%s192 + $0xf8] sm:$0xff] %vm3626, %v3431
        %3659 = vst.msk [vmem:[%s192 + $0x100] sm:$0xff] %vm3626, %v3437
        %3660 = vst.msk [vmem:[%s192 + $0x108] sm:$0xff] %vm3626, %v3443
        %3661 = vst.msk [vmem:[%s192 + $0x110] sm:$0xff] %vm3626, %v3449
        %3662 = vst.msk [vmem:[%s192 + $0x118] sm:$0xff] %vm3626, %v3455
        %3663 = vst.msk [vmem:[%s192 + $0x120] sm:$0xff] %vm3626, %v3461
        %3664 = vst.msk [vmem:[%s192 + $0x128] sm:$0xff] %vm3626, %v3467
        %3665 = vst.msk [vmem:[%s192 + $0x130] sm:$0xff] %vm3626, %v3473
        %3666 = vst.msk [vmem:[%s192 + $0x138] sm:$0xff] %vm3626, %v3479
        %3667 = vst.msk [vmem:[%s192 + $0x140] sm:$0xff] %vm3626, %v3485
        %3668 = vst.msk [vmem:[%s192 + $0x148] sm:$0xff] %vm3626, %v3491
        %3669 = vst.msk [vmem:[%s192 + $0x150] sm:$0xff] %vm3626, %v3497
        %3670 = vst.msk [vmem:[%s192 + $0x158] sm:$0xff] %vm3626, %v3503
        %3671 = vst.msk [vmem:[%s192 + $0x160] sm:$0xff] %vm3626, %v3509
        %3672 = vst.msk [vmem:[%s192 + $0x168] sm:$0xff] %vm3626, %v3515
        %3673 = vst.msk [vmem:[%s192 + $0x170] sm:$0xff] %vm3626, %v3521
        %3674 = vst.msk [vmem:[%s192 + $0x178] sm:$0xff] %vm3626, %v3527
        %3675 = vst.msk [vmem:[%s192 + $0x180] sm:$0xff] %vm3626, %v3533
        %3676 = vst.msk [vmem:[%s192 + $0x188] sm:$0xff] %vm3626, %v3539
        %3677 = vst.msk [vmem:[%s192 + $0x190] sm:$0xff] %vm3626, %v3545
        %3678 = vst.msk [vmem:[%s192 + $0x198] sm:$0xff] %vm3626, %v3551
        %3679 = vst.msk [vmem:[%s192 + $0x1a0] sm:$0xff] %vm3626, %v3557
        %3680 = vst.msk [vmem:[%s192 + $0x1a8] sm:$0xff] %vm3626, %v3563
        %3681 = vst.msk [vmem:[%s192 + $0x1b0] sm:$0xff] %vm3626, %v3569
        %3682 = vst.msk [vmem:[%s192 + $0x1b8] sm:$0xff] %vm3626, %v3575
        %3683 = vst.msk [vmem:[%s192 + $0x1c0] sm:$0xff] %vm3626, %v3581
        %3684 = vst.msk [vmem:[%s192 + $0x1c8] sm:$0xff] %vm3626, %v3587
        %3685 = vst.msk [vmem:[%s192 + $0x1d0] sm:$0xff] %vm3626, %v3593
        %3686 = vst.msk [vmem:[%s192 + $0x1d8] sm:$0xff] %vm3626, %v3599
        %3687 = vst.msk [vmem:[%s192 + $0x1e0] sm:$0xff] %vm3626, %v3605
        %3688 = vst.msk [vmem:[%s192 + $0x1e8] sm:$0xff] %vm3626, %v3611
        %3689 = vst.msk [vmem:[%s192 + $0x1f0] sm:$0xff] %vm3626, %v3617
        %3690 = vst.msk [vmem:[%s192 + $0x1f8] sm:$0xff] %vm3626, %v3623
        %s3691 = smul.u32 64, %s18
        %p3692 = scmp.lt.s32.totalorder %s3691, 127
        %s3693 = scalar_select %p3692, %s3691, 127
        %s3694 = smul.addr %s3693, 8
        %s3695 = scalar_lea.vmem %s3, %s3694
        // Predicated region
        $region37: #{tpu_custom_call.1} parent=31 // pred_check
          %p3696 = pneg %p104
        $region38: #{tpu_custom_call.1} parent=31 // pred_check_branch
          %3698 = sbr.rel (%p3696) target = $region40
        $region39: #{tpu_custom_call.1} parent=31 // pred_region
          %s3699 = smul.u32 64, %s18
        $region40: #{tpu_custom_call.1} parent=31 // pred_fallthru
          _
      $region32: #{tpu_custom_call.1} parent=5 // pred_fallthru
        _
      %p3700 = scmp.le.s32.totalorder 2, %s13
      // Predicated region
      $region41: #{tpu_custom_call.1} parent=5 // pred_check
        %p3701 = pneg %p3700
      $region42: #{tpu_custom_call.1} parent=5 // pred_check_branch
        %3703 = sbr.rel (%p3701) target = $region44
      $region43: #{tpu_custom_call.1} parent=5 // pred_region
        %s3704 = ssub.s32 %s13, 2
        // Predicated region
        $region45: #{tpu_custom_call.1} parent=43 // pred_check
          %p3705 = pneg %p110
        $region46: #{tpu_custom_call.1} parent=43 // pred_check_branch
          %3707 = sbr.rel (%p3705) target = $region48
        $region47: #{tpu_custom_call.1} parent=43 // pred_region
          %s3708 = smul.u32 64, %s19
          %p3709 = scmp.lt.s32.totalorder %s3708, 127
          %s3710 = scalar_select %p3709, %s3708, 127
          %s3711 = smul.addr %s3710, 8
          %s3712 = scalar_lea.vmem %s3, %s3711
        $region48: #{tpu_custom_call.1} parent=43 // pred_fallthru
          _
      $region44: #{tpu_custom_call.1} parent=5 // pred_fallthru
        _
    $region6: #{tpu_custom_call.1} parent=1 // loop_footer
      %s17 = sadd.s32 1, %s13
    $region7: #{tpu_custom_call.1} parent=1 // loop_footer_branch
      %12 = sbr.rel target = $region3
    $region8: #{tpu_custom_call.1} parent=1 // loop_exit
      _
    %3713 = vsyncpa [#allocation4], 1
    %s3714 = scalar_lea.sflag [#allocation4], 1
    %3715 = vsyncpa %s3714, 1

</llo_original>
